<compile_context>
chip_gen: v5e
topology: v5e:2x2
jax: 0.10.0
libtpu: 0.0.40
codegen_flags: <defaults>
</compile_context>

<pallas_src>
import functools
import math

import jax
import jax.numpy as jnp
from jax.experimental import pallas as pl
from jax.experimental.pallas import tpu as pltpu

# Full f32 matmul precision everywhere (folding, in-kernel dots, reference check).
jax.config.update("jax_default_matmul_precision", "highest")


# ---------------------------------------------------------------------------
# Pallas kernel: whole decoder as a chain of matmul + bias + ReLU, then sigmoid.
# refs = (x, w0, b0, w1, b1, ..., w_{L-1}, b_{L-1}, out)
# ---------------------------------------------------------------------------
def _decoder_kernel(*refs):
    x_ref, o_ref = refs[0], refs[-1]
    wb = refs[1:-1]
    h = x_ref[...]                                        # (block_b, z_dim) f32
    for i in range(len(wb) // 2):
        w = wb[2 * i][...]                                # VMEM-resident weight
        b = wb[2 * i + 1][...]                            # (1, N)
        h = jnp.dot(h, w, preferred_element_type=jnp.float32) + b
        h = jnp.maximum(h, 0.0)                           # ReLU after every deconv layer
    o_ref[...] = jax.nn.sigmoid(h).astype(o_ref.dtype)    # final torch.sigmoid


def decoder_pallas_call(x, ws, bs):
    """Single pallas_call for the whole decoder.  Grid tiles the batch only."""
    B, z_dim = x.shape
    n_out = ws[-1].shape[1]

    block_b = B if B <= 128 else 128                      # full dim or multiple of 8
    grid = (pl.cdiv(B, block_b),)

    in_specs = [pl.BlockSpec((block_b, z_dim), lambda i: (i, 0))]
    operands = [x]
    for w, b in zip(ws, bs):
        in_specs.append(pl.BlockSpec(w.shape, lambda i: (0, 0)))       # same block every step
        in_specs.append(pl.BlockSpec((1, b.shape[-1]), lambda i: (0, 0)))
        operands.append(w)
        operands.append(b.reshape(1, -1))

    return pl.pallas_call(
        _decoder_kernel,
        out_shape=jax.ShapeDtypeStruct((B, n_out), jnp.float32),
        grid=grid,
        in_specs=in_specs,
        out_specs=pl.BlockSpec((block_b, n_out), lambda i: (i, 0)),
        compiler_params=pltpu.CompilerParams(dimension_semantics=("parallel",)),
    )(*operands)


# ---------------------------------------------------------------------------
# One-time parameter folding / layout preparation (plain JAX, done at init).
# ---------------------------------------------------------------------------
def fold_params(params):
    """Fold Linear into deconv-0; expand deconv-1.. into block-diagonal matmuls.

    ws[0]: (z_dim, 4*C0) folded weight, columns ordered (kh, kw, cout).
    ws[i>=1]: block-diagonal (P*Cin, P*4*Cout) acting on the flattened
              (kh1,kw1,...,khi,kwi, c) row layout (P = number of pixel blocks).
    """
    linear_w = params["linear_w"]          # (4096, z_dim)  -- PyTorch layout
    linear_b = params["linear_b"]          # (4096,)
    deconv = params["deconv"]              # [(w (Cin,Cout,K,K), b (Cout,)), ...]
    hp = jax.lax.Precision.HIGHEST

    ws, bs = [], []

    # layer 0: Linear folded into deconv-0 (no activation between them in the module)
    w0, b0 = deconv[0]
    cin0, cout0, k, _ = w0.shape
    assert k == 2, "fused path requires kernel_size == stride == 2"
    # TODO(synk): kernel_size != stride (overlapping ConvTranspose2d) would need an overlap-add kernel.
    w0p = jnp.transpose(w0, (0, 2, 3, 1)).reshape(cin0, k * k * cout0)   # cols = (kh, kw, cout)
    ws.append(jnp.dot(linear_w.T, w0p, precision=hp))                    # (z_dim, k*k*cout0)
    bs.append(jnp.dot(linear_b, w0p, precision=hp) + jnp.tile(b0, k * k))

    # layers 1..: block-diagonal expansion over the pixel blocks carried in the row
    n_pix = k * k
    for w, b in deconv[1:]:
        cin, cout, k, _ = w.shape
        assert k == 2, "fused path requires kernel_size == stride == 2"
        wp = jnp.transpose(w, (0, 2, 3, 1)).reshape(cin, k * k * cout)
        ws.append(jnp.kron(jnp.eye(n_pix, dtype=wp.dtype), wp))          # (n_pix*cin, n_pix*4*cout)
        bs.append(jnp.tile(b, n_pix * k * k))
        n_pix *= k * k

    c_out = deconv[-1][1].shape[0]
    return tuple(ws), tuple(bs), len(deconv), c_out


def _decoder_forward_impl(x, ws, bs, *, n_deconv, c_out):
    y = decoder_pallas_call(x, ws, bs)                   # (B, 4**L * c_out), lane-dense
    B = x.shape[0]
    L = n_deconv
    # columns are ordered (kh1, kw1, kh2, kw2, ..., khL, kwL, c)
    y = y.reshape((B,) + (2, 2) * L + (c_out,))
    perm = (0, 2 * L + 1) + tuple(range(1, 2 * L + 1, 2)) + tuple(range(2, 2 * L + 2, 2))
    return jnp.transpose(y, perm).reshape(B, c_out, 2 ** L, 2 ** L)      # NCHW


def make_decoder(params):
    ws, bs, n_deconv, c_out = fold_params(params)
    fwd = jax.jit(functools.partial(_decoder_forward_impl, n_deconv=n_deconv, c_out=c_out))
    return lambda x: fwd(x, ws, bs)


# ---------------------------------------------------------------------------
# Synthetic parameters (PyTorch layouts; xavier-uniform weights like the module).
# ---------------------------------------------------------------------------
def init_params(key, z_dim, layers):
    ks = jax.random.split(key, 2 + 2 * len(layers))
    wb = math.sqrt(6.0 / (z_dim + 4096))
    linear_w = jax.random.uniform(ks[0], (4096, z_dim), jnp.float32, -wb, wb)
    lb = 1.0 / math.sqrt(z_dim)
    linear_b = jax.random.uniform(ks[1], (4096,), jnp.float32, -lb, lb)

    deconv = []
    prev = 4096
    for i, (cout, k) in enumerate(layers):
        # ConvTranspose2d weight (in_channels, out_channels, kH, kW); torch fan_in = cout*k*k.
        fan_in, fan_out = cout * k * k, prev * k * k
        bound = math.sqrt(6.0 / (fan_in + fan_out))
        w = jax.random.uniform(ks[2 + 2 * i], (prev, cout, k, k), jnp.float32, -bound, bound)
        bbound = 1.0 / math.sqrt(fan_in)
        b = jax.random.uniform(ks[3 + 2 * i], (cout,), jnp.float32, -bbound, bbound)
        deconv.append((w, b))
        prev = cout
    return {"linear_w": linear_w, "linear_b": linear_b, "deconv": deconv}


def decoder_reference(x, params):
    """Pure-JAX (no Pallas) mirror of the PyTorch Decoder.forward, for verification."""
    hp = jax.lax.Precision.HIGHEST
    h = jnp.dot(x, params["linear_w"].T, precision=hp) + params["linear_b"]
    B = x.shape[0]
    h = h.reshape(B, 4096, 1, 1)
    for w, b in params["deconv"]:
        # ConvTranspose2d with kernel_size == stride == 2, padding 0 (non-overlapping blocks)
        y = jnp.einsum("bchw,cokl->bohkwl", h, w, precision=hp)
        Bx, cout, H, K, W, _ = y.shape
        y = y.reshape(Bx, cout, H * K, W * K) + b[None, :, None, None]
        h = jax.nn.relu(y)
    return jax.nn.sigmoid(h)


if __name__ == "__main__":
    key = jax.random.PRNGKey(0)
    z_dim = 32
    # layers = [[out_channels, kernel_size], ...] with stride fixed at 2 (as in the module)
    layers = [[64, 2], [16, 2], [4, 2]]

    pkey, xkey = jax.random.split(key)
    params = init_params(pkey, z_dim, layers)
    x = jax.random.normal(xkey, (2, z_dim), jnp.float32)

    decoder = make_decoder(params)
    out = jax.block_until_ready(decoder(x))

    # 1x1 -> 2x2 -> 4x4 -> 8x8 spatial, final channels = 4
    assert out.shape == (2, 4, 8, 8), out.shape
    assert bool(jnp.all(jnp.isfinite(out)))
    assert bool(jnp.all((out >= 0.0) & (out <= 1.0)))    # sigmoid output range

    ref = jax.block_until_ready(decoder_reference(x, params))
    max_err = float(jnp.max(jnp.abs(out - ref)))
    assert jnp.allclose(out, ref, atol=2e-3, rtol=2e-3), max_err

    print("KERNEL_OK")
</pallas_src>

<mosaic_0001>
module attributes {stable_mosaic.version = 11 : i64} {
  func.func @_decoder_kernel(%arg0: i32, %arg1: memref<2x32xf32, #tpu.memory_space<vmem>>, %arg2: memref<32x256xf32, #tpu.memory_space<vmem>>, %arg3: memref<1x256xf32, #tpu.memory_space<vmem>>, %arg4: memref<256x256xf32, #tpu.memory_space<vmem>>, %arg5: memref<1x256xf32, #tpu.memory_space<vmem>>, %arg6: memref<256x256xf32, #tpu.memory_space<vmem>>, %arg7: memref<1x256xf32, #tpu.memory_space<vmem>>, %arg8: memref<2x256xf32, #tpu.memory_space<vmem>>) attributes {dimension_semantics = [#tpu.dimension_semantics<parallel>], iteration_bounds = array<i64: 1>, scalar_prefetch = 0 : i64, scratch_operands = 0 : i64, tpu.core_type = #tpu.core_type<tc>, window_params = [{transform_indices = @transform_0, window_bounds = array<i64: 2, 32>}, {pipeline_mode = #tpu.pipeline_mode<synchronous>, transform_indices = @transform_1, window_bounds = array<i64: 32, 256>}, {pipeline_mode = #tpu.pipeline_mode<synchronous>, transform_indices = @transform_2, window_bounds = array<i64: 1, 256>}, {pipeline_mode = #tpu.pipeline_mode<synchronous>, transform_indices = @transform_3, window_bounds = array<i64: 256, 256>}, {pipeline_mode = #tpu.pipeline_mode<synchronous>, transform_indices = @transform_4, window_bounds = array<i64: 1, 256>}, {pipeline_mode = #tpu.pipeline_mode<synchronous>, transform_indices = @transform_5, window_bounds = array<i64: 256, 256>}, {pipeline_mode = #tpu.pipeline_mode<synchronous>, transform_indices = @transform_6, window_bounds = array<i64: 1, 256>}, {transform_indices = @transform_7, window_bounds = array<i64: 2, 256>}]} {
    %c0 = arith.constant 0 : index
    %c0_0 = arith.constant 0 : index
    %0 = vector.load %arg1[%c0, %c0_0] : memref<2x32xf32, #tpu.memory_space<vmem>>, vector<2x32xf32>
    %c0_1 = arith.constant 0 : index
    %c0_2 = arith.constant 0 : index
    %1 = vector.load %arg2[%c0_1, %c0_2] : memref<32x256xf32, #tpu.memory_space<vmem>>, vector<32x256xf32>
    %c0_3 = arith.constant 0 : index
    %c0_4 = arith.constant 0 : index
    %2 = vector.load %arg3[%c0_3, %c0_4] : memref<1x256xf32, #tpu.memory_space<vmem>>, vector<1x256xf32>
    %cst = arith.constant dense<0.000000e+00> : vector<2x256xf32>
    %3 = tpu.matmul %0, %1, %cst {dimension_numbers = #tpu.dot_dimension_numbers<[1], [0], [0], [1], [0, 0, 1, 1], [], []>, precision = #tpu.contract_precision<fp32>} : vector<2x32xf32>, vector<32x256xf32>, vector<2x256xf32> -> vector<2x256xf32>
    %4 = vector.broadcast %2 : vector<1x256xf32> to vector<2x256xf32>
    %5 = arith.addf %3, %4 : vector<2x256xf32>
    %cst_5 = arith.constant 0.000000e+00 : f32
    %6 = vector.broadcast %cst_5 : f32 to vector<2x256xf32>
    %7 = arith.maximumf %5, %6 : vector<2x256xf32>
    %c0_6 = arith.constant 0 : index
    %c0_7 = arith.constant 0 : index
    %8 = vector.load %arg4[%c0_6, %c0_7] : memref<256x256xf32, #tpu.memory_space<vmem>>, vector<256x256xf32>
    %c0_8 = arith.constant 0 : index
    %c0_9 = arith.constant 0 : index
    %9 = vector.load %arg5[%c0_8, %c0_9] : memref<1x256xf32, #tpu.memory_space<vmem>>, vector<1x256xf32>
    %cst_10 = arith.constant dense<0.000000e+00> : vector<2x256xf32>
    %10 = tpu.matmul %7, %8, %cst_10 {dimension_numbers = #tpu.dot_dimension_numbers<[1], [0], [0], [1], [0, 0, 1, 1], [], []>, precision = #tpu.contract_precision<fp32>} : vector<2x256xf32>, vector<256x256xf32>, vector<2x256xf32> -> vector<2x256xf32>
    %11 = vector.broadcast %9 : vector<1x256xf32> to vector<2x256xf32>
    %12 = arith.addf %10, %11 : vector<2x256xf32>
    %cst_11 = arith.constant 0.000000e+00 : f32
    %13 = vector.broadcast %cst_11 : f32 to vector<2x256xf32>
    %14 = arith.maximumf %12, %13 : vector<2x256xf32>
    %c0_12 = arith.constant 0 : index
    %c0_13 = arith.constant 0 : index
    %15 = vector.load %arg6[%c0_12, %c0_13] : memref<256x256xf32, #tpu.memory_space<vmem>>, vector<256x256xf32>
    %c0_14 = arith.constant 0 : index
    %c0_15 = arith.constant 0 : index
    %16 = vector.load %arg7[%c0_14, %c0_15] : memref<1x256xf32, #tpu.memory_space<vmem>>, vector<1x256xf32>
    %cst_16 = arith.constant dense<0.000000e+00> : vector<2x256xf32>
    %17 = tpu.matmul %14, %15, %cst_16 {dimension_numbers = #tpu.dot_dimension_numbers<[1], [0], [0], [1], [0, 0, 1, 1], [], []>, precision = #tpu.contract_precision<fp32>} : vector<2x256xf32>, vector<256x256xf32>, vector<2x256xf32> -> vector<2x256xf32>
    %18 = vector.broadcast %16 : vector<1x256xf32> to vector<2x256xf32>
    %19 = arith.addf %17, %18 : vector<2x256xf32>
    %cst_17 = arith.constant 0.000000e+00 : f32
    %20 = vector.broadcast %cst_17 : f32 to vector<2x256xf32>
    %21 = arith.maximumf %19, %20 : vector<2x256xf32>
    %22 = arith.negf %21 : vector<2x256xf32>
    %23 = math.exp %22 : vector<2x256xf32>
    %cst_18 = arith.constant 1.000000e+00 : f32
    %24 = vector.broadcast %cst_18 : f32 to vector<2x256xf32>
    %25 = arith.addf %24, %23 : vector<2x256xf32>
    %26 = arith.divf %24, %25 : vector<2x256xf32>
    %c0_19 = arith.constant 0 : index
    %c0_20 = arith.constant 0 : index
    %27 = vector.load %arg8[%c0_19, %c0_20] : memref<2x256xf32, #tpu.memory_space<vmem>>, vector<2x256xf32>
    tpu.vector_store %arg8[%c0_19, %c0_20], %26 {strides = array<i32>} : memref<2x256xf32, #tpu.memory_space<vmem>>, vector<2x256xf32>,
    return
  }
  func.func @transform_0(%arg0: i32) -> (i32, i32) {
    %c0_i32 = arith.constant 0 : i32
    %c0_i32_0 = arith.constant 0 : i32
    return %arg0, %c0_i32 : i32, i32
  }
  func.func @transform_1(%arg0: i32) -> (i32, i32) {
    %c0_i32 = arith.constant 0 : i32
    %c0_i32_0 = arith.constant 0 : i32
    %c0_i32_1 = arith.constant 0 : i32
    return %c0_i32, %c0_i32_0 : i32, i32
  }
  func.func @transform_2(%arg0: i32) -> (i32, i32) {
    %c0_i32 = arith.constant 0 : i32
    %c0_i32_0 = arith.constant 0 : i32
    %c0_i32_1 = arith.constant 0 : i32
    return %c0_i32, %c0_i32_0 : i32, i32
  }
  func.func @transform_3(%arg0: i32) -> (i32, i32) {
    %c0_i32 = arith.constant 0 : i32
    %c0_i32_0 = arith.constant 0 : i32
    %c0_i32_1 = arith.constant 0 : i32
    return %c0_i32, %c0_i32_0 : i32, i32
  }
  func.func @transform_4(%arg0: i32) -> (i32, i32) {
    %c0_i32 = arith.constant 0 : i32
    %c0_i32_0 = arith.constant 0 : i32
    %c0_i32_1 = arith.constant 0 : i32
    return %c0_i32, %c0_i32_0 : i32, i32
  }
  func.func @transform_5(%arg0: i32) -> (i32, i32) {
    %c0_i32 = arith.constant 0 : i32
    %c0_i32_0 = arith.constant 0 : i32
    %c0_i32_1 = arith.constant 0 : i32
    return %c0_i32, %c0_i32_0 : i32, i32
  }
  func.func @transform_6(%arg0: i32) -> (i32, i32) {
    %c0_i32 = arith.constant 0 : i32
    %c0_i32_0 = arith.constant 0 : i32
    %c0_i32_1 = arith.constant 0 : i32
    return %c0_i32, %c0_i32_0 : i32, i32
  }
  func.func @transform_7(%arg0: i32) -> (i32, i32) {
    %c0_i32 = arith.constant 0 : i32
    %c0_i32_0 = arith.constant 0 : i32
    return %arg0, %c0_i32 : i32, i32
  }
}

</mosaic_0001>

<llo_original>
// kernel: _decoder_forward_impl.1
$region0: #{_decoder_forward_impl.1}
  #allocation0 [shape = 'u32[]', space=smem, size = 0x4, offset = 0x4, fixed_abs, tag = 'smem constant byte address 0x4 - core index']
  #allocation1 [shape = 'u32[72,128]{1,0:T(1,128)}', space=vmem, size = 0x9000, scoped, tag = 'internal scratch']
  %s0 = inlined_call_operand.vmem [shape: f32[2,32], index: 0, kind: input, shape index: {}]
  %s1 = inlined_call_operand.hbm [shape: f32[32,256], index: 1, kind: input, shape index: {}]
  %s2 = inlined_call_operand.vmem [shape: f32[1,256], index: 2, kind: input, shape index: {}]
  %s3 = inlined_call_operand.hbm [shape: f32[256,256], index: 3, kind: input, shape index: {}]
  %s4 = inlined_call_operand.vmem [shape: f32[1,256], index: 4, kind: input, shape index: {}]
  %s5 = inlined_call_operand.hbm [shape: f32[256,256], index: 5, kind: input, shape index: {}]
  %s6 = inlined_call_operand.vmem [shape: f32[1,256], index: 6, kind: input, shape index: {}]
  %s7 = inlined_call_operand.vmem [shape: f32[2,256], index: 7, kind: output, shape index: {}]
  %s8 = sld [smem:[#allocation0]]
  $region50: #{_decoder_forward_impl.1} parent=0
    _
  %s10 = ssub.s32 1, %s8
  %s11 = scalar_select 0, %s10, %s8
  $region1: #{_decoder_forward_impl.1} parent=0
    #allocation2 [shape = 'u8[32768]{0}', space=vmem, size = 0x8000, scoped, tag = 'input window, operand 1, single buffered']
    #allocation3 [shape = 's32[1]{0}', space=sflag, size = 0x4, scoped, tag = 'scoped memory for _decoder_forward_impl.1']
    #allocation4 [shape = 'u8[262144]{0}', space=vmem, size = 0x40000, scoped, tag = 'input window, operand 3, single buffered']
    #allocation5 [shape = 's32[1]{0}', space=sflag, size = 0x4, scoped, tag = 'scoped memory for _decoder_forward_impl.1']
    #allocation6 [shape = 'u8[262144]{0}', space=vmem, size = 0x40000, scoped, tag = 'input window, operand 5, single buffered']
    %12 = vsyncpa [#allocation3], 0
    %13 = vsyncpa [#allocation5], 0
    // Predicated region
    $region2: #{_decoder_forward_impl.1} parent=1 // pred_check
      _
    $region3: #{_decoder_forward_impl.1} parent=1 // pred_check_branch
      %15 = sbr.rel (0) target = $region5
    $region4: #{_decoder_forward_impl.1} parent=1 // pred_region
      _
    $region5: #{_decoder_forward_impl.1} parent=1 // pred_fallthru
      _
    // Predicated region
    $region6: #{_decoder_forward_impl.1} parent=1 // pred_check
      _
    $region7: #{_decoder_forward_impl.1} parent=1 // pred_check_branch
      %17 = sbr.rel (0) target = $region9
    $region8: #{_decoder_forward_impl.1} parent=1 // pred_region
      %19 = vsyncadd [#allocation3], 0
      %s20 = sshll.u32 %s1, 4
      %s21 = int_to_ptr.hbm [resolvable:$true] %s20
      %s22 = sshll.u32 [#allocation2], 4
      %s23 = int_to_ptr.vmem [resolvable:$true] %s22
      %28 = dma.hbm_to_vmem [thread:$0]  %s21, 1024, %s23, [#allocation3], 256, 256, 16
    $region9: #{_decoder_forward_impl.1} parent=1 // pred_fallthru
      _
    // Predicated region
    $region10: #{_decoder_forward_impl.1} parent=1 // pred_check
      _
    $region11: #{_decoder_forward_impl.1} parent=1 // pred_check_branch
      %30 = sbr.rel (0) target = $region13
    $region12: #{_decoder_forward_impl.1} parent=1 // pred_region
      _
    $region13: #{_decoder_forward_impl.1} parent=1 // pred_fallthru
      _
    // Predicated region
    $region14: #{_decoder_forward_impl.1} parent=1 // pred_check
      _
    $region15: #{_decoder_forward_impl.1} parent=1 // pred_check_branch
      %32 = sbr.rel (0) target = $region17
    $region16: #{_decoder_forward_impl.1} parent=1 // pred_region
      %34 = vsyncadd [#allocation5], 0
      %s35 = sshll.u32 %s3, 4
      %s36 = int_to_ptr.hbm [resolvable:$true] %s35
      %s37 = sshll.u32 [#allocation4], 4
      %s38 = int_to_ptr.vmem [resolvable:$true] %s37
      %43 = dma.hbm_to_vmem [thread:$0]  %s36, 8192, %s38, [#allocation5], 256, 256, 16
    $region17: #{_decoder_forward_impl.1} parent=1 // pred_fallthru
      _
    // Predicated region
    $region18: #{_decoder_forward_impl.1} parent=1 // pred_check
      _
    $region19: #{_decoder_forward_impl.1} parent=1 // pred_check_branch
      %45 = sbr.rel (0) target = $region21
    $region20: #{_decoder_forward_impl.1} parent=1 // pred_region
      _
    $region21: #{_decoder_forward_impl.1} parent=1 // pred_fallthru
      _
    // Predicated region
    $region22: #{_decoder_forward_impl.1} parent=1 // pred_check
      _
    $region23: #{_decoder_forward_impl.1} parent=1 // pred_check_branch
      %47 = sbr.rel (0) target = $region25
    $region24: #{_decoder_forward_impl.1} parent=1 // pred_region
      %49 = vsyncadd [#allocation5], 0
      %s50 = sshll.u32 %s5, 4
      %s51 = int_to_ptr.hbm [resolvable:$true] %s50
      %s52 = sshll.u32 [#allocation6], 4
      %s53 = int_to_ptr.vmem [resolvable:$true] %s52
      %58 = dma.hbm_to_vmem [thread:$0]  %s51, 8192, %s53, [#allocation5], 256, 256, 16
    $region25: #{_decoder_forward_impl.1} parent=1 // pred_fallthru
      _
    // Predicated region
    $region26: #{_decoder_forward_impl.1} parent=1 // pred_check
      _
    $region27: #{_decoder_forward_impl.1} parent=1 // pred_check_branch
      %60 = sbr.rel (0) target = $region29
    $region28: #{_decoder_forward_impl.1} parent=1 // pred_region
      _
    $region29: #{_decoder_forward_impl.1} parent=1 // pred_fallthru
      _
    // Predicated region
    $region30: #{_decoder_forward_impl.1} parent=1 // pred_check
      _
    $region31: #{_decoder_forward_impl.1} parent=1 // pred_check_branch
      %62 = sbr.rel (0) target = $region33
    $region32: #{_decoder_forward_impl.1} parent=1 // pred_region
      %64 = dma.done [#allocation3], 1024
    $region33: #{_decoder_forward_impl.1} parent=1 // pred_fallthru
      _
    // Predicated region
    $region34: #{_decoder_forward_impl.1} parent=1 // pred_check
      _
    $region35: #{_decoder_forward_impl.1} parent=1 // pred_check_branch
      %66 = sbr.rel (0) target = $region37
    $region36: #{_decoder_forward_impl.1} parent=1 // pred_region
      %68 = dma.done [#allocation5], 8192
    $region37: #{_decoder_forward_impl.1} parent=1 // pred_fallthru
      _
    // Predicated region
    $region38: #{_decoder_forward_impl.1} parent=1 // pred_check
      _
    $region39: #{_decoder_forward_impl.1} parent=1 // pred_check_branch
      %70 = sbr.rel (0) target = $region41
    $region40: #{_decoder_forward_impl.1} parent=1 // pred_region
      %72 = dma.done [#allocation5], 8192
    $region41: #{_decoder_forward_impl.1} parent=1 // pred_fallthru
      _
    %v73 = vld [vmem:[%s0] sm:$0x3]
    %v74 = vld [vmem:[#allocation2] sm:$0xff]
    %v75 = vld [vmem:[#allocation2 + $0x8] sm:$0xff]
    %v76 = vld [vmem:[#allocation2 + $0x10] sm:$0xff]
    %v77 = vld [vmem:[#allocation2 + $0x18] sm:$0xff]
    %v78 = vld [vmem:[#allocation2 + $0x20] sm:$0xff]
    %v79 = vld [vmem:[#allocation2 + $0x28] sm:$0xff]
    %v80 = vld [vmem:[#allocation2 + $0x30] sm:$0xff]
    %v81 = vld [vmem:[#allocation2 + $0x38] sm:$0xff]
    %v82 = vld [vmem:[%s2] sm:$0x3]
    %v84 = vperm.slane %v82, 0
    %v85 = vperm.slane %v82, 1
    %vm88 = vcmask 261120
    %v90 = vsel %vm88, %v73, 0
    %92 = vmatpush.msra.mxu0 0.0
    %93 = vmatpush.msra.mxu0 0.0
    %94 = vmatpush.msra.mxu0 0.0
    %95 = vmatpush.msra.mxu0 0.0
    %96 = vmatpush.msra.mxu0 0.0
    %97 = vmatpush.msra.mxu0 0.0
    %98 = vmatpush.msra.mxu0 0.0
    %99 = vmatpush.msra.mxu0 0.0
    %100 = vmatpush.msra.mxu0 0.0
    %101 = vmatpush.msra.mxu0 0.0
    %102 = vmatpush.msra.mxu0 0.0
    %103 = vmatpush.msra.mxu0 0.0
    %v104 = vand.u32 %v80, 4294901760
    %105 = vmatpush.msra.mxu0 %v104
    %v106 = vand.u32 %v78, 4294901760
    %107 = vmatpush.msra.mxu0 %v106
    %v108 = vand.u32 %v76, 4294901760
    %109 = vmatpush.msra.mxu0 %v108
    %v110 = vand.u32 %v74, 4294901760
    %111 = vmatpush.msra.mxu0 %v110
    %v112 = vand.u32 %v90, 4294901760
    %v113 = vsub.f32 %v90, %v112
    %v114 = vand.u32 %v113, 4294901760
    %v115 = vsub.f32 %v113, %v114
    %v116 = vand.u32 %v115, 4294901760
    %117 = vmatmul.f32.gmra.mxu0 %v116
    %v118 = vpop.f32.mrf.mxu0
    %v119 = vadd.f32 %v84, %v118
    %120 = vdwg.mxu0
    %121 = vmatpush.msra.mxu0 0.0
    %122 = vmatpush.msra.mxu0 0.0
    %123 = vmatpush.msra.mxu0 0.0
    %124 = vmatpush.msra.mxu0 0.0
    %125 = vmatpush.msra.mxu0 0.0
    %126 = vmatpush.msra.mxu0 0.0
    %127 = vmatpush.msra.mxu0 0.0
    %128 = vmatpush.msra.mxu0 0.0
    %129 = vmatpush.msra.mxu0 0.0
    %130 = vmatpush.msra.mxu0 0.0
    %131 = vmatpush.msra.mxu0 0.0
    %132 = vmatpush.msra.mxu0 0.0
    %v133 = vand.u32 %v80, 4294901760
    %v134 = vsub.f32 %v80, %v133
    %v135 = vand.u32 %v134, 4294901760
    %v136 = vsub.f32 %v134, %v135
    %v137 = vand.u32 %v136, 4294901760
    %138 = vmatpush.msra.mxu0 %v137
    %v139 = vand.u32 %v78, 4294901760
    %v140 = vsub.f32 %v78, %v139
    %v141 = vand.u32 %v140, 4294901760
    %v142 = vsub.f32 %v140, %v141
    %v143 = vand.u32 %v142, 4294901760
    %144 = vmatpush.msra.mxu0 %v143
    %v145 = vand.u32 %v76, 4294901760
    %v146 = vsub.f32 %v76, %v145
    %v147 = vand.u32 %v146, 4294901760
    %v148 = vsub.f32 %v146, %v147
    %v149 = vand.u32 %v148, 4294901760
    %150 = vmatpush.msra.mxu0 %v149
    %v151 = vand.u32 %v74, 4294901760
    %v152 = vsub.f32 %v74, %v151
    %v153 = vand.u32 %v152, 4294901760
    %v154 = vsub.f32 %v152, %v153
    %v155 = vand.u32 %v154, 4294901760
    %156 = vmatpush.msra.mxu0 %v155
    %v157 = vand.u32 %v90, 4294901760
    %158 = vmatmul.f32.gmra.mxu0 %v157
    %v159 = vpop.f32.mrf.mxu0
    %v160 = vadd.f32 %v119, %v159
    %161 = vdwg.mxu0
    %162 = vmatpush.msra.mxu0 0.0
    %163 = vmatpush.msra.mxu0 0.0
    %164 = vmatpush.msra.mxu0 0.0
    %165 = vmatpush.msra.mxu0 0.0
    %166 = vmatpush.msra.mxu0 0.0
    %167 = vmatpush.msra.mxu0 0.0
    %168 = vmatpush.msra.mxu0 0.0
    %169 = vmatpush.msra.mxu0 0.0
    %170 = vmatpush.msra.mxu0 0.0
    %171 = vmatpush.msra.mxu0 0.0
    %172 = vmatpush.msra.mxu0 0.0
    %173 = vmatpush.msra.mxu0 0.0
    %v174 = vand.u32 %v80, 4294901760
    %v175 = vsub.f32 %v80, %v174
    %176 = vmatpush.msra.mxu0 %v175
    %v177 = vand.u32 %v78, 4294901760
    %v178 = vsub.f32 %v78, %v177
    %179 = vmatpush.msra.mxu0 %v178
    %v180 = vand.u32 %v76, 4294901760
    %v181 = vsub.f32 %v76, %v180
    %182 = vmatpush.msra.mxu0 %v181
    %v183 = vand.u32 %v74, 4294901760
    %v184 = vsub.f32 %v74, %v183
    %185 = vmatpush.msra.mxu0 %v184
    %v186 = vand.u32 %v90, 4294901760
    %v187 = vsub.f32 %v90, %v186
    %188 = vmatmul.f32.gmra.mxu0 %v187
    %v189 = vpop.f32.mrf.mxu0
    %v190 = vadd.f32 %v160, %v189
    %191 = vdwg.mxu0
    %192 = vmatpush.msra.mxu0 0.0
    %193 = vmatpush.msra.mxu0 0.0
    %194 = vmatpush.msra.mxu0 0.0
    %195 = vmatpush.msra.mxu0 0.0
    %196 = vmatpush.msra.mxu0 0.0
    %197 = vmatpush.msra.mxu0 0.0
    %198 = vmatpush.msra.mxu0 0.0
    %199 = vmatpush.msra.mxu0 0.0
    %200 = vmatpush.msra.mxu0 0.0
    %201 = vmatpush.msra.mxu0 0.0
    %202 = vmatpush.msra.mxu0 0.0
    %203 = vmatpush.msra.mxu0 0.0
    %v204 = vand.u32 %v80, 4294901760
    %205 = vmatpush.msra.mxu0 %v204
    %v206 = vand.u32 %v78, 4294901760
    %207 = vmatpush.msra.mxu0 %v206
    %v208 = vand.u32 %v76, 4294901760
    %209 = vmatpush.msra.mxu0 %v208
    %v210 = vand.u32 %v74, 4294901760
    %211 = vmatpush.msra.mxu0 %v210
    %v212 = vand.u32 %v90, 4294901760
    %v213 = vsub.f32 %v90, %v212
    %v214 = vand.u32 %v213, 4294901760
    %215 = vmatmul.f32.gmra.mxu0 %v214
    %v216 = vpop.f32.mrf.mxu0
    %v217 = vadd.f32 %v190, %v216
    %218 = vdwg.mxu0
    %219 = vmatpush.msra.mxu0 0.0
    %220 = vmatpush.msra.mxu0 0.0
    %221 = vmatpush.msra.mxu0 0.0
    %222 = vmatpush.msra.mxu0 0.0
    %223 = vmatpush.msra.mxu0 0.0
    %224 = vmatpush.msra.mxu0 0.0
    %225 = vmatpush.msra.mxu0 0.0
    %226 = vmatpush.msra.mxu0 0.0
    %227 = vmatpush.msra.mxu0 0.0
    %228 = vmatpush.msra.mxu0 0.0
    %229 = vmatpush.msra.mxu0 0.0
    %230 = vmatpush.msra.mxu0 0.0
    %v231 = vand.u32 %v80, 4294901760
    %v232 = vsub.f32 %v80, %v231
    %v233 = vand.u32 %v232, 4294901760
    %234 = vmatpush.msra.mxu0 %v233
    %v235 = vand.u32 %v78, 4294901760
    %v236 = vsub.f32 %v78, %v235
    %v237 = vand.u32 %v236, 4294901760
    %238 = vmatpush.msra.mxu0 %v237
    %v239 = vand.u32 %v76, 4294901760
    %v240 = vsub.f32 %v76, %v239
    %v241 = vand.u32 %v240, 4294901760
    %242 = vmatpush.msra.mxu0 %v241
    %v243 = vand.u32 %v74, 4294901760
    %v244 = vsub.f32 %v74, %v243
    %v245 = vand.u32 %v244, 4294901760
    %246 = vmatpush.msra.mxu0 %v245
    %v247 = vand.u32 %v90, 4294901760
    %248 = vmatmul.f32.gmra.mxu0 %v247
    %v249 = vpop.f32.mrf.mxu0
    %v250 = vadd.f32 %v217, %v249
    %251 = vdwg.mxu0
    %252 = vmatpush.msra.mxu0 0.0
    %253 = vmatpush.msra.mxu0 0.0
    %254 = vmatpush.msra.mxu0 0.0
    %255 = vmatpush.msra.mxu0 0.0
    %256 = vmatpush.msra.mxu0 0.0
    %257 = vmatpush.msra.mxu0 0.0
    %258 = vmatpush.msra.mxu0 0.0
    %259 = vmatpush.msra.mxu0 0.0
    %260 = vmatpush.msra.mxu0 0.0
    %261 = vmatpush.msra.mxu0 0.0
    %262 = vmatpush.msra.mxu0 0.0
    %263 = vmatpush.msra.mxu0 0.0
    %v264 = vand.u32 %v80, 4294901760
    %265 = vmatpush.msra.mxu0 %v264
    %v266 = vand.u32 %v78, 4294901760
    %267 = vmatpush.msra.mxu0 %v266
    %v268 = vand.u32 %v76, 4294901760
    %269 = vmatpush.msra.mxu0 %v268
    %v270 = vand.u32 %v74, 4294901760
    %271 = vmatpush.msra.mxu0 %v270
    %v272 = vand.u32 %v90, 4294901760
    %273 = vmatmul.f32.gmra.mxu0 %v272
    %v274 = vpop.f32.mrf.mxu0
    %v275 = vadd.f32 %v250, %v274
    %276 = vdwg.mxu0
    %277 = vmatpush.msra.mxu0 0.0
    %278 = vmatpush.msra.mxu0 0.0
    %279 = vmatpush.msra.mxu0 0.0
    %280 = vmatpush.msra.mxu0 0.0
    %281 = vmatpush.msra.mxu0 0.0
    %282 = vmatpush.msra.mxu0 0.0
    %283 = vmatpush.msra.mxu0 0.0
    %284 = vmatpush.msra.mxu0 0.0
    %285 = vmatpush.msra.mxu0 0.0
    %286 = vmatpush.msra.mxu0 0.0
    %287 = vmatpush.msra.mxu0 0.0
    %288 = vmatpush.msra.mxu0 0.0
    %v289 = vand.u32 %v81, 4294901760
    %290 = vmatpush.msra.mxu0 %v289
    %v291 = vand.u32 %v79, 4294901760
    %292 = vmatpush.msra.mxu0 %v291
    %v293 = vand.u32 %v77, 4294901760
    %294 = vmatpush.msra.mxu0 %v293
    %v295 = vand.u32 %v75, 4294901760
    %296 = vmatpush.msra.mxu0 %v295
    %v297 = vand.u32 %v90, 4294901760
    %v298 = vsub.f32 %v90, %v297
    %v299 = vand.u32 %v298, 4294901760
    %v300 = vsub.f32 %v298, %v299
    %v301 = vand.u32 %v300, 4294901760
    %302 = vmatmul.f32.gmra.mxu0 %v301
    %v303 = vpop.f32.mrf.mxu0
    %v304 = vadd.f32 %v85, %v303
    %305 = vdwg.mxu0
    %306 = vmatpush.msra.mxu0 0.0
    %307 = vmatpush.msra.mxu0 0.0
    %308 = vmatpush.msra.mxu0 0.0
    %309 = vmatpush.msra.mxu0 0.0
    %310 = vmatpush.msra.mxu0 0.0
    %311 = vmatpush.msra.mxu0 0.0
    %312 = vmatpush.msra.mxu0 0.0
    %313 = vmatpush.msra.mxu0 0.0
    %314 = vmatpush.msra.mxu0 0.0
    %315 = vmatpush.msra.mxu0 0.0
    %316 = vmatpush.msra.mxu0 0.0
    %317 = vmatpush.msra.mxu0 0.0
    %v318 = vand.u32 %v81, 4294901760
    %v319 = vsub.f32 %v81, %v318
    %v320 = vand.u32 %v319, 4294901760
    %v321 = vsub.f32 %v319, %v320
    %v322 = vand.u32 %v321, 4294901760
    %323 = vmatpush.msra.mxu0 %v322
    %v324 = vand.u32 %v79, 4294901760
    %v325 = vsub.f32 %v79, %v324
    %v326 = vand.u32 %v325, 4294901760
    %v327 = vsub.f32 %v325, %v326
    %v328 = vand.u32 %v327, 4294901760
    %329 = vmatpush.msra.mxu0 %v328
    %v330 = vand.u32 %v77, 4294901760
    %v331 = vsub.f32 %v77, %v330
    %v332 = vand.u32 %v331, 4294901760
    %v333 = vsub.f32 %v331, %v332
    %v334 = vand.u32 %v333, 4294901760
    %335 = vmatpush.msra.mxu0 %v334
    %v336 = vand.u32 %v75, 4294901760
    %v337 = vsub.f32 %v75, %v336
    %v338 = vand.u32 %v337, 4294901760
    %v339 = vsub.f32 %v337, %v338
    %v340 = vand.u32 %v339, 4294901760
    %341 = vmatpush.msra.mxu0 %v340
    %v342 = vand.u32 %v90, 4294901760
    %343 = vmatmul.f32.gmra.mxu0 %v342
    %v344 = vpop.f32.mrf.mxu0
    %v345 = vadd.f32 %v304, %v344
    %346 = vdwg.mxu0
    %347 = vmatpush.msra.mxu0 0.0
    %348 = vmatpush.msra.mxu0 0.0
    %349 = vmatpush.msra.mxu0 0.0
    %350 = vmatpush.msra.mxu0 0.0
    %351 = vmatpush.msra.mxu0 0.0
    %352 = vmatpush.msra.mxu0 0.0
    %353 = vmatpush.msra.mxu0 0.0
    %354 = vmatpush.msra.mxu0 0.0
    %355 = vmatpush.msra.mxu0 0.0
    %356 = vmatpush.msra.mxu0 0.0
    %357 = vmatpush.msra.mxu0 0.0
    %358 = vmatpush.msra.mxu0 0.0
    %v359 = vand.u32 %v81, 4294901760
    %v360 = vsub.f32 %v81, %v359
    %361 = vmatpush.msra.mxu0 %v360
    %v362 = vand.u32 %v79, 4294901760
    %v363 = vsub.f32 %v79, %v362
    %364 = vmatpush.msra.mxu0 %v363
    %v365 = vand.u32 %v77, 4294901760
    %v366 = vsub.f32 %v77, %v365
    %367 = vmatpush.msra.mxu0 %v366
    %v368 = vand.u32 %v75, 4294901760
    %v369 = vsub.f32 %v75, %v368
    %370 = vmatpush.msra.mxu0 %v369
    %v371 = vand.u32 %v90, 4294901760
    %v372 = vsub.f32 %v90, %v371
    %373 = vmatmul.f32.gmra.mxu0 %v372
    %v374 = vpop.f32.mrf.mxu0
    %v375 = vadd.f32 %v345, %v374
    %376 = vdwg.mxu0
    %377 = vmatpush.msra.mxu0 0.0
    %378 = vmatpush.msra.mxu0 0.0
    %379 = vmatpush.msra.mxu0 0.0
    %380 = vmatpush.msra.mxu0 0.0
    %381 = vmatpush.msra.mxu0 0.0
    %382 = vmatpush.msra.mxu0 0.0
    %383 = vmatpush.msra.mxu0 0.0
    %384 = vmatpush.msra.mxu0 0.0
    %385 = vmatpush.msra.mxu0 0.0
    %386 = vmatpush.msra.mxu0 0.0
    %387 = vmatpush.msra.mxu0 0.0
    %388 = vmatpush.msra.mxu0 0.0
    %v389 = vand.u32 %v81, 4294901760
    %390 = vmatpush.msra.mxu0 %v389
    %v391 = vand.u32 %v79, 4294901760
    %392 = vmatpush.msra.mxu0 %v391
    %v393 = vand.u32 %v77, 4294901760
    %394 = vmatpush.msra.mxu0 %v393
    %v395 = vand.u32 %v75, 4294901760
    %396 = vmatpush.msra.mxu0 %v395
    %v397 = vand.u32 %v90, 4294901760
    %v398 = vsub.f32 %v90, %v397
    %v399 = vand.u32 %v398, 4294901760
    %400 = vmatmul.f32.gmra.mxu0 %v399
    %v401 = vpop.f32.mrf.mxu0
    %v402 = vadd.f32 %v375, %v401
    %403 = vdwg.mxu0
    %404 = vmatpush.msra.mxu0 0.0
    %405 = vmatpush.msra.mxu0 0.0
    %406 = vmatpush.msra.mxu0 0.0
    %407 = vmatpush.msra.mxu0 0.0
    %408 = vmatpush.msra.mxu0 0.0
    %409 = vmatpush.msra.mxu0 0.0
    %410 = vmatpush.msra.mxu0 0.0
    %411 = vmatpush.msra.mxu0 0.0
    %412 = vmatpush.msra.mxu0 0.0
    %413 = vmatpush.msra.mxu0 0.0
    %414 = vmatpush.msra.mxu0 0.0
    %415 = vmatpush.msra.mxu0 0.0
    %v416 = vand.u32 %v81, 4294901760
    %v417 = vsub.f32 %v81, %v416
    %v418 = vand.u32 %v417, 4294901760
    %419 = vmatpush.msra.mxu0 %v418
    %v420 = vand.u32 %v79, 4294901760
    %v421 = vsub.f32 %v79, %v420
    %v422 = vand.u32 %v421, 4294901760
    %423 = vmatpush.msra.mxu0 %v422
    %v424 = vand.u32 %v77, 4294901760
    %v425 = vsub.f32 %v77, %v424
    %v426 = vand.u32 %v425, 4294901760
    %427 = vmatpush.msra.mxu0 %v426
    %v428 = vand.u32 %v75, 4294901760
    %v429 = vsub.f32 %v75, %v428
    %v430 = vand.u32 %v429, 4294901760
    %431 = vmatpush.msra.mxu0 %v430
    %v432 = vand.u32 %v90, 4294901760
    %433 = vmatmul.f32.gmra.mxu0 %v432
    %v434 = vpop.f32.mrf.mxu0
    %v435 = vadd.f32 %v402, %v434
    %436 = vdwg.mxu0
    %437 = vmatpush.msra.mxu0 0.0
    %438 = vmatpush.msra.mxu0 0.0
    %439 = vmatpush.msra.mxu0 0.0
    %440 = vmatpush.msra.mxu0 0.0
    %441 = vmatpush.msra.mxu0 0.0
    %442 = vmatpush.msra.mxu0 0.0
    %443 = vmatpush.msra.mxu0 0.0
    %444 = vmatpush.msra.mxu0 0.0
    %445 = vmatpush.msra.mxu0 0.0
    %446 = vmatpush.msra.mxu0 0.0
    %447 = vmatpush.msra.mxu0 0.0
    %448 = vmatpush.msra.mxu0 0.0
    %v449 = vand.u32 %v81, 4294901760
    %450 = vmatpush.msra.mxu0 %v449
    %v451 = vand.u32 %v79, 4294901760
    %452 = vmatpush.msra.mxu0 %v451
    %v453 = vand.u32 %v77, 4294901760
    %454 = vmatpush.msra.mxu0 %v453
    %v455 = vand.u32 %v75, 4294901760
    %456 = vmatpush.msra.mxu0 %v455
    %v457 = vand.u32 %v90, 4294901760
    %458 = vmatmul.f32.gmra.mxu0 %v457
    %v459 = vpop.f32.mrf.mxu0
    %v460 = vadd.f32 %v435, %v459
    %461 = vdwg.mxu0
    %v462 = vmax.f32 %v275, 0.0
    %v463 = vmax.f32 %v460, 0.0
    %v464 = vld [vmem:[#allocation4] sm:$0xff]
    %v465 = vld [vmem:[#allocation4 + $0x8] sm:$0xff]
    %v466 = vld [vmem:[#allocation4 + $0x10] sm:$0xff]
    %v467 = vld [vmem:[#allocation4 + $0x18] sm:$0xff]
    %v468 = vld [vmem:[#allocation4 + $0x20] sm:$0xff]
    %v469 = vld [vmem:[#allocation4 + $0x28] sm:$0xff]
    %v470 = vld [vmem:[#allocation4 + $0x30] sm:$0xff]
    %v471 = vld [vmem:[#allocation4 + $0x38] sm:$0xff]
    %v472 = vld [vmem:[#allocation4 + $0x40] sm:$0xff]
    %v473 = vld [vmem:[#allocation4 + $0x48] sm:$0xff]
    %v474 = vld [vmem:[#allocation4 + $0x50] sm:$0xff]
    %v475 = vld [vmem:[#allocation4 + $0x58] sm:$0xff]
    %v476 = vld [vmem:[#allocation4 + $0x60] sm:$0xff]
    %v477 = vld [vmem:[#allocation4 + $0x68] sm:$0xff]
    %v478 = vld [vmem:[#allocation4 + $0x70] sm:$0xff]
    %v479 = vld [vmem:[#allocation4 + $0x78] sm:$0xff]
    %v480 = vld [vmem:[#allocation4 + $0x80] sm:$0xff]
    %v481 = vld [vmem:[#allocation4 + $0x88] sm:$0xff]
    %v482 = vld [vmem:[#allocation4 + $0x90] sm:$0xff]
    %v483 = vld [vmem:[#allocation4 + $0x98] sm:$0xff]
    %v484 = vld [vmem:[#allocation4 + $0xa0] sm:$0xff]
    %v485 = vld [vmem:[#allocation4 + $0xa8] sm:$0xff]
    %v486 = vld [vmem:[#allocation4 + $0xb0] sm:$0xff]
    %v487 = vld [vmem:[#allocation4 + $0xb8] sm:$0xff]
    %v488 = vld [vmem:[#allocation4 + $0xc0] sm:$0xff]
    %v489 = vld [vmem:[#allocation4 + $0xc8] sm:$0xff]
    %v490 = vld [vmem:[#allocation4 + $0xd0] sm:$0xff]
    %v491 = vld [vmem:[#allocation4 + $0xd8] sm:$0xff]
    %v492 = vld [vmem:[#allocation4 + $0xe0] sm:$0xff]
    %v493 = vld [vmem:[#allocation4 + $0xe8] sm:$0xff]
    %v494 = vld [vmem:[#allocation4 + $0xf0] sm:$0xff]
    %v495 = vld [vmem:[#allocation4 + $0xf8] sm:$0xff]
    %v496 = vld [vmem:[#allocation4 + $0x100] sm:$0xff]
    %v497 = vld [vmem:[#allocation4 + $0x108] sm:$0xff]
    %v498 = vld [vmem:[#allocation4 + $0x110] sm:$0xff]
    %v499 = vld [vmem:[#allocation4 + $0x118] sm:$0xff]
    %v500 = vld [vmem:[#allocation4 + $0x120] sm:$0xff]
    %v501 = vld [vmem:[#allocation4 + $0x128] sm:$0xff]
    %v502 = vld [vmem:[#allocation4 + $0x130] sm:$0xff]
    %v503 = vld [vmem:[#allocation4 + $0x138] sm:$0xff]
    %v504 = vld [vmem:[#allocation4 + $0x140] sm:$0xff]
    %v505 = vld [vmem:[#allocation4 + $0x148] sm:$0xff]
    %v506 = vld [vmem:[#allocation4 + $0x150] sm:$0xff]
    %v507 = vld [vmem:[#allocation4 + $0x158] sm:$0xff]
    %v508 = vld [vmem:[#allocation4 + $0x160] sm:$0xff]
    %v509 = vld [vmem:[#allocation4 + $0x168] sm:$0xff]
    %v510 = vld [vmem:[#allocation4 + $0x170] sm:$0xff]
    %v511 = vld [vmem:[#allocation4 + $0x178] sm:$0xff]
    %v512 = vld [vmem:[#allocation4 + $0x180] sm:$0xff]
    %v513 = vld [vmem:[#allocation4 + $0x188] sm:$0xff]
    %v514 = vld [vmem:[#allocation4 + $0x190] sm:$0xff]
    %v515 = vld [vmem:[#allocation4 + $0x198] sm:$0xff]
    %v516 = vld [vmem:[#allocation4 + $0x1a0] sm:$0xff]
    %v517 = vld [vmem:[#allocation4 + $0x1a8] sm:$0xff]
    %v518 = vld [vmem:[#allocation4 + $0x1b0] sm:$0xff]
    %v519 = vld [vmem:[#allocation4 + $0x1b8] sm:$0xff]
    %v520 = vld [vmem:[#allocation4 + $0x1c0] sm:$0xff]
    %v521 = vld [vmem:[#allocation4 + $0x1c8] sm:$0xff]
    %v522 = vld [vmem:[#allocation4 + $0x1d0] sm:$0xff]
    %v523 = vld [vmem:[#allocation4 + $0x1d8] sm:$0xff]
    %v524 = vld [vmem:[#allocation4 + $0x1e0] sm:$0xff]
    %v525 = vld [vmem:[#allocation4 + $0x1e8] sm:$0xff]
    %v526 = vld [vmem:[#allocation4 + $0x1f0] sm:$0xff]
    %v527 = vld [vmem:[#allocation4 + $0x1f8] sm:$0xff]
    %v528 = vld [vmem:[%s4] sm:$0x3]
    %v530 = vperm.slane %v528, 0
    %v531 = vperm.slane %v528, 1
    %v534 = vand.u32 %v494, 4294901760
    %535 = vmatpush.msra.mxu0 %v534
    %v536 = vand.u32 %v492, 4294901760
    %537 = vmatpush.msra.mxu0 %v536
    %v538 = vand.u32 %v490, 4294901760
    %539 = vmatpush.msra.mxu0 %v538
    %v540 = vand.u32 %v488, 4294901760
    %541 = vmatpush.msra.mxu0 %v540
    %v542 = vand.u32 %v486, 4294901760
    %543 = vmatpush.msra.mxu0 %v542
    %v544 = vand.u32 %v484, 4294901760
    %545 = vmatpush.msra.mxu0 %v544
    %v546 = vand.u32 %v482, 4294901760
    %547 = vmatpush.msra.mxu0 %v546
    %v548 = vand.u32 %v480, 4294901760
    %549 = vmatpush.msra.mxu0 %v548
    %v550 = vand.u32 %v478, 4294901760
    %551 = vmatpush.msra.mxu0 %v550
    %v552 = vand.u32 %v476, 4294901760
    %553 = vmatpush.msra.mxu0 %v552
    %v554 = vand.u32 %v474, 4294901760
    %555 = vmatpush.msra.mxu0 %v554
    %v556 = vand.u32 %v472, 4294901760
    %557 = vmatpush.msra.mxu0 %v556
    %v558 = vand.u32 %v470, 4294901760
    %559 = vmatpush.msra.mxu0 %v558
    %v560 = vand.u32 %v468, 4294901760
    %561 = vmatpush.msra.mxu0 %v560
    %v562 = vand.u32 %v466, 4294901760
    %563 = vmatpush.msra.mxu0 %v562
    %v564 = vand.u32 %v464, 4294901760
    %565 = vmatpush.msra.mxu0 %v564
    %v566 = vand.u32 %v462, 4294901760
    %v567 = vsub.f32 %v462, %v566
    %v568 = vand.u32 %v567, 4294901760
    %v569 = vsub.f32 %v567, %v568
    %v570 = vand.u32 %v569, 4294901760
    %571 = vmatmul.f32.gmra.mxu0 %v570
    %v572 = vpop.f32.mrf.mxu0
    %v573 = vadd.f32 %v530, %v572
    %574 = vdwg.mxu0
    %v575 = vand.u32 %v494, 4294901760
    %v576 = vsub.f32 %v494, %v575
    %v577 = vand.u32 %v576, 4294901760
    %v578 = vsub.f32 %v576, %v577
    %v579 = vand.u32 %v578, 4294901760
    %580 = vmatpush.msra.mxu0 %v579
    %v581 = vand.u32 %v492, 4294901760
    %v582 = vsub.f32 %v492, %v581
    %v583 = vand.u32 %v582, 4294901760
    %v584 = vsub.f32 %v582, %v583
    %v585 = vand.u32 %v584, 4294901760
    %586 = vmatpush.msra.mxu0 %v585
    %v587 = vand.u32 %v490, 4294901760
    %v588 = vsub.f32 %v490, %v587
    %v589 = vand.u32 %v588, 4294901760
    %v590 = vsub.f32 %v588, %v589
    %v591 = vand.u32 %v590, 4294901760
    %592 = vmatpush.msra.mxu0 %v591
    %v593 = vand.u32 %v488, 4294901760
    %v594 = vsub.f32 %v488, %v593
    %v595 = vand.u32 %v594, 4294901760
    %v596 = vsub.f32 %v594, %v595
    %v597 = vand.u32 %v596, 4294901760
    %598 = vmatpush.msra.mxu0 %v597
    %v599 = vand.u32 %v486, 4294901760
    %v600 = vsub.f32 %v486, %v599
    %v601 = vand.u32 %v600, 4294901760
    %v602 = vsub.f32 %v600, %v601
    %v603 = vand.u32 %v602, 4294901760
    %604 = vmatpush.msra.mxu0 %v603
    %v605 = vand.u32 %v484, 4294901760
    %v606 = vsub.f32 %v484, %v605
    %v607 = vand.u32 %v606, 4294901760
    %v608 = vsub.f32 %v606, %v607
    %v609 = vand.u32 %v608, 4294901760
    %610 = vmatpush.msra.mxu0 %v609
    %v611 = vand.u32 %v482, 4294901760
    %v612 = vsub.f32 %v482, %v611
    %v613 = vand.u32 %v612, 4294901760
    %v614 = vsub.f32 %v612, %v613
    %v615 = vand.u32 %v614, 4294901760
    %616 = vmatpush.msra.mxu0 %v615
    %v617 = vand.u32 %v480, 4294901760
    %v618 = vsub.f32 %v480, %v617
    %v619 = vand.u32 %v618, 4294901760
    %v620 = vsub.f32 %v618, %v619
    %v621 = vand.u32 %v620, 4294901760
    %622 = vmatpush.msra.mxu0 %v621
    %v623 = vand.u32 %v478, 4294901760
    %v624 = vsub.f32 %v478, %v623
    %v625 = vand.u32 %v624, 4294901760
    %v626 = vsub.f32 %v624, %v625
    %v627 = vand.u32 %v626, 4294901760
    %628 = vmatpush.msra.mxu0 %v627
    %v629 = vand.u32 %v476, 4294901760
    %v630 = vsub.f32 %v476, %v629
    %v631 = vand.u32 %v630, 4294901760
    %v632 = vsub.f32 %v630, %v631
    %v633 = vand.u32 %v632, 4294901760
    %634 = vmatpush.msra.mxu0 %v633
    %v635 = vand.u32 %v474, 4294901760
    %v636 = vsub.f32 %v474, %v635
    %v637 = vand.u32 %v636, 4294901760
    %v638 = vsub.f32 %v636, %v637
    %v639 = vand.u32 %v638, 4294901760
    %640 = vmatpush.msra.mxu0 %v639
    %v641 = vand.u32 %v472, 4294901760
    %v642 = vsub.f32 %v472, %v641
    %v643 = vand.u32 %v642, 4294901760
    %v644 = vsub.f32 %v642, %v643
    %v645 = vand.u32 %v644, 4294901760
    %646 = vmatpush.msra.mxu0 %v645
    %v647 = vand.u32 %v470, 4294901760
    %v648 = vsub.f32 %v470, %v647
    %v649 = vand.u32 %v648, 4294901760
    %v650 = vsub.f32 %v648, %v649
    %v651 = vand.u32 %v650, 4294901760
    %652 = vmatpush.msra.mxu0 %v651
    %v653 = vand.u32 %v468, 4294901760
    %v654 = vsub.f32 %v468, %v653
    %v655 = vand.u32 %v654, 4294901760
    %v656 = vsub.f32 %v654, %v655
    %v657 = vand.u32 %v656, 4294901760
    %658 = vmatpush.msra.mxu0 %v657
    %v659 = vand.u32 %v466, 4294901760
    %v660 = vsub.f32 %v466, %v659
    %v661 = vand.u32 %v660, 4294901760
    %v662 = vsub.f32 %v660, %v661
    %v663 = vand.u32 %v662, 4294901760
    %664 = vmatpush.msra.mxu0 %v663
    %v665 = vand.u32 %v464, 4294901760
    %v666 = vsub.f32 %v464, %v665
    %v667 = vand.u32 %v666, 4294901760
    %v668 = vsub.f32 %v666, %v667
    %v669 = vand.u32 %v668, 4294901760
    %670 = vmatpush.msra.mxu0 %v669
    %v671 = vand.u32 %v462, 4294901760
    %672 = vmatmul.f32.gmra.mxu0 %v671
    %v673 = vpop.f32.mrf.mxu0
    %v674 = vadd.f32 %v573, %v673
    %675 = vdwg.mxu0
    %v676 = vand.u32 %v494, 4294901760
    %v677 = vsub.f32 %v494, %v676
    %678 = vmatpush.msra.mxu0 %v677
    %v679 = vand.u32 %v492, 4294901760
    %v680 = vsub.f32 %v492, %v679
    %681 = vmatpush.msra.mxu0 %v680
    %v682 = vand.u32 %v490, 4294901760
    %v683 = vsub.f32 %v490, %v682
    %684 = vmatpush.msra.mxu0 %v683
    %v685 = vand.u32 %v488, 4294901760
    %v686 = vsub.f32 %v488, %v685
    %687 = vmatpush.msra.mxu0 %v686
    %v688 = vand.u32 %v486, 4294901760
    %v689 = vsub.f32 %v486, %v688
    %690 = vmatpush.msra.mxu0 %v689
    %v691 = vand.u32 %v484, 4294901760
    %v692 = vsub.f32 %v484, %v691
    %693 = vmatpush.msra.mxu0 %v692
    %v694 = vand.u32 %v482, 4294901760
    %v695 = vsub.f32 %v482, %v694
    %696 = vmatpush.msra.mxu0 %v695
    %v697 = vand.u32 %v480, 4294901760
    %v698 = vsub.f32 %v480, %v697
    %699 = vmatpush.msra.mxu0 %v698
    %v700 = vand.u32 %v478, 4294901760
    %v701 = vsub.f32 %v478, %v700
    %702 = vmatpush.msra.mxu0 %v701
    %v703 = vand.u32 %v476, 4294901760
    %v704 = vsub.f32 %v476, %v703
    %705 = vmatpush.msra.mxu0 %v704
    %v706 = vand.u32 %v474, 4294901760
    %v707 = vsub.f32 %v474, %v706
    %708 = vmatpush.msra.mxu0 %v707
    %v709 = vand.u32 %v472, 4294901760
    %v710 = vsub.f32 %v472, %v709
    %711 = vmatpush.msra.mxu0 %v710
    %v712 = vand.u32 %v470, 4294901760
    %v713 = vsub.f32 %v470, %v712
    %714 = vmatpush.msra.mxu0 %v713
    %v715 = vand.u32 %v468, 4294901760
    %v716 = vsub.f32 %v468, %v715
    %717 = vmatpush.msra.mxu0 %v716
    %v718 = vand.u32 %v466, 4294901760
    %v719 = vsub.f32 %v466, %v718
    %720 = vmatpush.msra.mxu0 %v719
    %v721 = vand.u32 %v464, 4294901760
    %v722 = vsub.f32 %v464, %v721
    %723 = vmatpush.msra.mxu0 %v722
    %v724 = vand.u32 %v462, 4294901760
    %v725 = vsub.f32 %v462, %v724
    %726 = vmatmul.f32.gmra.mxu0 %v725
    %v727 = vpop.f32.mrf.mxu0
    %v728 = vadd.f32 %v674, %v727
    %729 = vdwg.mxu0
    %v730 = vand.u32 %v494, 4294901760
    %731 = vmatpush.msra.mxu0 %v730
    %v732 = vand.u32 %v492, 4294901760
    %733 = vmatpush.msra.mxu0 %v732
    %v734 = vand.u32 %v490, 4294901760
    %735 = vmatpush.msra.mxu0 %v734
    %v736 = vand.u32 %v488, 4294901760
    %737 = vmatpush.msra.mxu0 %v736
    %v738 = vand.u32 %v486, 4294901760
    %739 = vmatpush.msra.mxu0 %v738
    %v740 = vand.u32 %v484, 4294901760
    %741 = vmatpush.msra.mxu0 %v740
    %v742 = vand.u32 %v482, 4294901760
    %743 = vmatpush.msra.mxu0 %v742
    %v744 = vand.u32 %v480, 4294901760
    %745 = vmatpush.msra.mxu0 %v744
    %v746 = vand.u32 %v478, 4294901760
    %747 = vmatpush.msra.mxu0 %v746
    %v748 = vand.u32 %v476, 4294901760
    %749 = vmatpush.msra.mxu0 %v748
    %v750 = vand.u32 %v474, 4294901760
    %751 = vmatpush.msra.mxu0 %v750
    %v752 = vand.u32 %v472, 4294901760
    %753 = vmatpush.msra.mxu0 %v752
    %v754 = vand.u32 %v470, 4294901760
    %755 = vmatpush.msra.mxu0 %v754
    %v756 = vand.u32 %v468, 4294901760
    %757 = vmatpush.msra.mxu0 %v756
    %v758 = vand.u32 %v466, 4294901760
    %759 = vmatpush.msra.mxu0 %v758
    %v760 = vand.u32 %v464, 4294901760
    %761 = vmatpush.msra.mxu0 %v760
    %v762 = vand.u32 %v462, 4294901760
    %v763 = vsub.f32 %v462, %v762
    %v764 = vand.u32 %v763, 4294901760
    %765 = vmatmul.f32.gmra.mxu0 %v764
    %v766 = vpop.f32.mrf.mxu0
    %v767 = vadd.f32 %v728, %v766
    %768 = vdwg.mxu0
    %v769 = vand.u32 %v494, 4294901760
    %v770 = vsub.f32 %v494, %v769
    %v771 = vand.u32 %v770, 4294901760
    %772 = vmatpush.msra.mxu0 %v771
    %v773 = vand.u32 %v492, 4294901760
    %v774 = vsub.f32 %v492, %v773
    %v775 = vand.u32 %v774, 4294901760
    %776 = vmatpush.msra.mxu0 %v775
    %v777 = vand.u32 %v490, 4294901760
    %v778 = vsub.f32 %v490, %v777
    %v779 = vand.u32 %v778, 4294901760
    %780 = vmatpush.msra.mxu0 %v779
    %v781 = vand.u32 %v488, 4294901760
    %v782 = vsub.f32 %v488, %v781
    %v783 = vand.u32 %v782, 4294901760
    %784 = vmatpush.msra.mxu0 %v783
    %v785 = vand.u32 %v486, 4294901760
    %v786 = vsub.f32 %v486, %v785
    %v787 = vand.u32 %v786, 4294901760
    %788 = vmatpush.msra.mxu0 %v787
    %v789 = vand.u32 %v484, 4294901760
    %v790 = vsub.f32 %v484, %v789
    %v791 = vand.u32 %v790, 4294901760
    %792 = vmatpush.msra.mxu0 %v791
    %v793 = vand.u32 %v482, 4294901760
    %v794 = vsub.f32 %v482, %v793
    %v795 = vand.u32 %v794, 4294901760
    %796 = vmatpush.msra.mxu0 %v795
    %v797 = vand.u32 %v480, 4294901760
    %v798 = vsub.f32 %v480, %v797
    %v799 = vand.u32 %v798, 4294901760
    %800 = vmatpush.msra.mxu0 %v799
    %v801 = vand.u32 %v478, 4294901760
    %v802 = vsub.f32 %v478, %v801
    %v803 = vand.u32 %v802, 4294901760
    %804 = vmatpush.msra.mxu0 %v803
    %v805 = vand.u32 %v476, 4294901760
    %v806 = vsub.f32 %v476, %v805
    %v807 = vand.u32 %v806, 4294901760
    %808 = vmatpush.msra.mxu0 %v807
    %v809 = vand.u32 %v474, 4294901760
    %v810 = vsub.f32 %v474, %v809
    %v811 = vand.u32 %v810, 4294901760
    %812 = vmatpush.msra.mxu0 %v811
    %v813 = vand.u32 %v472, 4294901760
    %v814 = vsub.f32 %v472, %v813
    %v815 = vand.u32 %v814, 4294901760
    %816 = vmatpush.msra.mxu0 %v815
    %v817 = vand.u32 %v470, 4294901760
    %v818 = vsub.f32 %v470, %v817
    %v819 = vand.u32 %v818, 4294901760
    %820 = vmatpush.msra.mxu0 %v819
    %v821 = vand.u32 %v468, 4294901760
    %v822 = vsub.f32 %v468, %v821
    %v823 = vand.u32 %v822, 4294901760
    %824 = vmatpush.msra.mxu0 %v823
    %v825 = vand.u32 %v466, 4294901760
    %v826 = vsub.f32 %v466, %v825
    %v827 = vand.u32 %v826, 4294901760
    %828 = vmatpush.msra.mxu0 %v827
    %v829 = vand.u32 %v464, 4294901760
    %v830 = vsub.f32 %v464, %v829
    %v831 = vand.u32 %v830, 4294901760
    %832 = vmatpush.msra.mxu0 %v831
    %v833 = vand.u32 %v462, 4294901760
    %834 = vmatmul.f32.gmra.mxu0 %v833
    %v835 = vpop.f32.mrf.mxu0
    %v836 = vadd.f32 %v767, %v835
    %837 = vdwg.mxu0
    %v838 = vand.u32 %v494, 4294901760
    %839 = vmatpush.msra.mxu0 %v838
    %v840 = vand.u32 %v492, 4294901760
    %841 = vmatpush.msra.mxu0 %v840
    %v842 = vand.u32 %v490, 4294901760
    %843 = vmatpush.msra.mxu0 %v842
    %v844 = vand.u32 %v488, 4294901760
    %845 = vmatpush.msra.mxu0 %v844
    %v846 = vand.u32 %v486, 4294901760
    %847 = vmatpush.msra.mxu0 %v846
    %v848 = vand.u32 %v484, 4294901760
    %849 = vmatpush.msra.mxu0 %v848
    %v850 = vand.u32 %v482, 4294901760
    %851 = vmatpush.msra.mxu0 %v850
    %v852 = vand.u32 %v480, 4294901760
    %853 = vmatpush.msra.mxu0 %v852
    %v854 = vand.u32 %v478, 4294901760
    %855 = vmatpush.msra.mxu0 %v854
    %v856 = vand.u32 %v476, 4294901760
    %857 = vmatpush.msra.mxu0 %v856
    %v858 = vand.u32 %v474, 4294901760
    %859 = vmatpush.msra.mxu0 %v858
    %v860 = vand.u32 %v472, 4294901760
    %861 = vmatpush.msra.mxu0 %v860
    %v862 = vand.u32 %v470, 4294901760
    %863 = vmatpush.msra.mxu0 %v862
    %v864 = vand.u32 %v468, 4294901760
    %865 = vmatpush.msra.mxu0 %v864
    %v866 = vand.u32 %v466, 4294901760
    %867 = vmatpush.msra.mxu0 %v866
    %v868 = vand.u32 %v464, 4294901760
    %869 = vmatpush.msra.mxu0 %v868
    %v870 = vand.u32 %v462, 4294901760
    %871 = vmatmul.f32.gmra.mxu0 %v870
    %v872 = vpop.f32.mrf.mxu0
    %v873 = vadd.f32 %v836, %v872
    %874 = vdwg.mxu0
    %v875 = vand.u32 %v526, 4294901760
    %876 = vmatpush.msra.mxu0 %v875
    %v877 = vand.u32 %v524, 4294901760
    %878 = vmatpush.msra.mxu0 %v877
    %v879 = vand.u32 %v522, 4294901760
    %880 = vmatpush.msra.mxu0 %v879
    %v881 = vand.u32 %v520, 4294901760
    %882 = vmatpush.msra.mxu0 %v881
    %v883 = vand.u32 %v518, 4294901760
    %884 = vmatpush.msra.mxu0 %v883
    %v885 = vand.u32 %v516, 4294901760
    %886 = vmatpush.msra.mxu0 %v885
    %v887 = vand.u32 %v514, 4294901760
    %888 = vmatpush.msra.mxu0 %v887
    %v889 = vand.u32 %v512, 4294901760
    %890 = vmatpush.msra.mxu0 %v889
    %v891 = vand.u32 %v510, 4294901760
    %892 = vmatpush.msra.mxu0 %v891
    %v893 = vand.u32 %v508, 4294901760
    %894 = vmatpush.msra.mxu0 %v893
    %v895 = vand.u32 %v506, 4294901760
    %896 = vmatpush.msra.mxu0 %v895
    %v897 = vand.u32 %v504, 4294901760
    %898 = vmatpush.msra.mxu0 %v897
    %v899 = vand.u32 %v502, 4294901760
    %900 = vmatpush.msra.mxu0 %v899
    %v901 = vand.u32 %v500, 4294901760
    %902 = vmatpush.msra.mxu0 %v901
    %v903 = vand.u32 %v498, 4294901760
    %904 = vmatpush.msra.mxu0 %v903
    %v905 = vand.u32 %v496, 4294901760
    %906 = vmatpush.msra.mxu0 %v905
    %v907 = vand.u32 %v463, 4294901760
    %v908 = vsub.f32 %v463, %v907
    %v909 = vand.u32 %v908, 4294901760
    %v910 = vsub.f32 %v908, %v909
    %v911 = vand.u32 %v910, 4294901760
    %912 = vmatmul.f32.gmra.mxu0 %v911
    %v913 = vpop.f32.mrf.mxu0
    %v914 = vadd.f32 %v873, %v913
    %915 = vdwg.mxu0
    %v916 = vand.u32 %v526, 4294901760
    %v917 = vsub.f32 %v526, %v916
    %v918 = vand.u32 %v917, 4294901760
    %v919 = vsub.f32 %v917, %v918
    %v920 = vand.u32 %v919, 4294901760
    %921 = vmatpush.msra.mxu0 %v920
    %v922 = vand.u32 %v524, 4294901760
    %v923 = vsub.f32 %v524, %v922
    %v924 = vand.u32 %v923, 4294901760
    %v925 = vsub.f32 %v923, %v924
    %v926 = vand.u32 %v925, 4294901760
    %927 = vmatpush.msra.mxu0 %v926
    %v928 = vand.u32 %v522, 4294901760
    %v929 = vsub.f32 %v522, %v928
    %v930 = vand.u32 %v929, 4294901760
    %v931 = vsub.f32 %v929, %v930
    %v932 = vand.u32 %v931, 4294901760
    %933 = vmatpush.msra.mxu0 %v932
    %v934 = vand.u32 %v520, 4294901760
    %v935 = vsub.f32 %v520, %v934
    %v936 = vand.u32 %v935, 4294901760
    %v937 = vsub.f32 %v935, %v936
    %v938 = vand.u32 %v937, 4294901760
    %939 = vmatpush.msra.mxu0 %v938
    %v940 = vand.u32 %v518, 4294901760
    %v941 = vsub.f32 %v518, %v940
    %v942 = vand.u32 %v941, 4294901760
    %v943 = vsub.f32 %v941, %v942
    %v944 = vand.u32 %v943, 4294901760
    %945 = vmatpush.msra.mxu0 %v944
    %v946 = vand.u32 %v516, 4294901760
    %v947 = vsub.f32 %v516, %v946
    %v948 = vand.u32 %v947, 4294901760
    %v949 = vsub.f32 %v947, %v948
    %v950 = vand.u32 %v949, 4294901760
    %951 = vmatpush.msra.mxu0 %v950
    %v952 = vand.u32 %v514, 4294901760
    %v953 = vsub.f32 %v514, %v952
    %v954 = vand.u32 %v953, 4294901760
    %v955 = vsub.f32 %v953, %v954
    %v956 = vand.u32 %v955, 4294901760
    %957 = vmatpush.msra.mxu0 %v956
    %v958 = vand.u32 %v512, 4294901760
    %v959 = vsub.f32 %v512, %v958
    %v960 = vand.u32 %v959, 4294901760
    %v961 = vsub.f32 %v959, %v960
    %v962 = vand.u32 %v961, 4294901760
    %963 = vmatpush.msra.mxu0 %v962
    %v964 = vand.u32 %v510, 4294901760
    %v965 = vsub.f32 %v510, %v964
    %v966 = vand.u32 %v965, 4294901760
    %v967 = vsub.f32 %v965, %v966
    %v968 = vand.u32 %v967, 4294901760
    %969 = vmatpush.msra.mxu0 %v968
    %v970 = vand.u32 %v508, 4294901760
    %v971 = vsub.f32 %v508, %v970
    %v972 = vand.u32 %v971, 4294901760
    %v973 = vsub.f32 %v971, %v972
    %v974 = vand.u32 %v973, 4294901760
    %975 = vmatpush.msra.mxu0 %v974
    %v976 = vand.u32 %v506, 4294901760
    %v977 = vsub.f32 %v506, %v976
    %v978 = vand.u32 %v977, 4294901760
    %v979 = vsub.f32 %v977, %v978
    %v980 = vand.u32 %v979, 4294901760
    %981 = vmatpush.msra.mxu0 %v980
    %v982 = vand.u32 %v504, 4294901760
    %v983 = vsub.f32 %v504, %v982
    %v984 = vand.u32 %v983, 4294901760
    %v985 = vsub.f32 %v983, %v984
    %v986 = vand.u32 %v985, 4294901760
    %987 = vmatpush.msra.mxu0 %v986
    %v988 = vand.u32 %v502, 4294901760
    %v989 = vsub.f32 %v502, %v988
    %v990 = vand.u32 %v989, 4294901760
    %v991 = vsub.f32 %v989, %v990
    %v992 = vand.u32 %v991, 4294901760
    %993 = vmatpush.msra.mxu0 %v992
    %v994 = vand.u32 %v500, 4294901760
    %v995 = vsub.f32 %v500, %v994
    %v996 = vand.u32 %v995, 4294901760
    %v997 = vsub.f32 %v995, %v996
    %v998 = vand.u32 %v997, 4294901760
    %999 = vmatpush.msra.mxu0 %v998
    %v1000 = vand.u32 %v498, 4294901760
    %v1001 = vsub.f32 %v498, %v1000
    %v1002 = vand.u32 %v1001, 4294901760
    %v1003 = vsub.f32 %v1001, %v1002
    %v1004 = vand.u32 %v1003, 4294901760
    %1005 = vmatpush.msra.mxu0 %v1004
    %v1006 = vand.u32 %v496, 4294901760
    %v1007 = vsub.f32 %v496, %v1006
    %v1008 = vand.u32 %v1007, 4294901760
    %v1009 = vsub.f32 %v1007, %v1008
    %v1010 = vand.u32 %v1009, 4294901760
    %1011 = vmatpush.msra.mxu0 %v1010
    %v1012 = vand.u32 %v463, 4294901760
    %1013 = vmatmul.f32.gmra.mxu0 %v1012
    %v1014 = vpop.f32.mrf.mxu0
    %v1015 = vadd.f32 %v914, %v1014
    %1016 = vdwg.mxu0
    %v1017 = vand.u32 %v526, 4294901760
    %v1018 = vsub.f32 %v526, %v1017
    %1019 = vmatpush.msra.mxu0 %v1018
    %v1020 = vand.u32 %v524, 4294901760
    %v1021 = vsub.f32 %v524, %v1020
    %1022 = vmatpush.msra.mxu0 %v1021
    %v1023 = vand.u32 %v522, 4294901760
    %v1024 = vsub.f32 %v522, %v1023
    %1025 = vmatpush.msra.mxu0 %v1024
    %v1026 = vand.u32 %v520, 4294901760
    %v1027 = vsub.f32 %v520, %v1026
    %1028 = vmatpush.msra.mxu0 %v1027
    %v1029 = vand.u32 %v518, 4294901760
    %v1030 = vsub.f32 %v518, %v1029
    %1031 = vmatpush.msra.mxu0 %v1030
    %v1032 = vand.u32 %v516, 4294901760
    %v1033 = vsub.f32 %v516, %v1032
    %1034 = vmatpush.msra.mxu0 %v1033
    %v1035 = vand.u32 %v514, 4294901760
    %v1036 = vsub.f32 %v514, %v1035
    %1037 = vmatpush.msra.mxu0 %v1036
    %v1038 = vand.u32 %v512, 4294901760
    %v1039 = vsub.f32 %v512, %v1038
    %1040 = vmatpush.msra.mxu0 %v1039
    %v1041 = vand.u32 %v510, 4294901760
    %v1042 = vsub.f32 %v510, %v1041
    %1043 = vmatpush.msra.mxu0 %v1042
    %v1044 = vand.u32 %v508, 4294901760
    %v1045 = vsub.f32 %v508, %v1044
    %1046 = vmatpush.msra.mxu0 %v1045
    %v1047 = vand.u32 %v506, 4294901760
    %v1048 = vsub.f32 %v506, %v1047
    %1049 = vmatpush.msra.mxu0 %v1048
    %v1050 = vand.u32 %v504, 4294901760
    %v1051 = vsub.f32 %v504, %v1050
    %1052 = vmatpush.msra.mxu0 %v1051
    %v1053 = vand.u32 %v502, 4294901760
    %v1054 = vsub.f32 %v502, %v1053
    %1055 = vmatpush.msra.mxu0 %v1054
    %v1056 = vand.u32 %v500, 4294901760
    %v1057 = vsub.f32 %v500, %v1056
    %1058 = vmatpush.msra.mxu0 %v1057
    %v1059 = vand.u32 %v498, 4294901760
    %v1060 = vsub.f32 %v498, %v1059
    %1061 = vmatpush.msra.mxu0 %v1060
    %v1062 = vand.u32 %v496, 4294901760
    %v1063 = vsub.f32 %v496, %v1062
    %1064 = vmatpush.msra.mxu0 %v1063
    %v1065 = vand.u32 %v463, 4294901760
    %v1066 = vsub.f32 %v463, %v1065
    %1067 = vmatmul.f32.gmra.mxu0 %v1066
    %v1068 = vpop.f32.mrf.mxu0
    %v1069 = vadd.f32 %v1015, %v1068
    %1070 = vdwg.mxu0
    %v1071 = vand.u32 %v526, 4294901760
    %1072 = vmatpush.msra.mxu0 %v1071
    %v1073 = vand.u32 %v524, 4294901760
    %1074 = vmatpush.msra.mxu0 %v1073
    %v1075 = vand.u32 %v522, 4294901760
    %1076 = vmatpush.msra.mxu0 %v1075
    %v1077 = vand.u32 %v520, 4294901760
    %1078 = vmatpush.msra.mxu0 %v1077
    %v1079 = vand.u32 %v518, 4294901760
    %1080 = vmatpush.msra.mxu0 %v1079
    %v1081 = vand.u32 %v516, 4294901760
    %1082 = vmatpush.msra.mxu0 %v1081
    %v1083 = vand.u32 %v514, 4294901760
    %1084 = vmatpush.msra.mxu0 %v1083
    %v1085 = vand.u32 %v512, 4294901760
    %1086 = vmatpush.msra.mxu0 %v1085
    %v1087 = vand.u32 %v510, 4294901760
    %1088 = vmatpush.msra.mxu0 %v1087
    %v1089 = vand.u32 %v508, 4294901760
    %1090 = vmatpush.msra.mxu0 %v1089
    %v1091 = vand.u32 %v506, 4294901760
    %1092 = vmatpush.msra.mxu0 %v1091
    %v1093 = vand.u32 %v504, 4294901760
    %1094 = vmatpush.msra.mxu0 %v1093
    %v1095 = vand.u32 %v502, 4294901760
    %1096 = vmatpush.msra.mxu0 %v1095
    %v1097 = vand.u32 %v500, 4294901760
    %1098 = vmatpush.msra.mxu0 %v1097
    %v1099 = vand.u32 %v498, 4294901760
    %1100 = vmatpush.msra.mxu0 %v1099
    %v1101 = vand.u32 %v496, 4294901760
    %1102 = vmatpush.msra.mxu0 %v1101
    %v1103 = vand.u32 %v463, 4294901760
    %v1104 = vsub.f32 %v463, %v1103
    %v1105 = vand.u32 %v1104, 4294901760
    %1106 = vmatmul.f32.gmra.mxu0 %v1105
    %v1107 = vpop.f32.mrf.mxu0
    %v1108 = vadd.f32 %v1069, %v1107
    %1109 = vdwg.mxu0
    %v1110 = vand.u32 %v526, 4294901760
    %v1111 = vsub.f32 %v526, %v1110
    %v1112 = vand.u32 %v1111, 4294901760
    %1113 = vmatpush.msra.mxu0 %v1112
    %v1114 = vand.u32 %v524, 4294901760
    %v1115 = vsub.f32 %v524, %v1114
    %v1116 = vand.u32 %v1115, 4294901760
    %1117 = vmatpush.msra.mxu0 %v1116
    %v1118 = vand.u32 %v522, 4294901760
    %v1119 = vsub.f32 %v522, %v1118
    %v1120 = vand.u32 %v1119, 4294901760
    %1121 = vmatpush.msra.mxu0 %v1120
    %v1122 = vand.u32 %v520, 4294901760
    %v1123 = vsub.f32 %v520, %v1122
    %v1124 = vand.u32 %v1123, 4294901760
    %1125 = vmatpush.msra.mxu0 %v1124
    %v1126 = vand.u32 %v518, 4294901760
    %v1127 = vsub.f32 %v518, %v1126
    %v1128 = vand.u32 %v1127, 4294901760
    %1129 = vmatpush.msra.mxu0 %v1128
    %v1130 = vand.u32 %v516, 4294901760
    %v1131 = vsub.f32 %v516, %v1130
    %v1132 = vand.u32 %v1131, 4294901760
    %1133 = vmatpush.msra.mxu0 %v1132
    %v1134 = vand.u32 %v514, 4294901760
    %v1135 = vsub.f32 %v514, %v1134
    %v1136 = vand.u32 %v1135, 4294901760
    %1137 = vmatpush.msra.mxu0 %v1136
    %v1138 = vand.u32 %v512, 4294901760
    %v1139 = vsub.f32 %v512, %v1138
    %v1140 = vand.u32 %v1139, 4294901760
    %1141 = vmatpush.msra.mxu0 %v1140
    %v1142 = vand.u32 %v510, 4294901760
    %v1143 = vsub.f32 %v510, %v1142
    %v1144 = vand.u32 %v1143, 4294901760
    %1145 = vmatpush.msra.mxu0 %v1144
    %v1146 = vand.u32 %v508, 4294901760
    %v1147 = vsub.f32 %v508, %v1146
    %v1148 = vand.u32 %v1147, 4294901760
    %1149 = vmatpush.msra.mxu0 %v1148
    %v1150 = vand.u32 %v506, 4294901760
    %v1151 = vsub.f32 %v506, %v1150
    %v1152 = vand.u32 %v1151, 4294901760
    %1153 = vmatpush.msra.mxu0 %v1152
    %v1154 = vand.u32 %v504, 4294901760
    %v1155 = vsub.f32 %v504, %v1154
    %v1156 = vand.u32 %v1155, 4294901760
    %1157 = vmatpush.msra.mxu0 %v1156
    %v1158 = vand.u32 %v502, 4294901760
    %v1159 = vsub.f32 %v502, %v1158
    %v1160 = vand.u32 %v1159, 4294901760
    %1161 = vmatpush.msra.mxu0 %v1160
    %v1162 = vand.u32 %v500, 4294901760
    %v1163 = vsub.f32 %v500, %v1162
    %v1164 = vand.u32 %v1163, 4294901760
    %1165 = vmatpush.msra.mxu0 %v1164
    %v1166 = vand.u32 %v498, 4294901760
    %v1167 = vsub.f32 %v498, %v1166
    %v1168 = vand.u32 %v1167, 4294901760
    %1169 = vmatpush.msra.mxu0 %v1168
    %v1170 = vand.u32 %v496, 4294901760
    %v1171 = vsub.f32 %v496, %v1170
    %v1172 = vand.u32 %v1171, 4294901760
    %1173 = vmatpush.msra.mxu0 %v1172
    %v1174 = vand.u32 %v463, 4294901760
    %1175 = vmatmul.f32.gmra.mxu0 %v1174
    %v1176 = vpop.f32.mrf.mxu0
    %v1177 = vadd.f32 %v1108, %v1176
    %1178 = vdwg.mxu0
    %v1179 = vand.u32 %v526, 4294901760
    %1180 = vmatpush.msra.mxu0 %v1179
    %v1181 = vand.u32 %v524, 4294901760
    %1182 = vmatpush.msra.mxu0 %v1181
    %v1183 = vand.u32 %v522, 4294901760
    %1184 = vmatpush.msra.mxu0 %v1183
    %v1185 = vand.u32 %v520, 4294901760
    %1186 = vmatpush.msra.mxu0 %v1185
    %v1187 = vand.u32 %v518, 4294901760
    %1188 = vmatpush.msra.mxu0 %v1187
    %v1189 = vand.u32 %v516, 4294901760
    %1190 = vmatpush.msra.mxu0 %v1189
    %v1191 = vand.u32 %v514, 4294901760
    %1192 = vmatpush.msra.mxu0 %v1191
    %v1193 = vand.u32 %v512, 4294901760
    %1194 = vmatpush.msra.mxu0 %v1193
    %v1195 = vand.u32 %v510, 4294901760
    %1196 = vmatpush.msra.mxu0 %v1195
    %v1197 = vand.u32 %v508, 4294901760
    %1198 = vmatpush.msra.mxu0 %v1197
    %v1199 = vand.u32 %v506, 4294901760
    %1200 = vmatpush.msra.mxu0 %v1199
    %v1201 = vand.u32 %v504, 4294901760
    %1202 = vmatpush.msra.mxu0 %v1201
    %v1203 = vand.u32 %v502, 4294901760
    %1204 = vmatpush.msra.mxu0 %v1203
    %v1205 = vand.u32 %v500, 4294901760
    %1206 = vmatpush.msra.mxu0 %v1205
    %v1207 = vand.u32 %v498, 4294901760
    %1208 = vmatpush.msra.mxu0 %v1207
    %v1209 = vand.u32 %v496, 4294901760
    %1210 = vmatpush.msra.mxu0 %v1209
    %v1211 = vand.u32 %v463, 4294901760
    %1212 = vmatmul.f32.gmra.mxu0 %v1211
    %v1213 = vpop.f32.mrf.mxu0
    %v1214 = vadd.f32 %v1177, %v1213
    %1215 = vdwg.mxu0
    %v1216 = vand.u32 %v495, 4294901760
    %1217 = vmatpush.msra.mxu0 %v1216
    %v1218 = vand.u32 %v493, 4294901760
    %1219 = vmatpush.msra.mxu0 %v1218
    %v1220 = vand.u32 %v491, 4294901760
    %1221 = vmatpush.msra.mxu0 %v1220
    %v1222 = vand.u32 %v489, 4294901760
    %1223 = vmatpush.msra.mxu0 %v1222
    %v1224 = vand.u32 %v487, 4294901760
    %1225 = vmatpush.msra.mxu0 %v1224
    %v1226 = vand.u32 %v485, 4294901760
    %1227 = vmatpush.msra.mxu0 %v1226
    %v1228 = vand.u32 %v483, 4294901760
    %1229 = vmatpush.msra.mxu0 %v1228
    %v1230 = vand.u32 %v481, 4294901760
    %1231 = vmatpush.msra.mxu0 %v1230
    %v1232 = vand.u32 %v479, 4294901760
    %1233 = vmatpush.msra.mxu0 %v1232
    %v1234 = vand.u32 %v477, 4294901760
    %1235 = vmatpush.msra.mxu0 %v1234
    %v1236 = vand.u32 %v475, 4294901760
    %1237 = vmatpush.msra.mxu0 %v1236
    %v1238 = vand.u32 %v473, 4294901760
    %1239 = vmatpush.msra.mxu0 %v1238
    %v1240 = vand.u32 %v471, 4294901760
    %1241 = vmatpush.msra.mxu0 %v1240
    %v1242 = vand.u32 %v469, 4294901760
    %1243 = vmatpush.msra.mxu0 %v1242
    %v1244 = vand.u32 %v467, 4294901760
    %1245 = vmatpush.msra.mxu0 %v1244
    %v1246 = vand.u32 %v465, 4294901760
    %1247 = vmatpush.msra.mxu0 %v1246
    %v1248 = vand.u32 %v462, 4294901760
    %v1249 = vsub.f32 %v462, %v1248
    %v1250 = vand.u32 %v1249, 4294901760
    %v1251 = vsub.f32 %v1249, %v1250
    %v1252 = vand.u32 %v1251, 4294901760
    %1253 = vmatmul.f32.gmra.mxu0 %v1252
    %v1254 = vpop.f32.mrf.mxu0
    %v1255 = vadd.f32 %v531, %v1254
    %1256 = vdwg.mxu0
    %v1257 = vand.u32 %v495, 4294901760
    %v1258 = vsub.f32 %v495, %v1257
    %v1259 = vand.u32 %v1258, 4294901760
    %v1260 = vsub.f32 %v1258, %v1259
    %v1261 = vand.u32 %v1260, 4294901760
    %1262 = vmatpush.msra.mxu0 %v1261
    %v1263 = vand.u32 %v493, 4294901760
    %v1264 = vsub.f32 %v493, %v1263
    %v1265 = vand.u32 %v1264, 4294901760
    %v1266 = vsub.f32 %v1264, %v1265
    %v1267 = vand.u32 %v1266, 4294901760
    %1268 = vmatpush.msra.mxu0 %v1267
    %v1269 = vand.u32 %v491, 4294901760
    %v1270 = vsub.f32 %v491, %v1269
    %v1271 = vand.u32 %v1270, 4294901760
    %v1272 = vsub.f32 %v1270, %v1271
    %v1273 = vand.u32 %v1272, 4294901760
    %1274 = vmatpush.msra.mxu0 %v1273
    %v1275 = vand.u32 %v489, 4294901760
    %v1276 = vsub.f32 %v489, %v1275
    %v1277 = vand.u32 %v1276, 4294901760
    %v1278 = vsub.f32 %v1276, %v1277
    %v1279 = vand.u32 %v1278, 4294901760
    %1280 = vmatpush.msra.mxu0 %v1279
    %v1281 = vand.u32 %v487, 4294901760
    %v1282 = vsub.f32 %v487, %v1281
    %v1283 = vand.u32 %v1282, 4294901760
    %v1284 = vsub.f32 %v1282, %v1283
    %v1285 = vand.u32 %v1284, 4294901760
    %1286 = vmatpush.msra.mxu0 %v1285
    %v1287 = vand.u32 %v485, 4294901760
    %v1288 = vsub.f32 %v485, %v1287
    %v1289 = vand.u32 %v1288, 4294901760
    %v1290 = vsub.f32 %v1288, %v1289
    %v1291 = vand.u32 %v1290, 4294901760
    %1292 = vmatpush.msra.mxu0 %v1291
    %v1293 = vand.u32 %v483, 4294901760
    %v1294 = vsub.f32 %v483, %v1293
    %v1295 = vand.u32 %v1294, 4294901760
    %v1296 = vsub.f32 %v1294, %v1295
    %v1297 = vand.u32 %v1296, 4294901760
    %1298 = vmatpush.msra.mxu0 %v1297
    %v1299 = vand.u32 %v481, 4294901760
    %v1300 = vsub.f32 %v481, %v1299
    %v1301 = vand.u32 %v1300, 4294901760
    %v1302 = vsub.f32 %v1300, %v1301
    %v1303 = vand.u32 %v1302, 4294901760
    %1304 = vmatpush.msra.mxu0 %v1303
    %v1305 = vand.u32 %v479, 4294901760
    %v1306 = vsub.f32 %v479, %v1305
    %v1307 = vand.u32 %v1306, 4294901760
    %v1308 = vsub.f32 %v1306, %v1307
    %v1309 = vand.u32 %v1308, 4294901760
    %1310 = vmatpush.msra.mxu0 %v1309
    %v1311 = vand.u32 %v477, 4294901760
    %v1312 = vsub.f32 %v477, %v1311
    %v1313 = vand.u32 %v1312, 4294901760
    %v1314 = vsub.f32 %v1312, %v1313
    %v1315 = vand.u32 %v1314, 4294901760
    %1316 = vmatpush.msra.mxu0 %v1315
    %v1317 = vand.u32 %v475, 4294901760
    %v1318 = vsub.f32 %v475, %v1317
    %v1319 = vand.u32 %v1318, 4294901760
    %v1320 = vsub.f32 %v1318, %v1319
    %v1321 = vand.u32 %v1320, 4294901760
    %1322 = vmatpush.msra.mxu0 %v1321
    %v1323 = vand.u32 %v473, 4294901760
    %v1324 = vsub.f32 %v473, %v1323
    %v1325 = vand.u32 %v1324, 4294901760
    %v1326 = vsub.f32 %v1324, %v1325
    %v1327 = vand.u32 %v1326, 4294901760
    %1328 = vmatpush.msra.mxu0 %v1327
    %v1329 = vand.u32 %v471, 4294901760
    %v1330 = vsub.f32 %v471, %v1329
    %v1331 = vand.u32 %v1330, 4294901760
    %v1332 = vsub.f32 %v1330, %v1331
    %v1333 = vand.u32 %v1332, 4294901760
    %1334 = vmatpush.msra.mxu0 %v1333
    %v1335 = vand.u32 %v469, 4294901760
    %v1336 = vsub.f32 %v469, %v1335
    %v1337 = vand.u32 %v1336, 4294901760
    %v1338 = vsub.f32 %v1336, %v1337
    %v1339 = vand.u32 %v1338, 4294901760
    %1340 = vmatpush.msra.mxu0 %v1339
    %v1341 = vand.u32 %v467, 4294901760
    %v1342 = vsub.f32 %v467, %v1341
    %v1343 = vand.u32 %v1342, 4294901760
    %v1344 = vsub.f32 %v1342, %v1343
    %v1345 = vand.u32 %v1344, 4294901760
    %1346 = vmatpush.msra.mxu0 %v1345
    %v1347 = vand.u32 %v465, 4294901760
    %v1348 = vsub.f32 %v465, %v1347
    %v1349 = vand.u32 %v1348, 4294901760
    %v1350 = vsub.f32 %v1348, %v1349
    %v1351 = vand.u32 %v1350, 4294901760
    %1352 = vmatpush.msra.mxu0 %v1351
    %v1353 = vand.u32 %v462, 4294901760
    %1354 = vmatmul.f32.gmra.mxu0 %v1353
    %v1355 = vpop.f32.mrf.mxu0
    %v1356 = vadd.f32 %v1255, %v1355
    %1357 = vdwg.mxu0
    %v1358 = vand.u32 %v495, 4294901760
    %v1359 = vsub.f32 %v495, %v1358
    %1360 = vmatpush.msra.mxu0 %v1359
    %v1361 = vand.u32 %v493, 4294901760
    %v1362 = vsub.f32 %v493, %v1361
    %1363 = vmatpush.msra.mxu0 %v1362
    %v1364 = vand.u32 %v491, 4294901760
    %v1365 = vsub.f32 %v491, %v1364
    %1366 = vmatpush.msra.mxu0 %v1365
    %v1367 = vand.u32 %v489, 4294901760
    %v1368 = vsub.f32 %v489, %v1367
    %1369 = vmatpush.msra.mxu0 %v1368
    %v1370 = vand.u32 %v487, 4294901760
    %v1371 = vsub.f32 %v487, %v1370
    %1372 = vmatpush.msra.mxu0 %v1371
    %v1373 = vand.u32 %v485, 4294901760
    %v1374 = vsub.f32 %v485, %v1373
    %1375 = vmatpush.msra.mxu0 %v1374
    %v1376 = vand.u32 %v483, 4294901760
    %v1377 = vsub.f32 %v483, %v1376
    %1378 = vmatpush.msra.mxu0 %v1377
    %v1379 = vand.u32 %v481, 4294901760
    %v1380 = vsub.f32 %v481, %v1379
    %1381 = vmatpush.msra.mxu0 %v1380
    %v1382 = vand.u32 %v479, 4294901760
    %v1383 = vsub.f32 %v479, %v1382
    %1384 = vmatpush.msra.mxu0 %v1383
    %v1385 = vand.u32 %v477, 4294901760
    %v1386 = vsub.f32 %v477, %v1385
    %1387 = vmatpush.msra.mxu0 %v1386
    %v1388 = vand.u32 %v475, 4294901760
    %v1389 = vsub.f32 %v475, %v1388
    %1390 = vmatpush.msra.mxu0 %v1389
    %v1391 = vand.u32 %v473, 4294901760
    %v1392 = vsub.f32 %v473, %v1391
    %1393 = vmatpush.msra.mxu0 %v1392
    %v1394 = vand.u32 %v471, 4294901760
    %v1395 = vsub.f32 %v471, %v1394
    %1396 = vmatpush.msra.mxu0 %v1395
    %v1397 = vand.u32 %v469, 4294901760
    %v1398 = vsub.f32 %v469, %v1397
    %1399 = vmatpush.msra.mxu0 %v1398
    %v1400 = vand.u32 %v467, 4294901760
    %v1401 = vsub.f32 %v467, %v1400
    %1402 = vmatpush.msra.mxu0 %v1401
    %v1403 = vand.u32 %v465, 4294901760
    %v1404 = vsub.f32 %v465, %v1403
    %1405 = vmatpush.msra.mxu0 %v1404
    %v1406 = vand.u32 %v462, 4294901760
    %v1407 = vsub.f32 %v462, %v1406
    %1408 = vmatmul.f32.gmra.mxu0 %v1407
    %v1409 = vpop.f32.mrf.mxu0
    %v1410 = vadd.f32 %v1356, %v1409
    %1411 = vdwg.mxu0
    %v1412 = vand.u32 %v495, 4294901760
    %1413 = vmatpush.msra.mxu0 %v1412
    %v1414 = vand.u32 %v493, 4294901760
    %1415 = vmatpush.msra.mxu0 %v1414
    %v1416 = vand.u32 %v491, 4294901760
    %1417 = vmatpush.msra.mxu0 %v1416
    %v1418 = vand.u32 %v489, 4294901760
    %1419 = vmatpush.msra.mxu0 %v1418
    %v1420 = vand.u32 %v487, 4294901760
    %1421 = vmatpush.msra.mxu0 %v1420
    %v1422 = vand.u32 %v485, 4294901760
    %1423 = vmatpush.msra.mxu0 %v1422
    %v1424 = vand.u32 %v483, 4294901760
    %1425 = vmatpush.msra.mxu0 %v1424
    %v1426 = vand.u32 %v481, 4294901760
    %1427 = vmatpush.msra.mxu0 %v1426
    %v1428 = vand.u32 %v479, 4294901760
    %1429 = vmatpush.msra.mxu0 %v1428
    %v1430 = vand.u32 %v477, 4294901760
    %1431 = vmatpush.msra.mxu0 %v1430
    %v1432 = vand.u32 %v475, 4294901760
    %1433 = vmatpush.msra.mxu0 %v1432
    %v1434 = vand.u32 %v473, 4294901760
    %1435 = vmatpush.msra.mxu0 %v1434
    %v1436 = vand.u32 %v471, 4294901760
    %1437 = vmatpush.msra.mxu0 %v1436
    %v1438 = vand.u32 %v469, 4294901760
    %1439 = vmatpush.msra.mxu0 %v1438
    %v1440 = vand.u32 %v467, 4294901760
    %1441 = vmatpush.msra.mxu0 %v1440
    %v1442 = vand.u32 %v465, 4294901760
    %1443 = vmatpush.msra.mxu0 %v1442
    %v1444 = vand.u32 %v462, 4294901760
    %v1445 = vsub.f32 %v462, %v1444
    %v1446 = vand.u32 %v1445, 4294901760
    %1447 = vmatmul.f32.gmra.mxu0 %v1446
    %v1448 = vpop.f32.mrf.mxu0
    %v1449 = vadd.f32 %v1410, %v1448
    %1450 = vdwg.mxu0
    %v1451 = vand.u32 %v495, 4294901760
    %v1452 = vsub.f32 %v495, %v1451
    %v1453 = vand.u32 %v1452, 4294901760
    %1454 = vmatpush.msra.mxu0 %v1453
    %v1455 = vand.u32 %v493, 4294901760
    %v1456 = vsub.f32 %v493, %v1455
    %v1457 = vand.u32 %v1456, 4294901760
    %1458 = vmatpush.msra.mxu0 %v1457
    %v1459 = vand.u32 %v491, 4294901760
    %v1460 = vsub.f32 %v491, %v1459
    %v1461 = vand.u32 %v1460, 4294901760
    %1462 = vmatpush.msra.mxu0 %v1461
    %v1463 = vand.u32 %v489, 4294901760
    %v1464 = vsub.f32 %v489, %v1463
    %v1465 = vand.u32 %v1464, 4294901760
    %1466 = vmatpush.msra.mxu0 %v1465
    %v1467 = vand.u32 %v487, 4294901760
    %v1468 = vsub.f32 %v487, %v1467
    %v1469 = vand.u32 %v1468, 4294901760
    %1470 = vmatpush.msra.mxu0 %v1469
    %v1471 = vand.u32 %v485, 4294901760
    %v1472 = vsub.f32 %v485, %v1471
    %v1473 = vand.u32 %v1472, 4294901760
    %1474 = vmatpush.msra.mxu0 %v1473
    %v1475 = vand.u32 %v483, 4294901760
    %v1476 = vsub.f32 %v483, %v1475
    %v1477 = vand.u32 %v1476, 4294901760
    %1478 = vmatpush.msra.mxu0 %v1477
    %v1479 = vand.u32 %v481, 4294901760
    %v1480 = vsub.f32 %v481, %v1479
    %v1481 = vand.u32 %v1480, 4294901760
    %1482 = vmatpush.msra.mxu0 %v1481
    %v1483 = vand.u32 %v479, 4294901760
    %v1484 = vsub.f32 %v479, %v1483
    %v1485 = vand.u32 %v1484, 4294901760
    %1486 = vmatpush.msra.mxu0 %v1485
    %v1487 = vand.u32 %v477, 4294901760
    %v1488 = vsub.f32 %v477, %v1487
    %v1489 = vand.u32 %v1488, 4294901760
    %1490 = vmatpush.msra.mxu0 %v1489
    %v1491 = vand.u32 %v475, 4294901760
    %v1492 = vsub.f32 %v475, %v1491
    %v1493 = vand.u32 %v1492, 4294901760
    %1494 = vmatpush.msra.mxu0 %v1493
    %v1495 = vand.u32 %v473, 4294901760
    %v1496 = vsub.f32 %v473, %v1495
    %v1497 = vand.u32 %v1496, 4294901760
    %1498 = vmatpush.msra.mxu0 %v1497
    %v1499 = vand.u32 %v471, 4294901760
    %v1500 = vsub.f32 %v471, %v1499
    %v1501 = vand.u32 %v1500, 4294901760
    %1502 = vmatpush.msra.mxu0 %v1501
    %v1503 = vand.u32 %v469, 4294901760
    %v1504 = vsub.f32 %v469, %v1503
    %v1505 = vand.u32 %v1504, 4294901760
    %1506 = vmatpush.msra.mxu0 %v1505
    %v1507 = vand.u32 %v467, 4294901760
    %v1508 = vsub.f32 %v467, %v1507
    %v1509 = vand.u32 %v1508, 4294901760
    %1510 = vmatpush.msra.mxu0 %v1509
    %v1511 = vand.u32 %v465, 4294901760
    %v1512 = vsub.f32 %v465, %v1511
    %v1513 = vand.u32 %v1512, 4294901760
    %1514 = vmatpush.msra.mxu0 %v1513
    %v1515 = vand.u32 %v462, 4294901760
    %1516 = vmatmul.f32.gmra.mxu0 %v1515
    %v1517 = vpop.f32.mrf.mxu0
    %v1518 = vadd.f32 %v1449, %v1517
    %1519 = vdwg.mxu0
    %v1520 = vand.u32 %v495, 4294901760
    %1521 = vmatpush.msra.mxu0 %v1520
    %v1522 = vand.u32 %v493, 4294901760
    %1523 = vmatpush.msra.mxu0 %v1522
    %v1524 = vand.u32 %v491, 4294901760
    %1525 = vmatpush.msra.mxu0 %v1524
    %v1526 = vand.u32 %v489, 4294901760
    %1527 = vmatpush.msra.mxu0 %v1526
    %v1528 = vand.u32 %v487, 4294901760
    %1529 = vmatpush.msra.mxu0 %v1528
    %v1530 = vand.u32 %v485, 4294901760
    %1531 = vmatpush.msra.mxu0 %v1530
    %v1532 = vand.u32 %v483, 4294901760
    %1533 = vmatpush.msra.mxu0 %v1532
    %v1534 = vand.u32 %v481, 4294901760
    %1535 = vmatpush.msra.mxu0 %v1534
    %v1536 = vand.u32 %v479, 4294901760
    %1537 = vmatpush.msra.mxu0 %v1536
    %v1538 = vand.u32 %v477, 4294901760
    %1539 = vmatpush.msra.mxu0 %v1538
    %v1540 = vand.u32 %v475, 4294901760
    %1541 = vmatpush.msra.mxu0 %v1540
    %v1542 = vand.u32 %v473, 4294901760
    %1543 = vmatpush.msra.mxu0 %v1542
    %v1544 = vand.u32 %v471, 4294901760
    %1545 = vmatpush.msra.mxu0 %v1544
    %v1546 = vand.u32 %v469, 4294901760
    %1547 = vmatpush.msra.mxu0 %v1546
    %v1548 = vand.u32 %v467, 4294901760
    %1549 = vmatpush.msra.mxu0 %v1548
    %v1550 = vand.u32 %v465, 4294901760
    %1551 = vmatpush.msra.mxu0 %v1550
    %v1552 = vand.u32 %v462, 4294901760
    %1553 = vmatmul.f32.gmra.mxu0 %v1552
    %v1554 = vpop.f32.mrf.mxu0
    %v1555 = vadd.f32 %v1518, %v1554
    %1556 = vdwg.mxu0
    %v1557 = vand.u32 %v527, 4294901760
    %1558 = vmatpush.msra.mxu0 %v1557
    %v1559 = vand.u32 %v525, 4294901760
    %1560 = vmatpush.msra.mxu0 %v1559
    %v1561 = vand.u32 %v523, 4294901760
    %1562 = vmatpush.msra.mxu0 %v1561
    %v1563 = vand.u32 %v521, 4294901760
    %1564 = vmatpush.msra.mxu0 %v1563
    %v1565 = vand.u32 %v519, 4294901760
    %1566 = vmatpush.msra.mxu0 %v1565
    %v1567 = vand.u32 %v517, 4294901760
    %1568 = vmatpush.msra.mxu0 %v1567
    %v1569 = vand.u32 %v515, 4294901760
    %1570 = vmatpush.msra.mxu0 %v1569
    %v1571 = vand.u32 %v513, 4294901760
    %1572 = vmatpush.msra.mxu0 %v1571
    %v1573 = vand.u32 %v511, 4294901760
    %1574 = vmatpush.msra.mxu0 %v1573
    %v1575 = vand.u32 %v509, 4294901760
    %1576 = vmatpush.msra.mxu0 %v1575
    %v1577 = vand.u32 %v507, 4294901760
    %1578 = vmatpush.msra.mxu0 %v1577
    %v1579 = vand.u32 %v505, 4294901760
    %1580 = vmatpush.msra.mxu0 %v1579
    %v1581 = vand.u32 %v503, 4294901760
    %1582 = vmatpush.msra.mxu0 %v1581
    %v1583 = vand.u32 %v501, 4294901760
    %1584 = vmatpush.msra.mxu0 %v1583
    %v1585 = vand.u32 %v499, 4294901760
    %1586 = vmatpush.msra.mxu0 %v1585
    %v1587 = vand.u32 %v497, 4294901760
    %1588 = vmatpush.msra.mxu0 %v1587
    %v1589 = vand.u32 %v463, 4294901760
    %v1590 = vsub.f32 %v463, %v1589
    %v1591 = vand.u32 %v1590, 4294901760
    %v1592 = vsub.f32 %v1590, %v1591
    %v1593 = vand.u32 %v1592, 4294901760
    %1594 = vmatmul.f32.gmra.mxu0 %v1593
    %v1595 = vpop.f32.mrf.mxu0
    %v1596 = vadd.f32 %v1555, %v1595
    %1597 = vdwg.mxu0
    %v1598 = vand.u32 %v527, 4294901760
    %v1599 = vsub.f32 %v527, %v1598
    %v1600 = vand.u32 %v1599, 4294901760
    %v1601 = vsub.f32 %v1599, %v1600
    %v1602 = vand.u32 %v1601, 4294901760
    %1603 = vmatpush.msra.mxu0 %v1602
    %v1604 = vand.u32 %v525, 4294901760
    %v1605 = vsub.f32 %v525, %v1604
    %v1606 = vand.u32 %v1605, 4294901760
    %v1607 = vsub.f32 %v1605, %v1606
    %v1608 = vand.u32 %v1607, 4294901760
    %1609 = vmatpush.msra.mxu0 %v1608
    %v1610 = vand.u32 %v523, 4294901760
    %v1611 = vsub.f32 %v523, %v1610
    %v1612 = vand.u32 %v1611, 4294901760
    %v1613 = vsub.f32 %v1611, %v1612
    %v1614 = vand.u32 %v1613, 4294901760
    %1615 = vmatpush.msra.mxu0 %v1614
    %v1616 = vand.u32 %v521, 4294901760
    %v1617 = vsub.f32 %v521, %v1616
    %v1618 = vand.u32 %v1617, 4294901760
    %v1619 = vsub.f32 %v1617, %v1618
    %v1620 = vand.u32 %v1619, 4294901760
    %1621 = vmatpush.msra.mxu0 %v1620
    %v1622 = vand.u32 %v519, 4294901760
    %v1623 = vsub.f32 %v519, %v1622
    %v1624 = vand.u32 %v1623, 4294901760
    %v1625 = vsub.f32 %v1623, %v1624
    %v1626 = vand.u32 %v1625, 4294901760
    %1627 = vmatpush.msra.mxu0 %v1626
    %v1628 = vand.u32 %v517, 4294901760
    %v1629 = vsub.f32 %v517, %v1628
    %v1630 = vand.u32 %v1629, 4294901760
    %v1631 = vsub.f32 %v1629, %v1630
    %v1632 = vand.u32 %v1631, 4294901760
    %1633 = vmatpush.msra.mxu0 %v1632
    %v1634 = vand.u32 %v515, 4294901760
    %v1635 = vsub.f32 %v515, %v1634
    %v1636 = vand.u32 %v1635, 4294901760
    %v1637 = vsub.f32 %v1635, %v1636
    %v1638 = vand.u32 %v1637, 4294901760
    %1639 = vmatpush.msra.mxu0 %v1638
    %v1640 = vand.u32 %v513, 4294901760
    %v1641 = vsub.f32 %v513, %v1640
    %v1642 = vand.u32 %v1641, 4294901760
    %v1643 = vsub.f32 %v1641, %v1642
    %v1644 = vand.u32 %v1643, 4294901760
    %1645 = vmatpush.msra.mxu0 %v1644
    %v1646 = vand.u32 %v511, 4294901760
    %v1647 = vsub.f32 %v511, %v1646
    %v1648 = vand.u32 %v1647, 4294901760
    %v1649 = vsub.f32 %v1647, %v1648
    %v1650 = vand.u32 %v1649, 4294901760
    %1651 = vmatpush.msra.mxu0 %v1650
    %v1652 = vand.u32 %v509, 4294901760
    %v1653 = vsub.f32 %v509, %v1652
    %v1654 = vand.u32 %v1653, 4294901760
    %v1655 = vsub.f32 %v1653, %v1654
    %v1656 = vand.u32 %v1655, 4294901760
    %1657 = vmatpush.msra.mxu0 %v1656
    %v1658 = vand.u32 %v507, 4294901760
    %v1659 = vsub.f32 %v507, %v1658
    %v1660 = vand.u32 %v1659, 4294901760
    %v1661 = vsub.f32 %v1659, %v1660
    %v1662 = vand.u32 %v1661, 4294901760
    %1663 = vmatpush.msra.mxu0 %v1662
    %v1664 = vand.u32 %v505, 4294901760
    %v1665 = vsub.f32 %v505, %v1664
    %v1666 = vand.u32 %v1665, 4294901760
    %v1667 = vsub.f32 %v1665, %v1666
    %v1668 = vand.u32 %v1667, 4294901760
    %1669 = vmatpush.msra.mxu0 %v1668
    %v1670 = vand.u32 %v503, 4294901760
    %v1671 = vsub.f32 %v503, %v1670
    %v1672 = vand.u32 %v1671, 4294901760
    %v1673 = vsub.f32 %v1671, %v1672
    %v1674 = vand.u32 %v1673, 4294901760
    %1675 = vmatpush.msra.mxu0 %v1674
    %v1676 = vand.u32 %v501, 4294901760
    %v1677 = vsub.f32 %v501, %v1676
    %v1678 = vand.u32 %v1677, 4294901760
    %v1679 = vsub.f32 %v1677, %v1678
    %v1680 = vand.u32 %v1679, 4294901760
    %1681 = vmatpush.msra.mxu0 %v1680
    %v1682 = vand.u32 %v499, 4294901760
    %v1683 = vsub.f32 %v499, %v1682
    %v1684 = vand.u32 %v1683, 4294901760
    %v1685 = vsub.f32 %v1683, %v1684
    %v1686 = vand.u32 %v1685, 4294901760
    %1687 = vmatpush.msra.mxu0 %v1686
    %v1688 = vand.u32 %v497, 4294901760
    %v1689 = vsub.f32 %v497, %v1688
    %v1690 = vand.u32 %v1689, 4294901760
    %v1691 = vsub.f32 %v1689, %v1690
    %v1692 = vand.u32 %v1691, 4294901760
    %1693 = vmatpush.msra.mxu0 %v1692
    %v1694 = vand.u32 %v463, 4294901760
    %1695 = vmatmul.f32.gmra.mxu0 %v1694
    %v1696 = vpop.f32.mrf.mxu0
    %v1697 = vadd.f32 %v1596, %v1696
    %1698 = vdwg.mxu0
    %v1699 = vand.u32 %v527, 4294901760
    %v1700 = vsub.f32 %v527, %v1699
    %1701 = vmatpush.msra.mxu0 %v1700
    %v1702 = vand.u32 %v525, 4294901760
    %v1703 = vsub.f32 %v525, %v1702
    %1704 = vmatpush.msra.mxu0 %v1703
    %v1705 = vand.u32 %v523, 4294901760
    %v1706 = vsub.f32 %v523, %v1705
    %1707 = vmatpush.msra.mxu0 %v1706
    %v1708 = vand.u32 %v521, 4294901760
    %v1709 = vsub.f32 %v521, %v1708
    %1710 = vmatpush.msra.mxu0 %v1709
    %v1711 = vand.u32 %v519, 4294901760
    %v1712 = vsub.f32 %v519, %v1711
    %1713 = vmatpush.msra.mxu0 %v1712
    %v1714 = vand.u32 %v517, 4294901760
    %v1715 = vsub.f32 %v517, %v1714
    %1716 = vmatpush.msra.mxu0 %v1715
    %v1717 = vand.u32 %v515, 4294901760
    %v1718 = vsub.f32 %v515, %v1717
    %1719 = vmatpush.msra.mxu0 %v1718
    %v1720 = vand.u32 %v513, 4294901760
    %v1721 = vsub.f32 %v513, %v1720
    %1722 = vmatpush.msra.mxu0 %v1721
    %v1723 = vand.u32 %v511, 4294901760
    %v1724 = vsub.f32 %v511, %v1723
    %1725 = vmatpush.msra.mxu0 %v1724
    %v1726 = vand.u32 %v509, 4294901760
    %v1727 = vsub.f32 %v509, %v1726
    %1728 = vmatpush.msra.mxu0 %v1727
    %v1729 = vand.u32 %v507, 4294901760
    %v1730 = vsub.f32 %v507, %v1729
    %1731 = vmatpush.msra.mxu0 %v1730
    %v1732 = vand.u32 %v505, 4294901760
    %v1733 = vsub.f32 %v505, %v1732
    %1734 = vmatpush.msra.mxu0 %v1733
    %v1735 = vand.u32 %v503, 4294901760
    %v1736 = vsub.f32 %v503, %v1735
    %1737 = vmatpush.msra.mxu0 %v1736
    %v1738 = vand.u32 %v501, 4294901760
    %v1739 = vsub.f32 %v501, %v1738
    %1740 = vmatpush.msra.mxu0 %v1739
    %v1741 = vand.u32 %v499, 4294901760
    %v1742 = vsub.f32 %v499, %v1741
    %1743 = vmatpush.msra.mxu0 %v1742
    %v1744 = vand.u32 %v497, 4294901760
    %v1745 = vsub.f32 %v497, %v1744
    %1746 = vmatpush.msra.mxu0 %v1745
    %v1747 = vand.u32 %v463, 4294901760
    %v1748 = vsub.f32 %v463, %v1747
    %1749 = vmatmul.f32.gmra.mxu0 %v1748
    %v1750 = vpop.f32.mrf.mxu0
    %v1751 = vadd.f32 %v1697, %v1750
    %1752 = vdwg.mxu0
    %v1753 = vand.u32 %v527, 4294901760
    %1754 = vmatpush.msra.mxu0 %v1753
    %v1755 = vand.u32 %v525, 4294901760
    %1756 = vmatpush.msra.mxu0 %v1755
    %v1757 = vand.u32 %v523, 4294901760
    %1758 = vmatpush.msra.mxu0 %v1757
    %v1759 = vand.u32 %v521, 4294901760
    %1760 = vmatpush.msra.mxu0 %v1759
    %v1761 = vand.u32 %v519, 4294901760
    %1762 = vmatpush.msra.mxu0 %v1761
    %v1763 = vand.u32 %v517, 4294901760
    %1764 = vmatpush.msra.mxu0 %v1763
    %v1765 = vand.u32 %v515, 4294901760
    %1766 = vmatpush.msra.mxu0 %v1765
    %v1767 = vand.u32 %v513, 4294901760
    %1768 = vmatpush.msra.mxu0 %v1767
    %v1769 = vand.u32 %v511, 4294901760
    %1770 = vmatpush.msra.mxu0 %v1769
    %v1771 = vand.u32 %v509, 4294901760
    %1772 = vmatpush.msra.mxu0 %v1771
    %v1773 = vand.u32 %v507, 4294901760
    %1774 = vmatpush.msra.mxu0 %v1773
    %v1775 = vand.u32 %v505, 4294901760
    %1776 = vmatpush.msra.mxu0 %v1775
    %v1777 = vand.u32 %v503, 4294901760
    %1778 = vmatpush.msra.mxu0 %v1777
    %v1779 = vand.u32 %v501, 4294901760
    %1780 = vmatpush.msra.mxu0 %v1779
    %v1781 = vand.u32 %v499, 4294901760
    %1782 = vmatpush.msra.mxu0 %v1781
    %v1783 = vand.u32 %v497, 4294901760
    %1784 = vmatpush.msra.mxu0 %v1783
    %v1785 = vand.u32 %v463, 4294901760
    %v1786 = vsub.f32 %v463, %v1785
    %v1787 = vand.u32 %v1786, 4294901760
    %1788 = vmatmul.f32.gmra.mxu0 %v1787
    %v1789 = vpop.f32.mrf.mxu0
    %v1790 = vadd.f32 %v1751, %v1789
    %1791 = vdwg.mxu0
    %v1792 = vand.u32 %v527, 4294901760
    %v1793 = vsub.f32 %v527, %v1792
    %v1794 = vand.u32 %v1793, 4294901760
    %1795 = vmatpush.msra.mxu0 %v1794
    %v1796 = vand.u32 %v525, 4294901760
    %v1797 = vsub.f32 %v525, %v1796
    %v1798 = vand.u32 %v1797, 4294901760
    %1799 = vmatpush.msra.mxu0 %v1798
    %v1800 = vand.u32 %v523, 4294901760
    %v1801 = vsub.f32 %v523, %v1800
    %v1802 = vand.u32 %v1801, 4294901760
    %1803 = vmatpush.msra.mxu0 %v1802
    %v1804 = vand.u32 %v521, 4294901760
    %v1805 = vsub.f32 %v521, %v1804
    %v1806 = vand.u32 %v1805, 4294901760
    %1807 = vmatpush.msra.mxu0 %v1806
    %v1808 = vand.u32 %v519, 4294901760
    %v1809 = vsub.f32 %v519, %v1808
    %v1810 = vand.u32 %v1809, 4294901760
    %1811 = vmatpush.msra.mxu0 %v1810
    %v1812 = vand.u32 %v517, 4294901760
    %v1813 = vsub.f32 %v517, %v1812
    %v1814 = vand.u32 %v1813, 4294901760
    %1815 = vmatpush.msra.mxu0 %v1814
    %v1816 = vand.u32 %v515, 4294901760
    %v1817 = vsub.f32 %v515, %v1816
    %v1818 = vand.u32 %v1817, 4294901760
    %1819 = vmatpush.msra.mxu0 %v1818
    %v1820 = vand.u32 %v513, 4294901760
    %v1821 = vsub.f32 %v513, %v1820
    %v1822 = vand.u32 %v1821, 4294901760
    %1823 = vmatpush.msra.mxu0 %v1822
    %v1824 = vand.u32 %v511, 4294901760
    %v1825 = vsub.f32 %v511, %v1824
    %v1826 = vand.u32 %v1825, 4294901760
    %1827 = vmatpush.msra.mxu0 %v1826
    %v1828 = vand.u32 %v509, 4294901760
    %v1829 = vsub.f32 %v509, %v1828
    %v1830 = vand.u32 %v1829, 4294901760
    %1831 = vmatpush.msra.mxu0 %v1830
    %v1832 = vand.u32 %v507, 4294901760
    %v1833 = vsub.f32 %v507, %v1832
    %v1834 = vand.u32 %v1833, 4294901760
    %1835 = vmatpush.msra.mxu0 %v1834
    %v1836 = vand.u32 %v505, 4294901760
    %v1837 = vsub.f32 %v505, %v1836
    %v1838 = vand.u32 %v1837, 4294901760
    %1839 = vmatpush.msra.mxu0 %v1838
    %v1840 = vand.u32 %v503, 4294901760
    %v1841 = vsub.f32 %v503, %v1840
    %v1842 = vand.u32 %v1841, 4294901760
    %1843 = vmatpush.msra.mxu0 %v1842
    %v1844 = vand.u32 %v501, 4294901760
    %v1845 = vsub.f32 %v501, %v1844
    %v1846 = vand.u32 %v1845, 4294901760
    %1847 = vmatpush.msra.mxu0 %v1846
    %v1848 = vand.u32 %v499, 4294901760
    %v1849 = vsub.f32 %v499, %v1848
    %v1850 = vand.u32 %v1849, 4294901760
    %1851 = vmatpush.msra.mxu0 %v1850
    %v1852 = vand.u32 %v497, 4294901760
    %v1853 = vsub.f32 %v497, %v1852
    %v1854 = vand.u32 %v1853, 4294901760
    %1855 = vmatpush.msra.mxu0 %v1854
    %v1856 = vand.u32 %v463, 4294901760
    %1857 = vmatmul.f32.gmra.mxu0 %v1856
    %v1858 = vpop.f32.mrf.mxu0
    %v1859 = vadd.f32 %v1790, %v1858
    %1860 = vdwg.mxu0
    %v1861 = vand.u32 %v527, 4294901760
    %1862 = vmatpush.msra.mxu0 %v1861
    %v1863 = vand.u32 %v525, 4294901760
    %1864 = vmatpush.msra.mxu0 %v1863
    %v1865 = vand.u32 %v523, 4294901760
    %1866 = vmatpush.msra.mxu0 %v1865
    %v1867 = vand.u32 %v521, 4294901760
    %1868 = vmatpush.msra.mxu0 %v1867
    %v1869 = vand.u32 %v519, 4294901760
    %1870 = vmatpush.msra.mxu0 %v1869
    %v1871 = vand.u32 %v517, 4294901760
    %1872 = vmatpush.msra.mxu0 %v1871
    %v1873 = vand.u32 %v515, 4294901760
    %1874 = vmatpush.msra.mxu0 %v1873
    %v1875 = vand.u32 %v513, 4294901760
    %1876 = vmatpush.msra.mxu0 %v1875
    %v1877 = vand.u32 %v511, 4294901760
    %1878 = vmatpush.msra.mxu0 %v1877
    %v1879 = vand.u32 %v509, 4294901760
    %1880 = vmatpush.msra.mxu0 %v1879
    %v1881 = vand.u32 %v507, 4294901760
    %1882 = vmatpush.msra.mxu0 %v1881
    %v1883 = vand.u32 %v505, 4294901760
    %1884 = vmatpush.msra.mxu0 %v1883
    %v1885 = vand.u32 %v503, 4294901760
    %1886 = vmatpush.msra.mxu0 %v1885
    %v1887 = vand.u32 %v501, 4294901760
    %1888 = vmatpush.msra.mxu0 %v1887
    %v1889 = vand.u32 %v499, 4294901760
    %1890 = vmatpush.msra.mxu0 %v1889
    %v1891 = vand.u32 %v497, 4294901760
    %1892 = vmatpush.msra.mxu0 %v1891
    %v1893 = vand.u32 %v463, 4294901760
    %1894 = vmatmul.f32.gmra.mxu0 %v1893
    %v1895 = vpop.f32.mrf.mxu0
    %v1896 = vadd.f32 %v1859, %v1895
    %1897 = vdwg.mxu0
    %v1898 = vmax.f32 %v1214, 0.0
    %v1899 = vmax.f32 %v1896, 0.0
    %v1900 = vld [vmem:[#allocation6] sm:$0xff]
    %v1901 = vld [vmem:[#allocation6 + $0x8] sm:$0xff]
    %v1902 = vld [vmem:[#allocation6 + $0x10] sm:$0xff]
    %v1903 = vld [vmem:[#allocation6 + $0x18] sm:$0xff]
    %v1904 = vld [vmem:[#allocation6 + $0x20] sm:$0xff]
    %v1905 = vld [vmem:[#allocation6 + $0x28] sm:$0xff]
    %v1906 = vld [vmem:[#allocation6 + $0x30] sm:$0xff]
    %v1907 = vld [vmem:[#allocation6 + $0x38] sm:$0xff]
    %v1908 = vld [vmem:[#allocation6 + $0x40] sm:$0xff]
    %v1909 = vld [vmem:[#allocation6 + $0x48] sm:$0xff]
    %v1910 = vld [vmem:[#allocation6 + $0x50] sm:$0xff]
    %v1911 = vld [vmem:[#allocation6 + $0x58] sm:$0xff]
    %v1912 = vld [vmem:[#allocation6 + $0x60] sm:$0xff]
    %v1913 = vld [vmem:[#allocation6 + $0x68] sm:$0xff]
    %v1914 = vld [vmem:[#allocation6 + $0x70] sm:$0xff]
    %v1915 = vld [vmem:[#allocation6 + $0x78] sm:$0xff]
    %v1916 = vld [vmem:[#allocation6 + $0x80] sm:$0xff]
    %v1917 = vld [vmem:[#allocation6 + $0x88] sm:$0xff]
    %v1918 = vld [vmem:[#allocation6 + $0x90] sm:$0xff]
    %v1919 = vld [vmem:[#allocation6 + $0x98] sm:$0xff]
    %v1920 = vld [vmem:[#allocation6 + $0xa0] sm:$0xff]
    %v1921 = vld [vmem:[#allocation6 + $0xa8] sm:$0xff]
    %v1922 = vld [vmem:[#allocation6 + $0xb0] sm:$0xff]
    %v1923 = vld [vmem:[#allocation6 + $0xb8] sm:$0xff]
    %v1924 = vld [vmem:[#allocation6 + $0xc0] sm:$0xff]
    %v1925 = vld [vmem:[#allocation6 + $0xc8] sm:$0xff]
    %v1926 = vld [vmem:[#allocation6 + $0xd0] sm:$0xff]
    %v1927 = vld [vmem:[#allocation6 + $0xd8] sm:$0xff]
    %v1928 = vld [vmem:[#allocation6 + $0xe0] sm:$0xff]
    %v1929 = vld [vmem:[#allocation6 + $0xe8] sm:$0xff]
    %v1930 = vld [vmem:[#allocation6 + $0xf0] sm:$0xff]
    %v1931 = vld [vmem:[#allocation6 + $0xf8] sm:$0xff]
    %v1932 = vld [vmem:[#allocation6 + $0x100] sm:$0xff]
    %v1933 = vld [vmem:[#allocation6 + $0x108] sm:$0xff]
    %v1934 = vld [vmem:[#allocation6 + $0x110] sm:$0xff]
    %v1935 = vld [vmem:[#allocation6 + $0x118] sm:$0xff]
    %v1936 = vld [vmem:[#allocation6 + $0x120] sm:$0xff]
    %v1937 = vld [vmem:[#allocation6 + $0x128] sm:$0xff]
    %v1938 = vld [vmem:[#allocation6 + $0x130] sm:$0xff]
    %v1939 = vld [vmem:[#allocation6 + $0x138] sm:$0xff]
    %v1940 = vld [vmem:[#allocation6 + $0x140] sm:$0xff]
    %v1941 = vld [vmem:[#allocation6 + $0x148] sm:$0xff]
    %v1942 = vld [vmem:[#allocation6 + $0x150] sm:$0xff]
    %v1943 = vld [vmem:[#allocation6 + $0x158] sm:$0xff]
    %v1944 = vld [vmem:[#allocation6 + $0x160] sm:$0xff]
    %v1945 = vld [vmem:[#allocation6 + $0x168] sm:$0xff]
    %v1946 = vld [vmem:[#allocation6 + $0x170] sm:$0xff]
    %v1947 = vld [vmem:[#allocation6 + $0x178] sm:$0xff]
    %v1948 = vld [vmem:[#allocation6 + $0x180] sm:$0xff]
    %v1949 = vld [vmem:[#allocation6 + $0x188] sm:$0xff]
    %v1950 = vld [vmem:[#allocation6 + $0x190] sm:$0xff]
    %v1951 = vld [vmem:[#allocation6 + $0x198] sm:$0xff]
    %v1952 = vld [vmem:[#allocation6 + $0x1a0] sm:$0xff]
    %v1953 = vld [vmem:[#allocation6 + $0x1a8] sm:$0xff]
    %v1954 = vld [vmem:[#allocation6 + $0x1b0] sm:$0xff]
    %v1955 = vld [vmem:[#allocation6 + $0x1b8] sm:$0xff]
    %v1956 = vld [vmem:[#allocation6 + $0x1c0] sm:$0xff]
    %v1957 = vld [vmem:[#allocation6 + $0x1c8] sm:$0xff]
    %v1958 = vld [vmem:[#allocation6 + $0x1d0] sm:$0xff]
    %v1959 = vld [vmem:[#allocation6 + $0x1d8] sm:$0xff]
    %v1960 = vld [vmem:[#allocation6 + $0x1e0] sm:$0xff]
    %v1961 = vld [vmem:[#allocation6 + $0x1e8] sm:$0xff]
    %v1962 = vld [vmem:[#allocation6 + $0x1f0] sm:$0xff]
    %v1963 = vld [vmem:[#allocation6 + $0x1f8] sm:$0xff]
    %v1964 = vld [vmem:[%s6] sm:$0x3]
    %v1966 = vperm.slane %v1964, 0
    %v1967 = vperm.slane %v1964, 1
    %v1970 = vand.u32 %v1930, 4294901760
    %1971 = vmatpush.msra.mxu0 %v1970
    %v1972 = vand.u32 %v1928, 4294901760
    %1973 = vmatpush.msra.mxu0 %v1972
    %v1974 = vand.u32 %v1926, 4294901760
    %1975 = vmatpush.msra.mxu0 %v1974
    %v1976 = vand.u32 %v1924, 4294901760
    %1977 = vmatpush.msra.mxu0 %v1976
    %v1978 = vand.u32 %v1922, 4294901760
    %1979 = vmatpush.msra.mxu0 %v1978
    %v1980 = vand.u32 %v1920, 4294901760
    %1981 = vmatpush.msra.mxu0 %v1980
    %v1982 = vand.u32 %v1918, 4294901760
    %1983 = vmatpush.msra.mxu0 %v1982
    %v1984 = vand.u32 %v1916, 4294901760
    %1985 = vmatpush.msra.mxu0 %v1984
    %v1986 = vand.u32 %v1914, 4294901760
    %1987 = vmatpush.msra.mxu0 %v1986
    %v1988 = vand.u32 %v1912, 4294901760
    %1989 = vmatpush.msra.mxu0 %v1988
    %v1990 = vand.u32 %v1910, 4294901760
    %1991 = vmatpush.msra.mxu0 %v1990
    %v1992 = vand.u32 %v1908, 4294901760
    %1993 = vmatpush.msra.mxu0 %v1992
    %v1994 = vand.u32 %v1906, 4294901760
    %1995 = vmatpush.msra.mxu0 %v1994
    %v1996 = vand.u32 %v1904, 4294901760
    %1997 = vmatpush.msra.mxu0 %v1996
    %v1998 = vand.u32 %v1902, 4294901760
    %1999 = vmatpush.msra.mxu0 %v1998
    %v2000 = vand.u32 %v1900, 4294901760
    %2001 = vmatpush.msra.mxu0 %v2000
    %v2002 = vand.u32 %v1898, 4294901760
    %v2003 = vsub.f32 %v1898, %v2002
    %v2004 = vand.u32 %v2003, 4294901760
    %v2005 = vsub.f32 %v2003, %v2004
    %v2006 = vand.u32 %v2005, 4294901760
    %2007 = vmatmul.f32.gmra.mxu0 %v2006
    %v2008 = vpop.f32.mrf.mxu0
    %v2009 = vadd.f32 %v1966, %v2008
    %2010 = vdwg.mxu0
    %v2011 = vand.u32 %v1930, 4294901760
    %v2012 = vsub.f32 %v1930, %v2011
    %v2013 = vand.u32 %v2012, 4294901760
    %v2014 = vsub.f32 %v2012, %v2013
    %v2015 = vand.u32 %v2014, 4294901760
    %2016 = vmatpush.msra.mxu0 %v2015
    %v2017 = vand.u32 %v1928, 4294901760
    %v2018 = vsub.f32 %v1928, %v2017
    %v2019 = vand.u32 %v2018, 4294901760
    %v2020 = vsub.f32 %v2018, %v2019
    %v2021 = vand.u32 %v2020, 4294901760
    %2022 = vmatpush.msra.mxu0 %v2021
    %v2023 = vand.u32 %v1926, 4294901760
    %v2024 = vsub.f32 %v1926, %v2023
    %v2025 = vand.u32 %v2024, 4294901760
    %v2026 = vsub.f32 %v2024, %v2025
    %v2027 = vand.u32 %v2026, 4294901760
    %2028 = vmatpush.msra.mxu0 %v2027
    %v2029 = vand.u32 %v1924, 4294901760
    %v2030 = vsub.f32 %v1924, %v2029
    %v2031 = vand.u32 %v2030, 4294901760
    %v2032 = vsub.f32 %v2030, %v2031
    %v2033 = vand.u32 %v2032, 4294901760
    %2034 = vmatpush.msra.mxu0 %v2033
    %v2035 = vand.u32 %v1922, 4294901760
    %v2036 = vsub.f32 %v1922, %v2035
    %v2037 = vand.u32 %v2036, 4294901760
    %v2038 = vsub.f32 %v2036, %v2037
    %v2039 = vand.u32 %v2038, 4294901760
    %2040 = vmatpush.msra.mxu0 %v2039
    %v2041 = vand.u32 %v1920, 4294901760
    %v2042 = vsub.f32 %v1920, %v2041
    %v2043 = vand.u32 %v2042, 4294901760
    %v2044 = vsub.f32 %v2042, %v2043
    %v2045 = vand.u32 %v2044, 4294901760
    %2046 = vmatpush.msra.mxu0 %v2045
    %v2047 = vand.u32 %v1918, 4294901760
    %v2048 = vsub.f32 %v1918, %v2047
    %v2049 = vand.u32 %v2048, 4294901760
    %v2050 = vsub.f32 %v2048, %v2049
    %v2051 = vand.u32 %v2050, 4294901760
    %2052 = vmatpush.msra.mxu0 %v2051
    %v2053 = vand.u32 %v1916, 4294901760
    %v2054 = vsub.f32 %v1916, %v2053
    %v2055 = vand.u32 %v2054, 4294901760
    %v2056 = vsub.f32 %v2054, %v2055
    %v2057 = vand.u32 %v2056, 4294901760
    %2058 = vmatpush.msra.mxu0 %v2057
    %v2059 = vand.u32 %v1914, 4294901760
    %v2060 = vsub.f32 %v1914, %v2059
    %v2061 = vand.u32 %v2060, 4294901760
    %v2062 = vsub.f32 %v2060, %v2061
    %v2063 = vand.u32 %v2062, 4294901760
    %2064 = vmatpush.msra.mxu0 %v2063
    %v2065 = vand.u32 %v1912, 4294901760
    %v2066 = vsub.f32 %v1912, %v2065
    %v2067 = vand.u32 %v2066, 4294901760
    %v2068 = vsub.f32 %v2066, %v2067
    %v2069 = vand.u32 %v2068, 4294901760
    %2070 = vmatpush.msra.mxu0 %v2069
    %v2071 = vand.u32 %v1910, 4294901760
    %v2072 = vsub.f32 %v1910, %v2071
    %v2073 = vand.u32 %v2072, 4294901760
    %v2074 = vsub.f32 %v2072, %v2073
    %v2075 = vand.u32 %v2074, 4294901760
    %2076 = vmatpush.msra.mxu0 %v2075
    %v2077 = vand.u32 %v1908, 4294901760
    %v2078 = vsub.f32 %v1908, %v2077
    %v2079 = vand.u32 %v2078, 4294901760
    %v2080 = vsub.f32 %v2078, %v2079
    %v2081 = vand.u32 %v2080, 4294901760
    %2082 = vmatpush.msra.mxu0 %v2081
    %v2083 = vand.u32 %v1906, 4294901760
    %v2084 = vsub.f32 %v1906, %v2083
    %v2085 = vand.u32 %v2084, 4294901760
    %v2086 = vsub.f32 %v2084, %v2085
    %v2087 = vand.u32 %v2086, 4294901760
    %2088 = vmatpush.msra.mxu0 %v2087
    %v2089 = vand.u32 %v1904, 4294901760
    %v2090 = vsub.f32 %v1904, %v2089
    %v2091 = vand.u32 %v2090, 4294901760
    %v2092 = vsub.f32 %v2090, %v2091
    %v2093 = vand.u32 %v2092, 4294901760
    %2094 = vmatpush.msra.mxu0 %v2093
    %v2095 = vand.u32 %v1902, 4294901760
    %v2096 = vsub.f32 %v1902, %v2095
    %v2097 = vand.u32 %v2096, 4294901760
    %v2098 = vsub.f32 %v2096, %v2097
    %v2099 = vand.u32 %v2098, 4294901760
    %2100 = vmatpush.msra.mxu0 %v2099
    %v2101 = vand.u32 %v1900, 4294901760
    %v2102 = vsub.f32 %v1900, %v2101
    %v2103 = vand.u32 %v2102, 4294901760
    %v2104 = vsub.f32 %v2102, %v2103
    %v2105 = vand.u32 %v2104, 4294901760
    %2106 = vmatpush.msra.mxu0 %v2105
    %v2107 = vand.u32 %v1898, 4294901760
    %2108 = vmatmul.f32.gmra.mxu0 %v2107
    %v2109 = vpop.f32.mrf.mxu0
    %v2110 = vadd.f32 %v2009, %v2109
    %2111 = vdwg.mxu0
    %v2112 = vand.u32 %v1930, 4294901760
    %v2113 = vsub.f32 %v1930, %v2112
    %2114 = vmatpush.msra.mxu0 %v2113
    %v2115 = vand.u32 %v1928, 4294901760
    %v2116 = vsub.f32 %v1928, %v2115
    %2117 = vmatpush.msra.mxu0 %v2116
    %v2118 = vand.u32 %v1926, 4294901760
    %v2119 = vsub.f32 %v1926, %v2118
    %2120 = vmatpush.msra.mxu0 %v2119
    %v2121 = vand.u32 %v1924, 4294901760
    %v2122 = vsub.f32 %v1924, %v2121
    %2123 = vmatpush.msra.mxu0 %v2122
    %v2124 = vand.u32 %v1922, 4294901760
    %v2125 = vsub.f32 %v1922, %v2124
    %2126 = vmatpush.msra.mxu0 %v2125
    %v2127 = vand.u32 %v1920, 4294901760
    %v2128 = vsub.f32 %v1920, %v2127
    %2129 = vmatpush.msra.mxu0 %v2128
    %v2130 = vand.u32 %v1918, 4294901760
    %v2131 = vsub.f32 %v1918, %v2130
    %2132 = vmatpush.msra.mxu0 %v2131
    %v2133 = vand.u32 %v1916, 4294901760
    %v2134 = vsub.f32 %v1916, %v2133
    %2135 = vmatpush.msra.mxu0 %v2134
    %v2136 = vand.u32 %v1914, 4294901760
    %v2137 = vsub.f32 %v1914, %v2136
    %2138 = vmatpush.msra.mxu0 %v2137
    %v2139 = vand.u32 %v1912, 4294901760
    %v2140 = vsub.f32 %v1912, %v2139
    %2141 = vmatpush.msra.mxu0 %v2140
    %v2142 = vand.u32 %v1910, 4294901760
    %v2143 = vsub.f32 %v1910, %v2142
    %2144 = vmatpush.msra.mxu0 %v2143
    %v2145 = vand.u32 %v1908, 4294901760
    %v2146 = vsub.f32 %v1908, %v2145
    %2147 = vmatpush.msra.mxu0 %v2146
    %v2148 = vand.u32 %v1906, 4294901760
    %v2149 = vsub.f32 %v1906, %v2148
    %2150 = vmatpush.msra.mxu0 %v2149
    %v2151 = vand.u32 %v1904, 4294901760
    %v2152 = vsub.f32 %v1904, %v2151
    %2153 = vmatpush.msra.mxu0 %v2152
    %v2154 = vand.u32 %v1902, 4294901760
    %v2155 = vsub.f32 %v1902, %v2154
    %2156 = vmatpush.msra.mxu0 %v2155
    %v2157 = vand.u32 %v1900, 4294901760
    %v2158 = vsub.f32 %v1900, %v2157
    %2159 = vmatpush.msra.mxu0 %v2158
    %v2160 = vand.u32 %v1898, 4294901760
    %v2161 = vsub.f32 %v1898, %v2160
    %2162 = vmatmul.f32.gmra.mxu0 %v2161
    %v2163 = vpop.f32.mrf.mxu0
    %v2164 = vadd.f32 %v2110, %v2163
    %2165 = vdwg.mxu0
    %v2166 = vand.u32 %v1930, 4294901760
    %2167 = vmatpush.msra.mxu0 %v2166
    %v2168 = vand.u32 %v1928, 4294901760
    %2169 = vmatpush.msra.mxu0 %v2168
    %v2170 = vand.u32 %v1926, 4294901760
    %2171 = vmatpush.msra.mxu0 %v2170
    %v2172 = vand.u32 %v1924, 4294901760
    %2173 = vmatpush.msra.mxu0 %v2172
    %v2174 = vand.u32 %v1922, 4294901760
    %2175 = vmatpush.msra.mxu0 %v2174
    %v2176 = vand.u32 %v1920, 4294901760
    %2177 = vmatpush.msra.mxu0 %v2176
    %v2178 = vand.u32 %v1918, 4294901760
    %2179 = vmatpush.msra.mxu0 %v2178
    %v2180 = vand.u32 %v1916, 4294901760
    %2181 = vmatpush.msra.mxu0 %v2180
    %v2182 = vand.u32 %v1914, 4294901760
    %2183 = vmatpush.msra.mxu0 %v2182
    %v2184 = vand.u32 %v1912, 4294901760
    %2185 = vmatpush.msra.mxu0 %v2184
    %v2186 = vand.u32 %v1910, 4294901760
    %2187 = vmatpush.msra.mxu0 %v2186
    %v2188 = vand.u32 %v1908, 4294901760
    %2189 = vmatpush.msra.mxu0 %v2188
    %v2190 = vand.u32 %v1906, 4294901760
    %2191 = vmatpush.msra.mxu0 %v2190
    %v2192 = vand.u32 %v1904, 4294901760
    %2193 = vmatpush.msra.mxu0 %v2192
    %v2194 = vand.u32 %v1902, 4294901760
    %2195 = vmatpush.msra.mxu0 %v2194
    %v2196 = vand.u32 %v1900, 4294901760
    %2197 = vmatpush.msra.mxu0 %v2196
    %v2198 = vand.u32 %v1898, 4294901760
    %v2199 = vsub.f32 %v1898, %v2198
    %v2200 = vand.u32 %v2199, 4294901760
    %2201 = vmatmul.f32.gmra.mxu0 %v2200
    %v2202 = vpop.f32.mrf.mxu0
    %v2203 = vadd.f32 %v2164, %v2202
    %2204 = vdwg.mxu0
    %v2205 = vand.u32 %v1930, 4294901760
    %v2206 = vsub.f32 %v1930, %v2205
    %v2207 = vand.u32 %v2206, 4294901760
    %2208 = vmatpush.msra.mxu0 %v2207
    %v2209 = vand.u32 %v1928, 4294901760
    %v2210 = vsub.f32 %v1928, %v2209
    %v2211 = vand.u32 %v2210, 4294901760
    %2212 = vmatpush.msra.mxu0 %v2211
    %v2213 = vand.u32 %v1926, 4294901760
    %v2214 = vsub.f32 %v1926, %v2213
    %v2215 = vand.u32 %v2214, 4294901760
    %2216 = vmatpush.msra.mxu0 %v2215
    %v2217 = vand.u32 %v1924, 4294901760
    %v2218 = vsub.f32 %v1924, %v2217
    %v2219 = vand.u32 %v2218, 4294901760
    %2220 = vmatpush.msra.mxu0 %v2219
    %v2221 = vand.u32 %v1922, 4294901760
    %v2222 = vsub.f32 %v1922, %v2221
    %v2223 = vand.u32 %v2222, 4294901760
    %2224 = vmatpush.msra.mxu0 %v2223
    %v2225 = vand.u32 %v1920, 4294901760
    %v2226 = vsub.f32 %v1920, %v2225
    %v2227 = vand.u32 %v2226, 4294901760
    %2228 = vmatpush.msra.mxu0 %v2227
    %v2229 = vand.u32 %v1918, 4294901760
    %v2230 = vsub.f32 %v1918, %v2229
    %v2231 = vand.u32 %v2230, 4294901760
    %2232 = vmatpush.msra.mxu0 %v2231
    %v2233 = vand.u32 %v1916, 4294901760
    %v2234 = vsub.f32 %v1916, %v2233
    %v2235 = vand.u32 %v2234, 4294901760
    %2236 = vmatpush.msra.mxu0 %v2235
    %v2237 = vand.u32 %v1914, 4294901760
    %v2238 = vsub.f32 %v1914, %v2237
    %v2239 = vand.u32 %v2238, 4294901760
    %2240 = vmatpush.msra.mxu0 %v2239
    %v2241 = vand.u32 %v1912, 4294901760
    %v2242 = vsub.f32 %v1912, %v2241
    %v2243 = vand.u32 %v2242, 4294901760
    %2244 = vmatpush.msra.mxu0 %v2243
    %v2245 = vand.u32 %v1910, 4294901760
    %v2246 = vsub.f32 %v1910, %v2245
    %v2247 = vand.u32 %v2246, 4294901760
    %2248 = vmatpush.msra.mxu0 %v2247
    %v2249 = vand.u32 %v1908, 4294901760
    %v2250 = vsub.f32 %v1908, %v2249
    %v2251 = vand.u32 %v2250, 4294901760
    %2252 = vmatpush.msra.mxu0 %v2251
    %v2253 = vand.u32 %v1906, 4294901760
    %v2254 = vsub.f32 %v1906, %v2253
    %v2255 = vand.u32 %v2254, 4294901760
    %2256 = vmatpush.msra.mxu0 %v2255
    %v2257 = vand.u32 %v1904, 4294901760
    %v2258 = vsub.f32 %v1904, %v2257
    %v2259 = vand.u32 %v2258, 4294901760
    %2260 = vmatpush.msra.mxu0 %v2259
    %v2261 = vand.u32 %v1902, 4294901760
    %v2262 = vsub.f32 %v1902, %v2261
    %v2263 = vand.u32 %v2262, 4294901760
    %2264 = vmatpush.msra.mxu0 %v2263
    %v2265 = vand.u32 %v1900, 4294901760
    %v2266 = vsub.f32 %v1900, %v2265
    %v2267 = vand.u32 %v2266, 4294901760
    %2268 = vmatpush.msra.mxu0 %v2267
    %v2269 = vand.u32 %v1898, 4294901760
    %2270 = vmatmul.f32.gmra.mxu0 %v2269
    %v2271 = vpop.f32.mrf.mxu0
    %v2272 = vadd.f32 %v2203, %v2271
    %2273 = vdwg.mxu0
    %v2274 = vand.u32 %v1930, 4294901760
    %2275 = vmatpush.msra.mxu0 %v2274
    %v2276 = vand.u32 %v1928, 4294901760
    %2277 = vmatpush.msra.mxu0 %v2276
    %v2278 = vand.u32 %v1926, 4294901760
    %2279 = vmatpush.msra.mxu0 %v2278
    %v2280 = vand.u32 %v1924, 4294901760
    %2281 = vmatpush.msra.mxu0 %v2280
    %v2282 = vand.u32 %v1922, 4294901760
    %2283 = vmatpush.msra.mxu0 %v2282
    %v2284 = vand.u32 %v1920, 4294901760
    %2285 = vmatpush.msra.mxu0 %v2284
    %v2286 = vand.u32 %v1918, 4294901760
    %2287 = vmatpush.msra.mxu0 %v2286
    %v2288 = vand.u32 %v1916, 4294901760
    %2289 = vmatpush.msra.mxu0 %v2288
    %v2290 = vand.u32 %v1914, 4294901760
    %2291 = vmatpush.msra.mxu0 %v2290
    %v2292 = vand.u32 %v1912, 4294901760
    %2293 = vmatpush.msra.mxu0 %v2292
    %v2294 = vand.u32 %v1910, 4294901760
    %2295 = vmatpush.msra.mxu0 %v2294
    %v2296 = vand.u32 %v1908, 4294901760
    %2297 = vmatpush.msra.mxu0 %v2296
    %v2298 = vand.u32 %v1906, 4294901760
    %2299 = vmatpush.msra.mxu0 %v2298
    %v2300 = vand.u32 %v1904, 4294901760
    %2301 = vmatpush.msra.mxu0 %v2300
    %v2302 = vand.u32 %v1902, 4294901760
    %2303 = vmatpush.msra.mxu0 %v2302
    %v2304 = vand.u32 %v1900, 4294901760
    %2305 = vmatpush.msra.mxu0 %v2304
    %v2306 = vand.u32 %v1898, 4294901760
    %2307 = vmatmul.f32.gmra.mxu0 %v2306
    %v2308 = vpop.f32.mrf.mxu0
    %v2309 = vadd.f32 %v2272, %v2308
    %2310 = vdwg.mxu0
    %v2311 = vand.u32 %v1962, 4294901760
    %2312 = vmatpush.msra.mxu0 %v2311
    %v2313 = vand.u32 %v1960, 4294901760
    %2314 = vmatpush.msra.mxu0 %v2313
    %v2315 = vand.u32 %v1958, 4294901760
    %2316 = vmatpush.msra.mxu0 %v2315
    %v2317 = vand.u32 %v1956, 4294901760
    %2318 = vmatpush.msra.mxu0 %v2317
    %v2319 = vand.u32 %v1954, 4294901760
    %2320 = vmatpush.msra.mxu0 %v2319
    %v2321 = vand.u32 %v1952, 4294901760
    %2322 = vmatpush.msra.mxu0 %v2321
    %v2323 = vand.u32 %v1950, 4294901760
    %2324 = vmatpush.msra.mxu0 %v2323
    %v2325 = vand.u32 %v1948, 4294901760
    %2326 = vmatpush.msra.mxu0 %v2325
    %v2327 = vand.u32 %v1946, 4294901760
    %2328 = vmatpush.msra.mxu0 %v2327
    %v2329 = vand.u32 %v1944, 4294901760
    %2330 = vmatpush.msra.mxu0 %v2329
    %v2331 = vand.u32 %v1942, 4294901760
    %2332 = vmatpush.msra.mxu0 %v2331
    %v2333 = vand.u32 %v1940, 4294901760
    %2334 = vmatpush.msra.mxu0 %v2333
    %v2335 = vand.u32 %v1938, 4294901760
    %2336 = vmatpush.msra.mxu0 %v2335
    %v2337 = vand.u32 %v1936, 4294901760
    %2338 = vmatpush.msra.mxu0 %v2337
    %v2339 = vand.u32 %v1934, 4294901760
    %2340 = vmatpush.msra.mxu0 %v2339
    %v2341 = vand.u32 %v1932, 4294901760
    %2342 = vmatpush.msra.mxu0 %v2341
    %v2343 = vand.u32 %v1899, 4294901760
    %v2344 = vsub.f32 %v1899, %v2343
    %v2345 = vand.u32 %v2344, 4294901760
    %v2346 = vsub.f32 %v2344, %v2345
    %v2347 = vand.u32 %v2346, 4294901760
    %2348 = vmatmul.f32.gmra.mxu0 %v2347
    %v2349 = vpop.f32.mrf.mxu0
    %v2350 = vadd.f32 %v2309, %v2349
    %2351 = vdwg.mxu0
    %v2352 = vand.u32 %v1962, 4294901760
    %v2353 = vsub.f32 %v1962, %v2352
    %v2354 = vand.u32 %v2353, 4294901760
    %v2355 = vsub.f32 %v2353, %v2354
    %v2356 = vand.u32 %v2355, 4294901760
    %2357 = vmatpush.msra.mxu0 %v2356
    %v2358 = vand.u32 %v1960, 4294901760
    %v2359 = vsub.f32 %v1960, %v2358
    %v2360 = vand.u32 %v2359, 4294901760
    %v2361 = vsub.f32 %v2359, %v2360
    %v2362 = vand.u32 %v2361, 4294901760
    %2363 = vmatpush.msra.mxu0 %v2362
    %v2364 = vand.u32 %v1958, 4294901760
    %v2365 = vsub.f32 %v1958, %v2364
    %v2366 = vand.u32 %v2365, 4294901760
    %v2367 = vsub.f32 %v2365, %v2366
    %v2368 = vand.u32 %v2367, 4294901760
    %2369 = vmatpush.msra.mxu0 %v2368
    %v2370 = vand.u32 %v1956, 4294901760
    %v2371 = vsub.f32 %v1956, %v2370
    %v2372 = vand.u32 %v2371, 4294901760
    %v2373 = vsub.f32 %v2371, %v2372
    %v2374 = vand.u32 %v2373, 4294901760
    %2375 = vmatpush.msra.mxu0 %v2374
    %v2376 = vand.u32 %v1954, 4294901760
    %v2377 = vsub.f32 %v1954, %v2376
    %v2378 = vand.u32 %v2377, 4294901760
    %v2379 = vsub.f32 %v2377, %v2378
    %v2380 = vand.u32 %v2379, 4294901760
    %2381 = vmatpush.msra.mxu0 %v2380
    %v2382 = vand.u32 %v1952, 4294901760
    %v2383 = vsub.f32 %v1952, %v2382
    %v2384 = vand.u32 %v2383, 4294901760
    %v2385 = vsub.f32 %v2383, %v2384
    %v2386 = vand.u32 %v2385, 4294901760
    %2387 = vmatpush.msra.mxu0 %v2386
    %v2388 = vand.u32 %v1950, 4294901760
    %v2389 = vsub.f32 %v1950, %v2388
    %v2390 = vand.u32 %v2389, 4294901760
    %v2391 = vsub.f32 %v2389, %v2390
    %v2392 = vand.u32 %v2391, 4294901760
    %2393 = vmatpush.msra.mxu0 %v2392
    %v2394 = vand.u32 %v1948, 4294901760
    %v2395 = vsub.f32 %v1948, %v2394
    %v2396 = vand.u32 %v2395, 4294901760
    %v2397 = vsub.f32 %v2395, %v2396
    %v2398 = vand.u32 %v2397, 4294901760
    %2399 = vmatpush.msra.mxu0 %v2398
    %v2400 = vand.u32 %v1946, 4294901760
    %v2401 = vsub.f32 %v1946, %v2400
    %v2402 = vand.u32 %v2401, 4294901760
    %v2403 = vsub.f32 %v2401, %v2402
    %v2404 = vand.u32 %v2403, 4294901760
    %2405 = vmatpush.msra.mxu0 %v2404
    %v2406 = vand.u32 %v1944, 4294901760
    %v2407 = vsub.f32 %v1944, %v2406
    %v2408 = vand.u32 %v2407, 4294901760
    %v2409 = vsub.f32 %v2407, %v2408
    %v2410 = vand.u32 %v2409, 4294901760
    %2411 = vmatpush.msra.mxu0 %v2410
    %v2412 = vand.u32 %v1942, 4294901760
    %v2413 = vsub.f32 %v1942, %v2412
    %v2414 = vand.u32 %v2413, 4294901760
    %v2415 = vsub.f32 %v2413, %v2414
    %v2416 = vand.u32 %v2415, 4294901760
    %2417 = vmatpush.msra.mxu0 %v2416
    %v2418 = vand.u32 %v1940, 4294901760
    %v2419 = vsub.f32 %v1940, %v2418
    %v2420 = vand.u32 %v2419, 4294901760
    %v2421 = vsub.f32 %v2419, %v2420
    %v2422 = vand.u32 %v2421, 4294901760
    %2423 = vmatpush.msra.mxu0 %v2422
    %v2424 = vand.u32 %v1938, 4294901760
    %v2425 = vsub.f32 %v1938, %v2424
    %v2426 = vand.u32 %v2425, 4294901760
    %v2427 = vsub.f32 %v2425, %v2426
    %v2428 = vand.u32 %v2427, 4294901760
    %2429 = vmatpush.msra.mxu0 %v2428
    %v2430 = vand.u32 %v1936, 4294901760
    %v2431 = vsub.f32 %v1936, %v2430
    %v2432 = vand.u32 %v2431, 4294901760
    %v2433 = vsub.f32 %v2431, %v2432
    %v2434 = vand.u32 %v2433, 4294901760
    %2435 = vmatpush.msra.mxu0 %v2434
    %v2436 = vand.u32 %v1934, 4294901760
    %v2437 = vsub.f32 %v1934, %v2436
    %v2438 = vand.u32 %v2437, 4294901760
    %v2439 = vsub.f32 %v2437, %v2438
    %v2440 = vand.u32 %v2439, 4294901760
    %2441 = vmatpush.msra.mxu0 %v2440
    %v2442 = vand.u32 %v1932, 4294901760
    %v2443 = vsub.f32 %v1932, %v2442
    %v2444 = vand.u32 %v2443, 4294901760
    %v2445 = vsub.f32 %v2443, %v2444
    %v2446 = vand.u32 %v2445, 4294901760
    %2447 = vmatpush.msra.mxu0 %v2446
    %v2448 = vand.u32 %v1899, 4294901760
    %2449 = vmatmul.f32.gmra.mxu0 %v2448
    %v2450 = vpop.f32.mrf.mxu0
    %v2451 = vadd.f32 %v2350, %v2450
    %2452 = vdwg.mxu0
    %v2453 = vand.u32 %v1962, 4294901760
    %v2454 = vsub.f32 %v1962, %v2453
    %2455 = vmatpush.msra.mxu0 %v2454
    %v2456 = vand.u32 %v1960, 4294901760
    %v2457 = vsub.f32 %v1960, %v2456
    %2458 = vmatpush.msra.mxu0 %v2457
    %v2459 = vand.u32 %v1958, 4294901760
    %v2460 = vsub.f32 %v1958, %v2459
    %2461 = vmatpush.msra.mxu0 %v2460
    %v2462 = vand.u32 %v1956, 4294901760
    %v2463 = vsub.f32 %v1956, %v2462
    %2464 = vmatpush.msra.mxu0 %v2463
    %v2465 = vand.u32 %v1954, 4294901760
    %v2466 = vsub.f32 %v1954, %v2465
    %2467 = vmatpush.msra.mxu0 %v2466
    %v2468 = vand.u32 %v1952, 4294901760
    %v2469 = vsub.f32 %v1952, %v2468
    %2470 = vmatpush.msra.mxu0 %v2469
    %v2471 = vand.u32 %v1950, 4294901760
    %v2472 = vsub.f32 %v1950, %v2471
    %2473 = vmatpush.msra.mxu0 %v2472
    %v2474 = vand.u32 %v1948, 4294901760
    %v2475 = vsub.f32 %v1948, %v2474
    %2476 = vmatpush.msra.mxu0 %v2475
    %v2477 = vand.u32 %v1946, 4294901760
    %v2478 = vsub.f32 %v1946, %v2477
    %2479 = vmatpush.msra.mxu0 %v2478
    %v2480 = vand.u32 %v1944, 4294901760
    %v2481 = vsub.f32 %v1944, %v2480
    %2482 = vmatpush.msra.mxu0 %v2481
    %v2483 = vand.u32 %v1942, 4294901760
    %v2484 = vsub.f32 %v1942, %v2483
    %2485 = vmatpush.msra.mxu0 %v2484
    %v2486 = vand.u32 %v1940, 4294901760
    %v2487 = vsub.f32 %v1940, %v2486
    %2488 = vmatpush.msra.mxu0 %v2487
    %v2489 = vand.u32 %v1938, 4294901760
    %v2490 = vsub.f32 %v1938, %v2489
    %2491 = vmatpush.msra.mxu0 %v2490
    %v2492 = vand.u32 %v1936, 4294901760
    %v2493 = vsub.f32 %v1936, %v2492
    %2494 = vmatpush.msra.mxu0 %v2493
    %v2495 = vand.u32 %v1934, 4294901760
    %v2496 = vsub.f32 %v1934, %v2495
    %2497 = vmatpush.msra.mxu0 %v2496
    %v2498 = vand.u32 %v1932, 4294901760
    %v2499 = vsub.f32 %v1932, %v2498
    %2500 = vmatpush.msra.mxu0 %v2499
    %v2501 = vand.u32 %v1899, 4294901760
    %v2502 = vsub.f32 %v1899, %v2501
    %2503 = vmatmul.f32.gmra.mxu0 %v2502
    %v2504 = vpop.f32.mrf.mxu0
    %v2505 = vadd.f32 %v2451, %v2504
    %2506 = vdwg.mxu0
    %v2507 = vand.u32 %v1962, 4294901760
    %2508 = vmatpush.msra.mxu0 %v2507
    %v2509 = vand.u32 %v1960, 4294901760
    %2510 = vmatpush.msra.mxu0 %v2509
    %v2511 = vand.u32 %v1958, 4294901760
    %2512 = vmatpush.msra.mxu0 %v2511
    %v2513 = vand.u32 %v1956, 4294901760
    %2514 = vmatpush.msra.mxu0 %v2513
    %v2515 = vand.u32 %v1954, 4294901760
    %2516 = vmatpush.msra.mxu0 %v2515
    %v2517 = vand.u32 %v1952, 4294901760
    %2518 = vmatpush.msra.mxu0 %v2517
    %v2519 = vand.u32 %v1950, 4294901760
    %2520 = vmatpush.msra.mxu0 %v2519
    %v2521 = vand.u32 %v1948, 4294901760
    %2522 = vmatpush.msra.mxu0 %v2521
    %v2523 = vand.u32 %v1946, 4294901760
    %2524 = vmatpush.msra.mxu0 %v2523
    %v2525 = vand.u32 %v1944, 4294901760
    %2526 = vmatpush.msra.mxu0 %v2525
    %v2527 = vand.u32 %v1942, 4294901760
    %2528 = vmatpush.msra.mxu0 %v2527
    %v2529 = vand.u32 %v1940, 4294901760
    %2530 = vmatpush.msra.mxu0 %v2529
    %v2531 = vand.u32 %v1938, 4294901760
    %2532 = vmatpush.msra.mxu0 %v2531
    %v2533 = vand.u32 %v1936, 4294901760
    %2534 = vmatpush.msra.mxu0 %v2533
    %v2535 = vand.u32 %v1934, 4294901760
    %2536 = vmatpush.msra.mxu0 %v2535
    %v2537 = vand.u32 %v1932, 4294901760
    %2538 = vmatpush.msra.mxu0 %v2537
    %v2539 = vand.u32 %v1899, 4294901760
    %v2540 = vsub.f32 %v1899, %v2539
    %v2541 = vand.u32 %v2540, 4294901760
    %2542 = vmatmul.f32.gmra.mxu0 %v2541
    %v2543 = vpop.f32.mrf.mxu0
    %v2544 = vadd.f32 %v2505, %v2543
    %2545 = vdwg.mxu0
    %v2546 = vand.u32 %v1962, 4294901760
    %v2547 = vsub.f32 %v1962, %v2546
    %v2548 = vand.u32 %v2547, 4294901760
    %2549 = vmatpush.msra.mxu0 %v2548
    %v2550 = vand.u32 %v1960, 4294901760
    %v2551 = vsub.f32 %v1960, %v2550
    %v2552 = vand.u32 %v2551, 4294901760
    %2553 = vmatpush.msra.mxu0 %v2552
    %v2554 = vand.u32 %v1958, 4294901760
    %v2555 = vsub.f32 %v1958, %v2554
    %v2556 = vand.u32 %v2555, 4294901760
    %2557 = vmatpush.msra.mxu0 %v2556
    %v2558 = vand.u32 %v1956, 4294901760
    %v2559 = vsub.f32 %v1956, %v2558
    %v2560 = vand.u32 %v2559, 4294901760
    %2561 = vmatpush.msra.mxu0 %v2560
    %v2562 = vand.u32 %v1954, 4294901760
    %v2563 = vsub.f32 %v1954, %v2562
    %v2564 = vand.u32 %v2563, 4294901760
    %2565 = vmatpush.msra.mxu0 %v2564
    %v2566 = vand.u32 %v1952, 4294901760
    %v2567 = vsub.f32 %v1952, %v2566
    %v2568 = vand.u32 %v2567, 4294901760
    %2569 = vmatpush.msra.mxu0 %v2568
    %v2570 = vand.u32 %v1950, 4294901760
    %v2571 = vsub.f32 %v1950, %v2570
    %v2572 = vand.u32 %v2571, 4294901760
    %2573 = vmatpush.msra.mxu0 %v2572
    %v2574 = vand.u32 %v1948, 4294901760
    %v2575 = vsub.f32 %v1948, %v2574
    %v2576 = vand.u32 %v2575, 4294901760
    %2577 = vmatpush.msra.mxu0 %v2576
    %v2578 = vand.u32 %v1946, 4294901760
    %v2579 = vsub.f32 %v1946, %v2578
    %v2580 = vand.u32 %v2579, 4294901760
    %2581 = vmatpush.msra.mxu0 %v2580
    %v2582 = vand.u32 %v1944, 4294901760
    %v2583 = vsub.f32 %v1944, %v2582
    %v2584 = vand.u32 %v2583, 4294901760
    %2585 = vmatpush.msra.mxu0 %v2584
    %v2586 = vand.u32 %v1942, 4294901760
    %v2587 = vsub.f32 %v1942, %v2586
    %v2588 = vand.u32 %v2587, 4294901760
    %2589 = vmatpush.msra.mxu0 %v2588
    %v2590 = vand.u32 %v1940, 4294901760
    %v2591 = vsub.f32 %v1940, %v2590
    %v2592 = vand.u32 %v2591, 4294901760
    %2593 = vmatpush.msra.mxu0 %v2592
    %v2594 = vand.u32 %v1938, 4294901760
    %v2595 = vsub.f32 %v1938, %v2594
    %v2596 = vand.u32 %v2595, 4294901760
    %2597 = vmatpush.msra.mxu0 %v2596
    %v2598 = vand.u32 %v1936, 4294901760
    %v2599 = vsub.f32 %v1936, %v2598
    %v2600 = vand.u32 %v2599, 4294901760
    %2601 = vmatpush.msra.mxu0 %v2600
    %v2602 = vand.u32 %v1934, 4294901760
    %v2603 = vsub.f32 %v1934, %v2602
    %v2604 = vand.u32 %v2603, 4294901760
    %2605 = vmatpush.msra.mxu0 %v2604
    %v2606 = vand.u32 %v1932, 4294901760
    %v2607 = vsub.f32 %v1932, %v2606
    %v2608 = vand.u32 %v2607, 4294901760
    %2609 = vmatpush.msra.mxu0 %v2608
    %v2610 = vand.u32 %v1899, 4294901760
    %2611 = vmatmul.f32.gmra.mxu0 %v2610
    %v2612 = vpop.f32.mrf.mxu0
    %v2613 = vadd.f32 %v2544, %v2612
    %2614 = vdwg.mxu0
    %v2615 = vand.u32 %v1962, 4294901760
    %2616 = vmatpush.msra.mxu0 %v2615
    %v2617 = vand.u32 %v1960, 4294901760
    %2618 = vmatpush.msra.mxu0 %v2617
    %v2619 = vand.u32 %v1958, 4294901760
    %2620 = vmatpush.msra.mxu0 %v2619
    %v2621 = vand.u32 %v1956, 4294901760
    %2622 = vmatpush.msra.mxu0 %v2621
    %v2623 = vand.u32 %v1954, 4294901760
    %2624 = vmatpush.msra.mxu0 %v2623
    %v2625 = vand.u32 %v1952, 4294901760
    %2626 = vmatpush.msra.mxu0 %v2625
    %v2627 = vand.u32 %v1950, 4294901760
    %2628 = vmatpush.msra.mxu0 %v2627
    %v2629 = vand.u32 %v1948, 4294901760
    %2630 = vmatpush.msra.mxu0 %v2629
    %v2631 = vand.u32 %v1946, 4294901760
    %2632 = vmatpush.msra.mxu0 %v2631
    %v2633 = vand.u32 %v1944, 4294901760
    %2634 = vmatpush.msra.mxu0 %v2633
    %v2635 = vand.u32 %v1942, 4294901760
    %2636 = vmatpush.msra.mxu0 %v2635
    %v2637 = vand.u32 %v1940, 4294901760
    %2638 = vmatpush.msra.mxu0 %v2637
    %v2639 = vand.u32 %v1938, 4294901760
    %2640 = vmatpush.msra.mxu0 %v2639
    %v2641 = vand.u32 %v1936, 4294901760
    %2642 = vmatpush.msra.mxu0 %v2641
    %v2643 = vand.u32 %v1934, 4294901760
    %2644 = vmatpush.msra.mxu0 %v2643
    %v2645 = vand.u32 %v1932, 4294901760
    %2646 = vmatpush.msra.mxu0 %v2645
    %v2647 = vand.u32 %v1899, 4294901760
    %2648 = vmatmul.f32.gmra.mxu0 %v2647
    %v2649 = vpop.f32.mrf.mxu0
    %v2650 = vadd.f32 %v2613, %v2649
    %2651 = vdwg.mxu0
    %v2652 = vand.u32 %v1931, 4294901760
    %2653 = vmatpush.msra.mxu0 %v2652
    %v2654 = vand.u32 %v1929, 4294901760
    %2655 = vmatpush.msra.mxu0 %v2654
    %v2656 = vand.u32 %v1927, 4294901760
    %2657 = vmatpush.msra.mxu0 %v2656
    %v2658 = vand.u32 %v1925, 4294901760
    %2659 = vmatpush.msra.mxu0 %v2658
    %v2660 = vand.u32 %v1923, 4294901760
    %2661 = vmatpush.msra.mxu0 %v2660
    %v2662 = vand.u32 %v1921, 4294901760
    %2663 = vmatpush.msra.mxu0 %v2662
    %v2664 = vand.u32 %v1919, 4294901760
    %2665 = vmatpush.msra.mxu0 %v2664
    %v2666 = vand.u32 %v1917, 4294901760
    %2667 = vmatpush.msra.mxu0 %v2666
    %v2668 = vand.u32 %v1915, 4294901760
    %2669 = vmatpush.msra.mxu0 %v2668
    %v2670 = vand.u32 %v1913, 4294901760
    %2671 = vmatpush.msra.mxu0 %v2670
    %v2672 = vand.u32 %v1911, 4294901760
    %2673 = vmatpush.msra.mxu0 %v2672
    %v2674 = vand.u32 %v1909, 4294901760
    %2675 = vmatpush.msra.mxu0 %v2674
    %v2676 = vand.u32 %v1907, 4294901760
    %2677 = vmatpush.msra.mxu0 %v2676
    %v2678 = vand.u32 %v1905, 4294901760
    %2679 = vmatpush.msra.mxu0 %v2678
    %v2680 = vand.u32 %v1903, 4294901760
    %2681 = vmatpush.msra.mxu0 %v2680
    %v2682 = vand.u32 %v1901, 4294901760
    %2683 = vmatpush.msra.mxu0 %v2682
    %v2684 = vand.u32 %v1898, 4294901760
    %v2685 = vsub.f32 %v1898, %v2684
    %v2686 = vand.u32 %v2685, 4294901760
    %v2687 = vsub.f32 %v2685, %v2686
    %v2688 = vand.u32 %v2687, 4294901760
    %2689 = vmatmul.f32.gmra.mxu0 %v2688
    %v2690 = vpop.f32.mrf.mxu0
    %v2691 = vadd.f32 %v1967, %v2690
    %2692 = vdwg.mxu0
    %v2693 = vand.u32 %v1931, 4294901760
    %v2694 = vsub.f32 %v1931, %v2693
    %v2695 = vand.u32 %v2694, 4294901760
    %v2696 = vsub.f32 %v2694, %v2695
    %v2697 = vand.u32 %v2696, 4294901760
    %2698 = vmatpush.msra.mxu0 %v2697
    %v2699 = vand.u32 %v1929, 4294901760
    %v2700 = vsub.f32 %v1929, %v2699
    %v2701 = vand.u32 %v2700, 4294901760
    %v2702 = vsub.f32 %v2700, %v2701
    %v2703 = vand.u32 %v2702, 4294901760
    %2704 = vmatpush.msra.mxu0 %v2703
    %v2705 = vand.u32 %v1927, 4294901760
    %v2706 = vsub.f32 %v1927, %v2705
    %v2707 = vand.u32 %v2706, 4294901760
    %v2708 = vsub.f32 %v2706, %v2707
    %v2709 = vand.u32 %v2708, 4294901760
    %2710 = vmatpush.msra.mxu0 %v2709
    %v2711 = vand.u32 %v1925, 4294901760
    %v2712 = vsub.f32 %v1925, %v2711
    %v2713 = vand.u32 %v2712, 4294901760
    %v2714 = vsub.f32 %v2712, %v2713
    %v2715 = vand.u32 %v2714, 4294901760
    %2716 = vmatpush.msra.mxu0 %v2715
    %v2717 = vand.u32 %v1923, 4294901760
    %v2718 = vsub.f32 %v1923, %v2717
    %v2719 = vand.u32 %v2718, 4294901760
    %v2720 = vsub.f32 %v2718, %v2719
    %v2721 = vand.u32 %v2720, 4294901760
    %2722 = vmatpush.msra.mxu0 %v2721
    %v2723 = vand.u32 %v1921, 4294901760
    %v2724 = vsub.f32 %v1921, %v2723
    %v2725 = vand.u32 %v2724, 4294901760
    %v2726 = vsub.f32 %v2724, %v2725
    %v2727 = vand.u32 %v2726, 4294901760
    %2728 = vmatpush.msra.mxu0 %v2727
    %v2729 = vand.u32 %v1919, 4294901760
    %v2730 = vsub.f32 %v1919, %v2729
    %v2731 = vand.u32 %v2730, 4294901760
    %v2732 = vsub.f32 %v2730, %v2731
    %v2733 = vand.u32 %v2732, 4294901760
    %2734 = vmatpush.msra.mxu0 %v2733
    %v2735 = vand.u32 %v1917, 4294901760
    %v2736 = vsub.f32 %v1917, %v2735
    %v2737 = vand.u32 %v2736, 4294901760
    %v2738 = vsub.f32 %v2736, %v2737
    %v2739 = vand.u32 %v2738, 4294901760
    %2740 = vmatpush.msra.mxu0 %v2739
    %v2741 = vand.u32 %v1915, 4294901760
    %v2742 = vsub.f32 %v1915, %v2741
    %v2743 = vand.u32 %v2742, 4294901760
    %v2744 = vsub.f32 %v2742, %v2743
    %v2745 = vand.u32 %v2744, 4294901760
    %2746 = vmatpush.msra.mxu0 %v2745
    %v2747 = vand.u32 %v1913, 4294901760
    %v2748 = vsub.f32 %v1913, %v2747
    %v2749 = vand.u32 %v2748, 4294901760
    %v2750 = vsub.f32 %v2748, %v2749
    %v2751 = vand.u32 %v2750, 4294901760
    %2752 = vmatpush.msra.mxu0 %v2751
    %v2753 = vand.u32 %v1911, 4294901760
    %v2754 = vsub.f32 %v1911, %v2753
    %v2755 = vand.u32 %v2754, 4294901760
    %v2756 = vsub.f32 %v2754, %v2755
    %v2757 = vand.u32 %v2756, 4294901760
    %2758 = vmatpush.msra.mxu0 %v2757
    %v2759 = vand.u32 %v1909, 4294901760
    %v2760 = vsub.f32 %v1909, %v2759
    %v2761 = vand.u32 %v2760, 4294901760
    %v2762 = vsub.f32 %v2760, %v2761
    %v2763 = vand.u32 %v2762, 4294901760
    %2764 = vmatpush.msra.mxu0 %v2763
    %v2765 = vand.u32 %v1907, 4294901760
    %v2766 = vsub.f32 %v1907, %v2765
    %v2767 = vand.u32 %v2766, 4294901760
    %v2768 = vsub.f32 %v2766, %v2767
    %v2769 = vand.u32 %v2768, 4294901760
    %2770 = vmatpush.msra.mxu0 %v2769
    %v2771 = vand.u32 %v1905, 4294901760
    %v2772 = vsub.f32 %v1905, %v2771
    %v2773 = vand.u32 %v2772, 4294901760
    %v2774 = vsub.f32 %v2772, %v2773
    %v2775 = vand.u32 %v2774, 4294901760
    %2776 = vmatpush.msra.mxu0 %v2775
    %v2777 = vand.u32 %v1903, 4294901760
    %v2778 = vsub.f32 %v1903, %v2777
    %v2779 = vand.u32 %v2778, 4294901760
    %v2780 = vsub.f32 %v2778, %v2779
    %v2781 = vand.u32 %v2780, 4294901760
    %2782 = vmatpush.msra.mxu0 %v2781
    %v2783 = vand.u32 %v1901, 4294901760
    %v2784 = vsub.f32 %v1901, %v2783
    %v2785 = vand.u32 %v2784, 4294901760
    %v2786 = vsub.f32 %v2784, %v2785
    %v2787 = vand.u32 %v2786, 4294901760
    %2788 = vmatpush.msra.mxu0 %v2787
    %v2789 = vand.u32 %v1898, 4294901760
    %2790 = vmatmul.f32.gmra.mxu0 %v2789
    %v2791 = vpop.f32.mrf.mxu0
    %v2792 = vadd.f32 %v2691, %v2791
    %2793 = vdwg.mxu0
    %v2794 = vand.u32 %v1931, 4294901760
    %v2795 = vsub.f32 %v1931, %v2794
    %2796 = vmatpush.msra.mxu0 %v2795
    %v2797 = vand.u32 %v1929, 4294901760
    %v2798 = vsub.f32 %v1929, %v2797
    %2799 = vmatpush.msra.mxu0 %v2798
    %v2800 = vand.u32 %v1927, 4294901760
    %v2801 = vsub.f32 %v1927, %v2800
    %2802 = vmatpush.msra.mxu0 %v2801
    %v2803 = vand.u32 %v1925, 4294901760
    %v2804 = vsub.f32 %v1925, %v2803
    %2805 = vmatpush.msra.mxu0 %v2804
    %v2806 = vand.u32 %v1923, 4294901760
    %v2807 = vsub.f32 %v1923, %v2806
    %2808 = vmatpush.msra.mxu0 %v2807
    %v2809 = vand.u32 %v1921, 4294901760
    %v2810 = vsub.f32 %v1921, %v2809
    %2811 = vmatpush.msra.mxu0 %v2810
    %v2812 = vand.u32 %v1919, 4294901760
    %v2813 = vsub.f32 %v1919, %v2812
    %2814 = vmatpush.msra.mxu0 %v2813
    %v2815 = vand.u32 %v1917, 4294901760
    %v2816 = vsub.f32 %v1917, %v2815
    %2817 = vmatpush.msra.mxu0 %v2816
    %v2818 = vand.u32 %v1915, 4294901760
    %v2819 = vsub.f32 %v1915, %v2818
    %2820 = vmatpush.msra.mxu0 %v2819
    %v2821 = vand.u32 %v1913, 4294901760
    %v2822 = vsub.f32 %v1913, %v2821
    %2823 = vmatpush.msra.mxu0 %v2822
    %v2824 = vand.u32 %v1911, 4294901760
    %v2825 = vsub.f32 %v1911, %v2824
    %2826 = vmatpush.msra.mxu0 %v2825
    %v2827 = vand.u32 %v1909, 4294901760
    %v2828 = vsub.f32 %v1909, %v2827
    %2829 = vmatpush.msra.mxu0 %v2828
    %v2830 = vand.u32 %v1907, 4294901760
    %v2831 = vsub.f32 %v1907, %v2830
    %2832 = vmatpush.msra.mxu0 %v2831
    %v2833 = vand.u32 %v1905, 4294901760
    %v2834 = vsub.f32 %v1905, %v2833
    %2835 = vmatpush.msra.mxu0 %v2834
    %v2836 = vand.u32 %v1903, 4294901760
    %v2837 = vsub.f32 %v1903, %v2836
    %2838 = vmatpush.msra.mxu0 %v2837
    %v2839 = vand.u32 %v1901, 4294901760
    %v2840 = vsub.f32 %v1901, %v2839
    %2841 = vmatpush.msra.mxu0 %v2840
    %v2842 = vand.u32 %v1898, 4294901760
    %v2843 = vsub.f32 %v1898, %v2842
    %2844 = vmatmul.f32.gmra.mxu0 %v2843
    %v2845 = vpop.f32.mrf.mxu0
    %v2846 = vadd.f32 %v2792, %v2845
    %2847 = vdwg.mxu0
    %v2848 = vand.u32 %v1931, 4294901760
    %2849 = vmatpush.msra.mxu0 %v2848
    %v2850 = vand.u32 %v1929, 4294901760
    %2851 = vmatpush.msra.mxu0 %v2850
    %v2852 = vand.u32 %v1927, 4294901760
    %2853 = vmatpush.msra.mxu0 %v2852
    %v2854 = vand.u32 %v1925, 4294901760
    %2855 = vmatpush.msra.mxu0 %v2854
    %v2856 = vand.u32 %v1923, 4294901760
    %2857 = vmatpush.msra.mxu0 %v2856
    %v2858 = vand.u32 %v1921, 4294901760
    %2859 = vmatpush.msra.mxu0 %v2858
    %v2860 = vand.u32 %v1919, 4294901760
    %2861 = vmatpush.msra.mxu0 %v2860
    %v2862 = vand.u32 %v1917, 4294901760
    %2863 = vmatpush.msra.mxu0 %v2862
    %v2864 = vand.u32 %v1915, 4294901760
    %2865 = vmatpush.msra.mxu0 %v2864
    %v2866 = vand.u32 %v1913, 4294901760
    %2867 = vmatpush.msra.mxu0 %v2866
    %v2868 = vand.u32 %v1911, 4294901760
    %2869 = vmatpush.msra.mxu0 %v2868
    %v2870 = vand.u32 %v1909, 4294901760
    %2871 = vmatpush.msra.mxu0 %v2870
    %v2872 = vand.u32 %v1907, 4294901760
    %2873 = vmatpush.msra.mxu0 %v2872
    %v2874 = vand.u32 %v1905, 4294901760
    %2875 = vmatpush.msra.mxu0 %v2874
    %v2876 = vand.u32 %v1903, 4294901760
    %2877 = vmatpush.msra.mxu0 %v2876
    %v2878 = vand.u32 %v1901, 4294901760
    %2879 = vmatpush.msra.mxu0 %v2878
    %v2880 = vand.u32 %v1898, 4294901760
    %v2881 = vsub.f32 %v1898, %v2880
    %v2882 = vand.u32 %v2881, 4294901760
    %2883 = vmatmul.f32.gmra.mxu0 %v2882
    %v2884 = vpop.f32.mrf.mxu0
    %v2885 = vadd.f32 %v2846, %v2884
    %2886 = vdwg.mxu0
    %v2887 = vand.u32 %v1931, 4294901760
    %v2888 = vsub.f32 %v1931, %v2887
    %v2889 = vand.u32 %v2888, 4294901760
    %2890 = vmatpush.msra.mxu0 %v2889
    %v2891 = vand.u32 %v1929, 4294901760
    %v2892 = vsub.f32 %v1929, %v2891
    %v2893 = vand.u32 %v2892, 4294901760
    %2894 = vmatpush.msra.mxu0 %v2893
    %v2895 = vand.u32 %v1927, 4294901760
    %v2896 = vsub.f32 %v1927, %v2895
    %v2897 = vand.u32 %v2896, 4294901760
    %2898 = vmatpush.msra.mxu0 %v2897
    %v2899 = vand.u32 %v1925, 4294901760
    %v2900 = vsub.f32 %v1925, %v2899
    %v2901 = vand.u32 %v2900, 4294901760
    %2902 = vmatpush.msra.mxu0 %v2901
    %v2903 = vand.u32 %v1923, 4294901760
    %v2904 = vsub.f32 %v1923, %v2903
    %v2905 = vand.u32 %v2904, 4294901760
    %2906 = vmatpush.msra.mxu0 %v2905
    %v2907 = vand.u32 %v1921, 4294901760
    %v2908 = vsub.f32 %v1921, %v2907
    %v2909 = vand.u32 %v2908, 4294901760
    %2910 = vmatpush.msra.mxu0 %v2909
    %v2911 = vand.u32 %v1919, 4294901760
    %v2912 = vsub.f32 %v1919, %v2911
    %v2913 = vand.u32 %v2912, 4294901760
    %2914 = vmatpush.msra.mxu0 %v2913
    %v2915 = vand.u32 %v1917, 4294901760
    %v2916 = vsub.f32 %v1917, %v2915
    %v2917 = vand.u32 %v2916, 4294901760
    %2918 = vmatpush.msra.mxu0 %v2917
    %v2919 = vand.u32 %v1915, 4294901760
    %v2920 = vsub.f32 %v1915, %v2919
    %v2921 = vand.u32 %v2920, 4294901760
    %2922 = vmatpush.msra.mxu0 %v2921
    %v2923 = vand.u32 %v1913, 4294901760
    %v2924 = vsub.f32 %v1913, %v2923
    %v2925 = vand.u32 %v2924, 4294901760
    %2926 = vmatpush.msra.mxu0 %v2925
    %v2927 = vand.u32 %v1911, 4294901760
    %v2928 = vsub.f32 %v1911, %v2927
    %v2929 = vand.u32 %v2928, 4294901760
    %2930 = vmatpush.msra.mxu0 %v2929
    %v2931 = vand.u32 %v1909, 4294901760
    %v2932 = vsub.f32 %v1909, %v2931
    %v2933 = vand.u32 %v2932, 4294901760
    %2934 = vmatpush.msra.mxu0 %v2933
    %v2935 = vand.u32 %v1907, 4294901760
    %v2936 = vsub.f32 %v1907, %v2935
    %v2937 = vand.u32 %v2936, 4294901760
    %2938 = vmatpush.msra.mxu0 %v2937
    %v2939 = vand.u32 %v1905, 4294901760
    %v2940 = vsub.f32 %v1905, %v2939
    %v2941 = vand.u32 %v2940, 4294901760
    %2942 = vmatpush.msra.mxu0 %v2941
    %v2943 = vand.u32 %v1903, 4294901760
    %v2944 = vsub.f32 %v1903, %v2943
    %v2945 = vand.u32 %v2944, 4294901760
    %2946 = vmatpush.msra.mxu0 %v2945
    %v2947 = vand.u32 %v1901, 4294901760
    %v2948 = vsub.f32 %v1901, %v2947
    %v2949 = vand.u32 %v2948, 4294901760
    %2950 = vmatpush.msra.mxu0 %v2949
    %v2951 = vand.u32 %v1898, 4294901760
    %2952 = vmatmul.f32.gmra.mxu0 %v2951
    %v2953 = vpop.f32.mrf.mxu0
    %v2954 = vadd.f32 %v2885, %v2953
    %2955 = vdwg.mxu0
    %v2956 = vand.u32 %v1931, 4294901760
    %2957 = vmatpush.msra.mxu0 %v2956
    %v2958 = vand.u32 %v1929, 4294901760
    %2959 = vmatpush.msra.mxu0 %v2958
    %v2960 = vand.u32 %v1927, 4294901760
    %2961 = vmatpush.msra.mxu0 %v2960
    %v2962 = vand.u32 %v1925, 4294901760
    %2963 = vmatpush.msra.mxu0 %v2962
    %v2964 = vand.u32 %v1923, 4294901760
    %2965 = vmatpush.msra.mxu0 %v2964
    %v2966 = vand.u32 %v1921, 4294901760
    %2967 = vmatpush.msra.mxu0 %v2966
    %v2968 = vand.u32 %v1919, 4294901760
    %2969 = vmatpush.msra.mxu0 %v2968
    %v2970 = vand.u32 %v1917, 4294901760
    %2971 = vmatpush.msra.mxu0 %v2970
    %v2972 = vand.u32 %v1915, 4294901760
    %2973 = vmatpush.msra.mxu0 %v2972
    %v2974 = vand.u32 %v1913, 4294901760
    %2975 = vmatpush.msra.mxu0 %v2974
    %v2976 = vand.u32 %v1911, 4294901760
    %2977 = vmatpush.msra.mxu0 %v2976
    %v2978 = vand.u32 %v1909, 4294901760
    %2979 = vmatpush.msra.mxu0 %v2978
    %v2980 = vand.u32 %v1907, 4294901760
    %2981 = vmatpush.msra.mxu0 %v2980
    %v2982 = vand.u32 %v1905, 4294901760
    %2983 = vmatpush.msra.mxu0 %v2982
    %v2984 = vand.u32 %v1903, 4294901760
    %2985 = vmatpush.msra.mxu0 %v2984
    %v2986 = vand.u32 %v1901, 4294901760
    %2987 = vmatpush.msra.mxu0 %v2986
    %v2988 = vand.u32 %v1898, 4294901760
    %2989 = vmatmul.f32.gmra.mxu0 %v2988
    %v2990 = vpop.f32.mrf.mxu0
    %v2991 = vadd.f32 %v2954, %v2990
    %2992 = vdwg.mxu0
    %v2993 = vand.u32 %v1963, 4294901760
    %2994 = vmatpush.msra.mxu0 %v2993
    %v2995 = vand.u32 %v1961, 4294901760
    %2996 = vmatpush.msra.mxu0 %v2995
    %v2997 = vand.u32 %v1959, 4294901760
    %2998 = vmatpush.msra.mxu0 %v2997
    %v2999 = vand.u32 %v1957, 4294901760
    %3000 = vmatpush.msra.mxu0 %v2999
    %v3001 = vand.u32 %v1955, 4294901760
    %3002 = vmatpush.msra.mxu0 %v3001
    %v3003 = vand.u32 %v1953, 4294901760
    %3004 = vmatpush.msra.mxu0 %v3003
    %v3005 = vand.u32 %v1951, 4294901760
    %3006 = vmatpush.msra.mxu0 %v3005
    %v3007 = vand.u32 %v1949, 4294901760
    %3008 = vmatpush.msra.mxu0 %v3007
    %v3009 = vand.u32 %v1947, 4294901760
    %3010 = vmatpush.msra.mxu0 %v3009
    %v3011 = vand.u32 %v1945, 4294901760
    %3012 = vmatpush.msra.mxu0 %v3011
    %v3013 = vand.u32 %v1943, 4294901760
    %3014 = vmatpush.msra.mxu0 %v3013
    %v3015 = vand.u32 %v1941, 4294901760
    %3016 = vmatpush.msra.mxu0 %v3015
    %v3017 = vand.u32 %v1939, 4294901760
    %3018 = vmatpush.msra.mxu0 %v3017
    %v3019 = vand.u32 %v1937, 4294901760
    %3020 = vmatpush.msra.mxu0 %v3019
    %v3021 = vand.u32 %v1935, 4294901760
    %3022 = vmatpush.msra.mxu0 %v3021
    %v3023 = vand.u32 %v1933, 4294901760
    %3024 = vmatpush.msra.mxu0 %v3023
    %v3025 = vand.u32 %v1899, 4294901760
    %v3026 = vsub.f32 %v1899, %v3025
    %v3027 = vand.u32 %v3026, 4294901760
    %v3028 = vsub.f32 %v3026, %v3027
    %v3029 = vand.u32 %v3028, 4294901760
    %3030 = vmatmul.f32.gmra.mxu0 %v3029
    %v3031 = vpop.f32.mrf.mxu0
    %v3032 = vadd.f32 %v2991, %v3031
    %3033 = vdwg.mxu0
    %v3034 = vand.u32 %v1963, 4294901760
    %v3035 = vsub.f32 %v1963, %v3034
    %v3036 = vand.u32 %v3035, 4294901760
    %v3037 = vsub.f32 %v3035, %v3036
    %v3038 = vand.u32 %v3037, 4294901760
    %3039 = vmatpush.msra.mxu0 %v3038
    %v3040 = vand.u32 %v1961, 4294901760
    %v3041 = vsub.f32 %v1961, %v3040
    %v3042 = vand.u32 %v3041, 4294901760
    %v3043 = vsub.f32 %v3041, %v3042
    %v3044 = vand.u32 %v3043, 4294901760
    %3045 = vmatpush.msra.mxu0 %v3044
    %v3046 = vand.u32 %v1959, 4294901760
    %v3047 = vsub.f32 %v1959, %v3046
    %v3048 = vand.u32 %v3047, 4294901760
    %v3049 = vsub.f32 %v3047, %v3048
    %v3050 = vand.u32 %v3049, 4294901760
    %3051 = vmatpush.msra.mxu0 %v3050
    %v3052 = vand.u32 %v1957, 4294901760
    %v3053 = vsub.f32 %v1957, %v3052
    %v3054 = vand.u32 %v3053, 4294901760
    %v3055 = vsub.f32 %v3053, %v3054
    %v3056 = vand.u32 %v3055, 4294901760
    %3057 = vmatpush.msra.mxu0 %v3056
    %v3058 = vand.u32 %v1955, 4294901760
    %v3059 = vsub.f32 %v1955, %v3058
    %v3060 = vand.u32 %v3059, 4294901760
    %v3061 = vsub.f32 %v3059, %v3060
    %v3062 = vand.u32 %v3061, 4294901760
    %3063 = vmatpush.msra.mxu0 %v3062
    %v3064 = vand.u32 %v1953, 4294901760
    %v3065 = vsub.f32 %v1953, %v3064
    %v3066 = vand.u32 %v3065, 4294901760
    %v3067 = vsub.f32 %v3065, %v3066
    %v3068 = vand.u32 %v3067, 4294901760
    %3069 = vmatpush.msra.mxu0 %v3068
    %v3070 = vand.u32 %v1951, 4294901760
    %v3071 = vsub.f32 %v1951, %v3070
    %v3072 = vand.u32 %v3071, 4294901760
    %v3073 = vsub.f32 %v3071, %v3072
    %v3074 = vand.u32 %v3073, 4294901760
    %3075 = vmatpush.msra.mxu0 %v3074
    %v3076 = vand.u32 %v1949, 4294901760
    %v3077 = vsub.f32 %v1949, %v3076
    %v3078 = vand.u32 %v3077, 4294901760
    %v3079 = vsub.f32 %v3077, %v3078
    %v3080 = vand.u32 %v3079, 4294901760
    %3081 = vmatpush.msra.mxu0 %v3080
    %v3082 = vand.u32 %v1947, 4294901760
    %v3083 = vsub.f32 %v1947, %v3082
    %v3084 = vand.u32 %v3083, 4294901760
    %v3085 = vsub.f32 %v3083, %v3084
    %v3086 = vand.u32 %v3085, 4294901760
    %3087 = vmatpush.msra.mxu0 %v3086
    %v3088 = vand.u32 %v1945, 4294901760
    %v3089 = vsub.f32 %v1945, %v3088
    %v3090 = vand.u32 %v3089, 4294901760
    %v3091 = vsub.f32 %v3089, %v3090
    %v3092 = vand.u32 %v3091, 4294901760
    %3093 = vmatpush.msra.mxu0 %v3092
    %v3094 = vand.u32 %v1943, 4294901760
    %v3095 = vsub.f32 %v1943, %v3094
    %v3096 = vand.u32 %v3095, 4294901760
    %v3097 = vsub.f32 %v3095, %v3096
    %v3098 = vand.u32 %v3097, 4294901760
    %3099 = vmatpush.msra.mxu0 %v3098
    %v3100 = vand.u32 %v1941, 4294901760
    %v3101 = vsub.f32 %v1941, %v3100
    %v3102 = vand.u32 %v3101, 4294901760
    %v3103 = vsub.f32 %v3101, %v3102
    %v3104 = vand.u32 %v3103, 4294901760
    %3105 = vmatpush.msra.mxu0 %v3104
    %v3106 = vand.u32 %v1939, 4294901760
    %v3107 = vsub.f32 %v1939, %v3106
    %v3108 = vand.u32 %v3107, 4294901760
    %v3109 = vsub.f32 %v3107, %v3108
    %v3110 = vand.u32 %v3109, 4294901760
    %3111 = vmatpush.msra.mxu0 %v3110
    %v3112 = vand.u32 %v1937, 4294901760
    %v3113 = vsub.f32 %v1937, %v3112
    %v3114 = vand.u32 %v3113, 4294901760
    %v3115 = vsub.f32 %v3113, %v3114
    %v3116 = vand.u32 %v3115, 4294901760
    %3117 = vmatpush.msra.mxu0 %v3116
    %v3118 = vand.u32 %v1935, 4294901760
    %v3119 = vsub.f32 %v1935, %v3118
    %v3120 = vand.u32 %v3119, 4294901760
    %v3121 = vsub.f32 %v3119, %v3120
    %v3122 = vand.u32 %v3121, 4294901760
    %3123 = vmatpush.msra.mxu0 %v3122
    %v3124 = vand.u32 %v1933, 4294901760
    %v3125 = vsub.f32 %v1933, %v3124
    %v3126 = vand.u32 %v3125, 4294901760
    %v3127 = vsub.f32 %v3125, %v3126
    %v3128 = vand.u32 %v3127, 4294901760
    %3129 = vmatpush.msra.mxu0 %v3128
    %v3130 = vand.u32 %v1899, 4294901760
    %3131 = vmatmul.f32.gmra.mxu0 %v3130
    %v3132 = vpop.f32.mrf.mxu0
    %v3133 = vadd.f32 %v3032, %v3132
    %3134 = vdwg.mxu0
    %v3135 = vand.u32 %v1963, 4294901760
    %v3136 = vsub.f32 %v1963, %v3135
    %3137 = vmatpush.msra.mxu0 %v3136
    %v3138 = vand.u32 %v1961, 4294901760
    %v3139 = vsub.f32 %v1961, %v3138
    %3140 = vmatpush.msra.mxu0 %v3139
    %v3141 = vand.u32 %v1959, 4294901760
    %v3142 = vsub.f32 %v1959, %v3141
    %3143 = vmatpush.msra.mxu0 %v3142
    %v3144 = vand.u32 %v1957, 4294901760
    %v3145 = vsub.f32 %v1957, %v3144
    %3146 = vmatpush.msra.mxu0 %v3145
    %v3147 = vand.u32 %v1955, 4294901760
    %v3148 = vsub.f32 %v1955, %v3147
    %3149 = vmatpush.msra.mxu0 %v3148
    %v3150 = vand.u32 %v1953, 4294901760
    %v3151 = vsub.f32 %v1953, %v3150
    %3152 = vmatpush.msra.mxu0 %v3151
    %v3153 = vand.u32 %v1951, 4294901760
    %v3154 = vsub.f32 %v1951, %v3153
    %3155 = vmatpush.msra.mxu0 %v3154
    %v3156 = vand.u32 %v1949, 4294901760
    %v3157 = vsub.f32 %v1949, %v3156
    %3158 = vmatpush.msra.mxu0 %v3157
    %v3159 = vand.u32 %v1947, 4294901760
    %v3160 = vsub.f32 %v1947, %v3159
    %3161 = vmatpush.msra.mxu0 %v3160
    %v3162 = vand.u32 %v1945, 4294901760
    %v3163 = vsub.f32 %v1945, %v3162
    %3164 = vmatpush.msra.mxu0 %v3163
    %v3165 = vand.u32 %v1943, 4294901760
    %v3166 = vsub.f32 %v1943, %v3165
    %3167 = vmatpush.msra.mxu0 %v3166
    %v3168 = vand.u32 %v1941, 4294901760
    %v3169 = vsub.f32 %v1941, %v3168
    %3170 = vmatpush.msra.mxu0 %v3169
    %v3171 = vand.u32 %v1939, 4294901760
    %v3172 = vsub.f32 %v1939, %v3171
    %3173 = vmatpush.msra.mxu0 %v3172
    %v3174 = vand.u32 %v1937, 4294901760
    %v3175 = vsub.f32 %v1937, %v3174
    %3176 = vmatpush.msra.mxu0 %v3175
    %v3177 = vand.u32 %v1935, 4294901760
    %v3178 = vsub.f32 %v1935, %v3177
    %3179 = vmatpush.msra.mxu0 %v3178
    %v3180 = vand.u32 %v1933, 4294901760
    %v3181 = vsub.f32 %v1933, %v3180
    %3182 = vmatpush.msra.mxu0 %v3181
    %v3183 = vand.u32 %v1899, 4294901760
    %v3184 = vsub.f32 %v1899, %v3183
    %3185 = vmatmul.f32.gmra.mxu0 %v3184
    %v3186 = vpop.f32.mrf.mxu0
    %v3187 = vadd.f32 %v3133, %v3186
    %3188 = vdwg.mxu0
    %v3189 = vand.u32 %v1963, 4294901760
    %3190 = vmatpush.msra.mxu0 %v3189
    %v3191 = vand.u32 %v1961, 4294901760
    %3192 = vmatpush.msra.mxu0 %v3191
    %v3193 = vand.u32 %v1959, 4294901760
    %3194 = vmatpush.msra.mxu0 %v3193
    %v3195 = vand.u32 %v1957, 4294901760
    %3196 = vmatpush.msra.mxu0 %v3195
    %v3197 = vand.u32 %v1955, 4294901760
    %3198 = vmatpush.msra.mxu0 %v3197
    %v3199 = vand.u32 %v1953, 4294901760
    %3200 = vmatpush.msra.mxu0 %v3199
    %v3201 = vand.u32 %v1951, 4294901760
    %3202 = vmatpush.msra.mxu0 %v3201
    %v3203 = vand.u32 %v1949, 4294901760
    %3204 = vmatpush.msra.mxu0 %v3203
    %v3205 = vand.u32 %v1947, 4294901760
    %3206 = vmatpush.msra.mxu0 %v3205
    %v3207 = vand.u32 %v1945, 4294901760
    %3208 = vmatpush.msra.mxu0 %v3207
    %v3209 = vand.u32 %v1943, 4294901760
    %3210 = vmatpush.msra.mxu0 %v3209
    %v3211 = vand.u32 %v1941, 4294901760
    %3212 = vmatpush.msra.mxu0 %v3211
    %v3213 = vand.u32 %v1939, 4294901760
    %3214 = vmatpush.msra.mxu0 %v3213
    %v3215 = vand.u32 %v1937, 4294901760
    %3216 = vmatpush.msra.mxu0 %v3215
    %v3217 = vand.u32 %v1935, 4294901760
    %3218 = vmatpush.msra.mxu0 %v3217
    %v3219 = vand.u32 %v1933, 4294901760
    %3220 = vmatpush.msra.mxu0 %v3219
    %v3221 = vand.u32 %v1899, 4294901760
    %v3222 = vsub.f32 %v1899, %v3221
    %v3223 = vand.u32 %v3222, 4294901760
    %3224 = vmatmul.f32.gmra.mxu0 %v3223
    %v3225 = vpop.f32.mrf.mxu0
    %v3226 = vadd.f32 %v3187, %v3225
    %3227 = vdwg.mxu0
    %v3228 = vand.u32 %v1963, 4294901760
    %v3229 = vsub.f32 %v1963, %v3228
    %v3230 = vand.u32 %v3229, 4294901760
    %3231 = vmatpush.msra.mxu0 %v3230
    %v3232 = vand.u32 %v1961, 4294901760
    %v3233 = vsub.f32 %v1961, %v3232
    %v3234 = vand.u32 %v3233, 4294901760
    %3235 = vmatpush.msra.mxu0 %v3234
    %v3236 = vand.u32 %v1959, 4294901760
    %v3237 = vsub.f32 %v1959, %v3236
    %v3238 = vand.u32 %v3237, 4294901760
    %3239 = vmatpush.msra.mxu0 %v3238
    %v3240 = vand.u32 %v1957, 4294901760
    %v3241 = vsub.f32 %v1957, %v3240
    %v3242 = vand.u32 %v3241, 4294901760
    %3243 = vmatpush.msra.mxu0 %v3242
    %v3244 = vand.u32 %v1955, 4294901760
    %v3245 = vsub.f32 %v1955, %v3244
    %v3246 = vand.u32 %v3245, 4294901760
    %3247 = vmatpush.msra.mxu0 %v3246
    %v3248 = vand.u32 %v1953, 4294901760
    %v3249 = vsub.f32 %v1953, %v3248
    %v3250 = vand.u32 %v3249, 4294901760
    %3251 = vmatpush.msra.mxu0 %v3250
    %v3252 = vand.u32 %v1951, 4294901760
    %v3253 = vsub.f32 %v1951, %v3252
    %v3254 = vand.u32 %v3253, 4294901760
    %3255 = vmatpush.msra.mxu0 %v3254
    %v3256 = vand.u32 %v1949, 4294901760
    %v3257 = vsub.f32 %v1949, %v3256
    %v3258 = vand.u32 %v3257, 4294901760
    %3259 = vmatpush.msra.mxu0 %v3258
    %v3260 = vand.u32 %v1947, 4294901760
    %v3261 = vsub.f32 %v1947, %v3260
    %v3262 = vand.u32 %v3261, 4294901760
    %3263 = vmatpush.msra.mxu0 %v3262
    %v3264 = vand.u32 %v1945, 4294901760
    %v3265 = vsub.f32 %v1945, %v3264
    %v3266 = vand.u32 %v3265, 4294901760
    %3267 = vmatpush.msra.mxu0 %v3266
    %v3268 = vand.u32 %v1943, 4294901760
    %v3269 = vsub.f32 %v1943, %v3268
    %v3270 = vand.u32 %v3269, 4294901760
    %3271 = vmatpush.msra.mxu0 %v3270
    %v3272 = vand.u32 %v1941, 4294901760
    %v3273 = vsub.f32 %v1941, %v3272
    %v3274 = vand.u32 %v3273, 4294901760
    %3275 = vmatpush.msra.mxu0 %v3274
    %v3276 = vand.u32 %v1939, 4294901760
    %v3277 = vsub.f32 %v1939, %v3276
    %v3278 = vand.u32 %v3277, 4294901760
    %3279 = vmatpush.msra.mxu0 %v3278
    %v3280 = vand.u32 %v1937, 4294901760
    %v3281 = vsub.f32 %v1937, %v3280
    %v3282 = vand.u32 %v3281, 4294901760
    %3283 = vmatpush.msra.mxu0 %v3282
    %v3284 = vand.u32 %v1935, 4294901760
    %v3285 = vsub.f32 %v1935, %v3284
    %v3286 = vand.u32 %v3285, 4294901760
    %3287 = vmatpush.msra.mxu0 %v3286
    %v3288 = vand.u32 %v1933, 4294901760
    %v3289 = vsub.f32 %v1933, %v3288
    %v3290 = vand.u32 %v3289, 4294901760
    %3291 = vmatpush.msra.mxu0 %v3290
    %v3292 = vand.u32 %v1899, 4294901760
    %3293 = vmatmul.f32.gmra.mxu0 %v3292
    %v3294 = vpop.f32.mrf.mxu0
    %v3295 = vadd.f32 %v3226, %v3294
    %3296 = vdwg.mxu0
    %v3297 = vand.u32 %v1963, 4294901760
    %3298 = vmatpush.msra.mxu0 %v3297
    %v3299 = vand.u32 %v1961, 4294901760
    %3300 = vmatpush.msra.mxu0 %v3299
    %v3301 = vand.u32 %v1959, 4294901760
    %3302 = vmatpush.msra.mxu0 %v3301
    %v3303 = vand.u32 %v1957, 4294901760
    %3304 = vmatpush.msra.mxu0 %v3303
    %v3305 = vand.u32 %v1955, 4294901760
    %3306 = vmatpush.msra.mxu0 %v3305
    %v3307 = vand.u32 %v1953, 4294901760
    %3308 = vmatpush.msra.mxu0 %v3307
    %v3309 = vand.u32 %v1951, 4294901760
    %3310 = vmatpush.msra.mxu0 %v3309
    %v3311 = vand.u32 %v1949, 4294901760
    %3312 = vmatpush.msra.mxu0 %v3311
    %v3313 = vand.u32 %v1947, 4294901760
    %3314 = vmatpush.msra.mxu0 %v3313
    %v3315 = vand.u32 %v1945, 4294901760
    %3316 = vmatpush.msra.mxu0 %v3315
    %v3317 = vand.u32 %v1943, 4294901760
    %3318 = vmatpush.msra.mxu0 %v3317
    %v3319 = vand.u32 %v1941, 4294901760
    %3320 = vmatpush.msra.mxu0 %v3319
    %v3321 = vand.u32 %v1939, 4294901760
    %3322 = vmatpush.msra.mxu0 %v3321
    %v3323 = vand.u32 %v1937, 4294901760
    %3324 = vmatpush.msra.mxu0 %v3323
    %v3325 = vand.u32 %v1935, 4294901760
    %3326 = vmatpush.msra.mxu0 %v3325
    %v3327 = vand.u32 %v1933, 4294901760
    %3328 = vmatpush.msra.mxu0 %v3327
    %v3329 = vand.u32 %v1899, 4294901760
    %3330 = vmatmul.f32.gmra.mxu0 %v3329
    %v3331 = vpop.f32.mrf.mxu0
    %v3332 = vadd.f32 %v3295, %v3331
    %3333 = vdwg.mxu0
    %v3334 = vmax.f32 %v2650, 0.0
    %v3335 = vmax.f32 %v3332, 0.0
    %v3336 = vxor.u32 %v3334, 2147483648
    %v3337 = vxor.u32 %v3335, 2147483648
    %v3338 = vmul.f32 %v3336, 1.442695
    %v3339 = vpow.pop %v3338
    %v3340 = vmul.f32 %v3337, 1.442695
    %v3341 = vpow.pop %v3340
    %v3342 = vadd.f32 %v3339, 1.0
    %v3343 = vadd.f32 %v3341, 1.0
    %v3344 = vrcp.pop %v3342
    %v3345 = vmul.f32 %v3342, %v3344
    %v3346 = vsub.f32 1.0, %v3345
    %v3347 = vmul.f32 %v3344, %v3346
    %v3348 = vadd.f32 %v3344, %v3347
    %vm3349 = vweird.f32 %v3342
    %vm3350 = vweird.f32 %v3344
    %vm3351 = vmor %vm3349, %vm3350
    %v3352 = vsel %vm3351, %v3344, %v3348
    %v3353 = vand.u32 2147483647, %v3342
    %vm3354 = vcmp.eq.f32.partialorder %v3353, 8.507059e+37
    %v3355 = vand.u32 %v3342, 2147483648
    %v3356 = vor.u32 1.1754944e-38, %v3355
    %v3357 = vsel %vm3354, %v3356, %v3352
    %v3358 = vmul.f32 1.0, %v3357
    %v3359 = vrcp.pop %v3343
    %v3360 = vmul.f32 %v3343, %v3359
    %v3361 = vsub.f32 1.0, %v3360
    %v3362 = vmul.f32 %v3359, %v3361
    %v3363 = vadd.f32 %v3359, %v3362
    %vm3364 = vweird.f32 %v3343
    %vm3365 = vweird.f32 %v3359
    %vm3366 = vmor %vm3364, %vm3365
    %v3367 = vsel %vm3366, %v3359, %v3363
    %v3368 = vand.u32 2147483647, %v3343
    %vm3369 = vcmp.eq.f32.partialorder %v3368, 8.507059e+37
    %v3370 = vand.u32 %v3343, 2147483648
    %v3371 = vor.u32 1.1754944e-38, %v3370
    %v3372 = vsel %vm3369, %v3371, %v3367
    %v3373 = vmul.f32 1.0, %v3372
    %v3376 = vrot.slane %v3373, 6
    %vm3377 = vcmask 1041408
    %v3378 = vsel %vm3377, %v3358, %v3376
    %3380 = vst [vmem:[%s7] sm:$0xf] %v3378
    // Predicated region
    $region42: #{_decoder_forward_impl.1} parent=1 // pred_check
      _
    $region43: #{_decoder_forward_impl.1} parent=1 // pred_check_branch
      %3382 = sbr.rel (0) target = $region45
    $region44: #{_decoder_forward_impl.1} parent=1 // pred_region
      _
    $region45: #{_decoder_forward_impl.1} parent=1 // pred_fallthru
      _
    // Predicated region
    $region46: #{_decoder_forward_impl.1} parent=1 // pred_check
      _
    $region47: #{_decoder_forward_impl.1} parent=1 // pred_check_branch
      %3384 = sbr.rel (0) target = $region49
    $region48: #{_decoder_forward_impl.1} parent=1 // pred_region
      _
    $region49: #{_decoder_forward_impl.1} parent=1 // pred_fallthru
      _
    %3385 = vsyncpa [#allocation3], 1
    %3386 = vsyncpa [#allocation5], 1

</llo_original>
